<compile_context>
chip_gen: v7x
topology: tpu7x:2x2x1
jax: 0.10.0
libtpu: 0.0.40
codegen_flags: <defaults>
</compile_context>

<pallas_src>
import functools

import jax
import jax.numpy as jnp
import numpy as np
from jax.experimental import pallas as pl
from jax.experimental.pallas import tpu as pltpu


# --------------------------------------------------------------------------
# Fused Pallas kernel: all GNN layers + node/edge readouts for one batch block.
# --------------------------------------------------------------------------
def _fused_gnn_ebm_kernel(x1_ref, x2_ref, gcat_ref, scat_ref,
                          wn_ref, bn_ref, wm_ref, bm_ref, we_ref, be_ref,
                          rw1_ref, rb1_ref, rw2_ref, rb2_ref, rw3_ref, rb3_ref,
                          on_ref, oe_ref, *, n_layers, T, M, d, Bt):
    f32 = jnp.float32
    bf16 = jnp.bfloat16

    gcat = gcat_ref[...]                       # (2M, T)  bf16, rows = [G0 ; G1]
    scat = scat_ref[...]                       # (T, M)   bf16, 0.5*(G0+G1)^T

    # Channel-major states, batch folded into rows:
    #   node rows ordered (b, channel, t)  -> (Bt*2T, d)
    #   edge rows ordered (b, channel, m)  -> (Bt*4M, d)
    node_st = x1_ref[...].reshape(Bt * 2 * T, d).astype(f32)
    edge_st = x2_ref[...].reshape(Bt * 4 * M, d).astype(f32)

    for l in range(n_layers):
        wn, bn = wn_ref[l], bn_ref[l]          # (d,d) bf16, (1,d) f32
        wm, bm = wm_ref[l], bm_ref[l]
        we, be = we_ref[l], be_ref[l]

        xn_parts = []
        sum_parts = []
        for b in range(Bt):
            x_neg = node_st[(2 * b) * T:(2 * b + 1) * T]           # (T, d)
            x_pos = node_st[(2 * b + 1) * T:(2 * b + 2) * T]
            e_b = edge_st[(4 * b) * M:(4 * b + 4) * M]             # (4M, d)

            # ---- node message passing: scatter_add over both endpoints -----
            agg_neg = e_b[0:M] + e_b[M:2 * M]                      # (M, d)
            agg_pos = e_b[2 * M:3 * M] + e_b[3 * M:4 * M]
            agg_cat = jnp.concatenate([agg_neg, agg_pos], axis=1)  # (M, 2d)
            upd = jnp.dot(scat, agg_cat.astype(bf16),
                          preferred_element_type=f32)              # (T, 2d)
            xn_parts.append(x_neg + upd[:, :d])
            xn_parts.append(x_pos + upd[:, d:])

            # ---- edge gather: edge_i (via G0) and edge_j (via G1), 2 chans --
            x_cat = jnp.concatenate([x_neg, x_pos], axis=1)        # (T, 2d)
            eg = jnp.dot(gcat, x_cat.astype(bf16),
                         preferred_element_type=f32)               # (2M, 2d)
            ei_neg, ei_pos = eg[:M, :d], eg[:M, d:]
            ej_neg, ej_pos = eg[M:, :d], eg[M:, d:]
            # node_i_indice=[0,0,1,1], node_j_indice=[0,1,0,1]
            sum_parts.append(ei_neg + ej_neg)
            sum_parts.append(ei_neg + ej_pos)
            sum_parts.append(ei_pos + ej_neg)
            sum_parts.append(ei_pos + ej_pos)

        xn_rows = jnp.concatenate(xn_parts, axis=0)                # (Bt*2T, d)
        sums_rows = jnp.concatenate(sum_parts, axis=0)             # (Bt*4M, d)

        # node_layer — one MXU call over all batches & channels
        yn = jnp.dot(xn_rows.astype(bf16), wn, preferred_element_type=f32) + bn
        if l < n_layers - 1:                   # F.relu only between hidden layers
            yn = jnp.maximum(yn, 0.0)
        # TODO(synk): F.dropout is identity here (p=0 / eval mode), skipped.

        # mlp + residual + edge_layer — all 4 channels stacked
        msg = jnp.dot(sums_rows.astype(bf16), wm, preferred_element_type=f32) + bm
        e_res = edge_st + msg
        ye = jnp.dot(e_res.astype(bf16), we, preferred_element_type=f32) + be

        node_st, edge_st = yn, ye

    # ---- fused readouts: Linear -> ReLU -> Linear -> ReLU -> (VPU dot) ------
    def mlp3(rows, idx):
        h = jnp.dot(rows.astype(bf16), rw1_ref[idx],
                    preferred_element_type=f32) + rb1_ref[idx]
        h = jnp.maximum(h, 0.0)
        h = jnp.dot(h.astype(bf16), rw2_ref[idx],
                    preferred_element_type=f32) + rb2_ref[idx]
        h = jnp.maximum(h, 0.0)
        # final (d -> 1) projection as VPU multiply + lane reduce (no N=1 matmul)
        return jnp.sum(h * rw3_ref[idx], axis=-1, keepdims=True) + rb3_ref[idx]

    h_node = mlp3(node_st, 0)                  # (Bt*2T, 1)
    h_edge = mlp3(edge_st, 1)                  # (Bt*4M, 1)

    for b in range(Bt):
        for c in range(2):
            on_ref[b, c, :, :] = h_node[(2 * b + c) * T:(2 * b + c + 1) * T].astype(on_ref.dtype)
        for c in range(4):
            oe_ref[b, c, :, :] = h_edge[(4 * b + c) * M:(4 * b + c + 1) * M].astype(oe_ref.dtype)


# --------------------------------------------------------------------------
# Wrapper
# --------------------------------------------------------------------------
def gnn_energy_model_forward(x_1st, x_2nd, edge, params, *, batch_block=1):
    """Pallas forward of GNN_Energy_Model_2nd_Order_01 (concat=False, eval/dropout=0)."""
    B, T = x_1st.shape[:2]
    M = edge.shape[1]
    d = x_1st.shape[-1]
    L = len(params["layers"])
    Bt = batch_block
    assert B % Bt == 0, "batch_block must divide B"

    f32, bf16 = jnp.float32, jnp.bfloat16

    # Channel-major inputs (plain-JAX glue; restores (B,T,2)/(B,M,4) at the end).
    x1_cm = jnp.transpose(x_1st, (0, 2, 1, 3)).astype(f32)   # (B, 2, T, d)
    x2_cm = jnp.transpose(x_2nd, (0, 2, 1, 3)).astype(f32)   # (B, 4, M, d)

    # Incidence matrices: one gather matrix [G0;G1] and one fused scatter matrix.
    g0 = jax.nn.one_hot(edge[0], T, dtype=f32)               # (M, T)
    g1 = jax.nn.one_hot(edge[1], T, dtype=f32)
    gcat = jnp.concatenate([g0, g1], axis=0).astype(bf16)    # (2M, T)
    scat = (0.5 * (g0 + g1)).T.astype(bf16)                  # (T, M)

    # Stack per-layer weights (bf16) / biases (f32) along a leading layer axis.
    Wn = jnp.stack([lp["Wn"] for lp in params["layers"]]).astype(bf16)   # (L, d, d)
    bn = jnp.stack([lp["bn"] for lp in params["layers"]]).astype(f32)    # (L, 1, d)
    Wm = jnp.stack([lp["Wm"] for lp in params["layers"]]).astype(bf16)
    bm = jnp.stack([lp["bm"] for lp in params["layers"]]).astype(f32)
    We = jnp.stack([lp["We"] for lp in params["layers"]]).astype(bf16)
    be = jnp.stack([lp["be"] for lp in params["layers"]]).astype(f32)

    nr, er = params["node_readout"], params["edge_readout"]
    rW1 = jnp.stack([nr["W1"], er["W1"]]).astype(bf16)                   # (2, d, 2d)
    rb1 = jnp.stack([nr["b1"], er["b1"]]).astype(f32)                    # (2, 1, 2d)
    rW2 = jnp.stack([nr["W2"], er["W2"]]).astype(bf16)                   # (2, 2d, d)
    rb2 = jnp.stack([nr["b2"], er["b2"]]).astype(f32)                    # (2, 1, d)
    rw3 = jnp.stack([nr["W3"].T, er["W3"].T]).astype(f32)                # (2, 1, d)
    rb3 = jnp.stack([nr["b3"], er["b3"]]).astype(f32)                    # (2, 1, 1)

    kernel = functools.partial(_fused_gnn_ebm_kernel,
                               n_layers=L, T=T, M=M, d=d, Bt=Bt)

    idx_b = lambda i: (i, 0, 0, 0)     # batch-blocked tensors
    idx_c2 = lambda i: (0, 0)          # grid-invariant 2-D constants
    idx_c3 = lambda i: (0, 0, 0)       # grid-invariant 3-D constants

    out_node, out_edge = pl.pallas_call(
        kernel,
        grid=(B // Bt,),
        in_specs=[
            pl.BlockSpec((Bt, 2, T, d), idx_b),
            pl.BlockSpec((Bt, 4, M, d), idx_b),
            pl.BlockSpec((2 * M, T), idx_c2),
            pl.BlockSpec((T, M), idx_c2),
            pl.BlockSpec((L, d, d), idx_c3),
            pl.BlockSpec((L, 1, d), idx_c3),
            pl.BlockSpec((L, d, d), idx_c3),
            pl.BlockSpec((L, 1, d), idx_c3),
            pl.BlockSpec((L, d, d), idx_c3),
            pl.BlockSpec((L, 1, d), idx_c3),
            pl.BlockSpec((2, d, 2 * d), idx_c3),
            pl.BlockSpec((2, 1, 2 * d), idx_c3),
            pl.BlockSpec((2, 2 * d, d), idx_c3),
            pl.BlockSpec((2, 1, d), idx_c3),
            pl.BlockSpec((2, 1, d), idx_c3),
            pl.BlockSpec((2, 1, 1), idx_c3),
        ],
        out_specs=[
            pl.BlockSpec((Bt, 2, T, 1), idx_b),
            pl.BlockSpec((Bt, 4, M, 1), idx_b),
        ],
        out_shape=[
            jax.ShapeDtypeStruct((B, 2, T, 1), f32),
            jax.ShapeDtypeStruct((B, 4, M, 1), f32),
        ],
        compiler_params=pltpu.CompilerParams(
            dimension_semantics=("parallel",),
            vmem_limit_bytes=64 * 1024 * 1024,
        ),
    )(x1_cm, x2_cm, gcat, scat, Wn, bn, Wm, bm, We, be,
      rW1, rb1, rW2, rb2, rw3, rb3)

    h_node = jnp.transpose(out_node[..., 0], (0, 2, 1))      # (B, T, 2)
    h_edge = jnp.transpose(out_edge[..., 0], (0, 2, 1))      # (B, M, 4)
    return h_node, h_edge


# --------------------------------------------------------------------------
# Deterministic parameter init (matches module __init__ shapes; weights stored
# as (in, out) so y = x @ W + b).
# --------------------------------------------------------------------------
def init_params(key, d, ebm_GNN_layer_num):
    n_hidden = ebm_GNN_layer_num - 1

    def lin(k, fan_in, fan_out):
        kw, kb = jax.random.split(k)
        W = jax.random.normal(kw, (fan_in, fan_out), jnp.float32) * 0.1
        b = jax.random.normal(kb, (1, fan_out), jnp.float32) * 0.1
        return W, b

    keys = iter(jax.random.split(key, n_hidden * 3 + 6))
    layers = []
    for _ in range(n_hidden):
        Wn, bn = lin(next(keys), d, d)   # node_layer
        Wm, bm = lin(next(keys), d, d)   # mlp
        We, be = lin(next(keys), d, d)   # edge_layer
        layers.append(dict(Wn=Wn, bn=bn, Wm=Wm, bm=bm, We=We, be=be))

    def readout_params():
        W1, b1 = lin(next(keys), d, 2 * d)
        W2, b2 = lin(next(keys), 2 * d, d)
        W3, b3 = lin(next(keys), d, 1)
        return dict(W1=W1, b1=b1, W2=W2, b2=b2, W3=W3, b3=b3)

    return dict(layers=layers,
                node_readout=readout_params(),
                edge_readout=readout_params())


# --------------------------------------------------------------------------
# Pure-JAX f32 reference (mirrors the PyTorch semantics) for verification.
# --------------------------------------------------------------------------
def _ref_layer(x1, x2, edge, lp):
    B, T, _, d = x1.shape
    x1_neg, x1_pos = x1[:, :, 0, :], x1[:, :, 1, :]
    agg_neg = x2[:, :, 0, :] + x2[:, :, 1, :]
    agg_pos = x2[:, :, 2, :] + x2[:, :, 3, :]

    def mp(x, a):
        z = jnp.zeros((B, T, d), x.dtype)
        upd_out = z.at[:, edge[1], :].add(a)
        upd_in = z.at[:, edge[0], :].add(a)
        return x + 0.5 * (upd_out + upd_in)

    xn = jnp.stack([mp(x1_neg, agg_neg), mp(x1_pos, agg_pos)], axis=2)
    xn = xn @ lp["Wn"] + lp["bn"][0]

    edge_i = x1[:, edge[0], :, :][:, :, jnp.array([0, 0, 1, 1]), :]
    edge_j = x1[:, edge[1], :, :][:, :, jnp.array([0, 1, 0, 1]), :]
    e = x2 + ((edge_i + edge_j) @ lp["Wm"] + lp["bm"][0])
    e = e @ lp["We"] + lp["be"][0]
    return xn, e


def _ref_forward(x_1st, x_2nd, edge, params):
    x_node, x_edge = x_1st, x_2nd
    n = len(params["layers"])
    for i, lp in enumerate(params["layers"]):
        x_node, x_edge = _ref_layer(x_node, x_edge, edge, lp)
        if i < n - 1:
            x_node = jax.nn.relu(x_node)

    def mlp3(x, p):
        h = jax.nn.relu(x @ p["W1"] + p["b1"][0])
        h = jax.nn.relu(h @ p["W2"] + p["b2"][0])
        return h @ p["W3"] + p["b3"][0]

    h_node = mlp3(x_node, params["node_readout"])[..., 0]
    h_edge = mlp3(x_edge, params["edge_readout"])[..., 0]
    return h_node, h_edge


# --------------------------------------------------------------------------
if __name__ == "__main__":
    key = jax.random.PRNGKey(0)
    # Small but lane-friendly shapes: T, M multiples of 8; d a multiple of 128.
    B, T, M, d, layer_num = 2, 8, 16, 128, 3   # layer_num=3 -> 2 hidden GNN layers
    k1, k2, k3, kp = jax.random.split(key, 4)
    x_1st = jax.random.normal(k1, (B, T, 2, d), jnp.float32)
    x_2nd = jax.random.normal(k2, (B, M, 4, d), jnp.float32)
    edge = jax.random.randint(k3, (2, M), 0, T, jnp.int32)

    params = init_params(kp, d, layer_num)

    h_node, h_edge = gnn_energy_model_forward(x_1st, x_2nd, edge, params, batch_block=1)
    jax.block_until_ready((h_node, h_edge))

    rn, re = _ref_forward(x_1st, x_2nd, edge, params)
    # Kernel uses bf16 matmul operands with f32 accumulation -> loose tolerance vs f32 ref.
    np.testing.assert_allclose(np.asarray(h_node), np.asarray(rn), rtol=5e-2, atol=5e-2)
    np.testing.assert_allclose(np.asarray(h_edge), np.asarray(re), rtol=5e-2, atol=5e-2)

    print("KERNEL_OK")
</pallas_src>

<mosaic_0001>
module attributes {stable_mosaic.version = 11 : i64} {
  func.func @_fused_gnn_ebm_kernel(%arg0: i32, %arg1: memref<1x2x8x128xf32, #tpu.memory_space<vmem>>, %arg2: memref<1x4x16x128xf32, #tpu.memory_space<vmem>>, %arg3: memref<32x8xbf16, #tpu.memory_space<vmem>>, %arg4: memref<8x16xbf16, #tpu.memory_space<vmem>>, %arg5: memref<2x128x128xbf16, #tpu.memory_space<vmem>>, %arg6: memref<2x1x128xf32, #tpu.memory_space<vmem>>, %arg7: memref<2x128x128xbf16, #tpu.memory_space<vmem>>, %arg8: memref<2x1x128xf32, #tpu.memory_space<vmem>>, %arg9: memref<2x128x128xbf16, #tpu.memory_space<vmem>>, %arg10: memref<2x1x128xf32, #tpu.memory_space<vmem>>, %arg11: memref<2x128x256xbf16, #tpu.memory_space<vmem>>, %arg12: memref<2x1x256xf32, #tpu.memory_space<vmem>>, %arg13: memref<2x256x128xbf16, #tpu.memory_space<vmem>>, %arg14: memref<2x1x128xf32, #tpu.memory_space<vmem>>, %arg15: memref<2x1x128xf32, #tpu.memory_space<vmem>>, %arg16: memref<2x1x1xf32, #tpu.memory_space<vmem>>, %arg17: memref<1x2x8x1xf32, #tpu.memory_space<vmem>>, %arg18: memref<1x4x16x1xf32, #tpu.memory_space<vmem>>) attributes {dimension_semantics = [#tpu.dimension_semantics<parallel>], iteration_bounds = array<i64: 2>, scalar_prefetch = 0 : i64, scratch_operands = 0 : i64, tpu.core_type = #tpu.core_type<tc>, window_params = [{transform_indices = @transform_0, window_bounds = array<i64: 1, 2, 8, 128>}, {transform_indices = @transform_1, window_bounds = array<i64: 1, 4, 16, 128>}, {pipeline_mode = #tpu.pipeline_mode<synchronous>, transform_indices = @transform_2, window_bounds = array<i64: 32, 8>}, {pipeline_mode = #tpu.pipeline_mode<synchronous>, transform_indices = @transform_3, window_bounds = array<i64: 8, 16>}, {pipeline_mode = #tpu.pipeline_mode<synchronous>, transform_indices = @transform_4, window_bounds = array<i64: 2, 128, 128>}, {pipeline_mode = #tpu.pipeline_mode<synchronous>, transform_indices = @transform_5, window_bounds = array<i64: 2, 1, 128>}, {pipeline_mode = #tpu.pipeline_mode<synchronous>, transform_indices = @transform_6, window_bounds = array<i64: 2, 128, 128>}, {pipeline_mode = #tpu.pipeline_mode<synchronous>, transform_indices = @transform_7, window_bounds = array<i64: 2, 1, 128>}, {pipeline_mode = #tpu.pipeline_mode<synchronous>, transform_indices = @transform_8, window_bounds = array<i64: 2, 128, 128>}, {pipeline_mode = #tpu.pipeline_mode<synchronous>, transform_indices = @transform_9, window_bounds = array<i64: 2, 1, 128>}, {pipeline_mode = #tpu.pipeline_mode<synchronous>, transform_indices = @transform_10, window_bounds = array<i64: 2, 128, 256>}, {pipeline_mode = #tpu.pipeline_mode<synchronous>, transform_indices = @transform_11, window_bounds = array<i64: 2, 1, 256>}, {pipeline_mode = #tpu.pipeline_mode<synchronous>, transform_indices = @transform_12, window_bounds = array<i64: 2, 256, 128>}, {pipeline_mode = #tpu.pipeline_mode<synchronous>, transform_indices = @transform_13, window_bounds = array<i64: 2, 1, 128>}, {pipeline_mode = #tpu.pipeline_mode<synchronous>, transform_indices = @transform_14, window_bounds = array<i64: 2, 1, 128>}, {pipeline_mode = #tpu.pipeline_mode<synchronous>, transform_indices = @transform_15, window_bounds = array<i64: 2, 1, 1>}, {transform_indices = @transform_16, window_bounds = array<i64: 1, 2, 8, 1>}, {transform_indices = @transform_17, window_bounds = array<i64: 1, 4, 16, 1>}]} {
    %c0 = arith.constant 0 : index
    %c0_0 = arith.constant 0 : index
    %0 = vector.load %arg3[%c0, %c0_0] : memref<32x8xbf16, #tpu.memory_space<vmem>>, vector<32x8xbf16>
    %c0_1 = arith.constant 0 : index
    %c0_2 = arith.constant 0 : index
    %1 = vector.load %arg4[%c0_1, %c0_2] : memref<8x16xbf16, #tpu.memory_space<vmem>>, vector<8x16xbf16>
    %c0_3 = arith.constant 0 : index
    %c0_4 = arith.constant 0 : index
    %c0_5 = arith.constant 0 : index
    %c0_6 = arith.constant 0 : index
    %2 = vector.load %arg1[%c0_3, %c0_4, %c0_5, %c0_6] : memref<1x2x8x128xf32, #tpu.memory_space<vmem>>, vector<1x2x8x128xf32>
    %3 = vector.shape_cast %2 : vector<1x2x8x128xf32> to vector<16x128xf32>
    %c0_7 = arith.constant 0 : index
    %c0_8 = arith.constant 0 : index
    %c0_9 = arith.constant 0 : index
    %c0_10 = arith.constant 0 : index
    %4 = vector.load %arg2[%c0_7, %c0_8, %c0_9, %c0_10] : memref<1x4x16x128xf32, #tpu.memory_space<vmem>>, vector<1x4x16x128xf32>
    %5 = vector.shape_cast %4 : vector<1x4x16x128xf32> to vector<64x128xf32>
    %c0_11 = arith.constant 0 : index
    %c0_12 = arith.constant 0 : index
    %c0_13 = arith.constant 0 : index
    %6 = vector.load %arg5[%c0_11, %c0_12, %c0_13] : memref<2x128x128xbf16, #tpu.memory_space<vmem>>, vector<1x128x128xbf16>
    %7 = vector.shape_cast %6 : vector<1x128x128xbf16> to vector<128x128xbf16>
    %c0_14 = arith.constant 0 : index
    %c0_15 = arith.constant 0 : index
    %c0_16 = arith.constant 0 : index
    %8 = vector.load %arg6[%c0_14, %c0_15, %c0_16] : memref<2x1x128xf32, #tpu.memory_space<vmem>>, vector<1x1x128xf32>
    %9 = vector.shape_cast %8 : vector<1x1x128xf32> to vector<1x128xf32>
    %c0_17 = arith.constant 0 : index
    %c0_18 = arith.constant 0 : index
    %c0_19 = arith.constant 0 : index
    %10 = vector.load %arg7[%c0_17, %c0_18, %c0_19] : memref<2x128x128xbf16, #tpu.memory_space<vmem>>, vector<1x128x128xbf16>
    %11 = vector.shape_cast %10 : vector<1x128x128xbf16> to vector<128x128xbf16>
    %c0_20 = arith.constant 0 : index
    %c0_21 = arith.constant 0 : index
    %c0_22 = arith.constant 0 : index
    %12 = vector.load %arg8[%c0_20, %c0_21, %c0_22] : memref<2x1x128xf32, #tpu.memory_space<vmem>>, vector<1x1x128xf32>
    %13 = vector.shape_cast %12 : vector<1x1x128xf32> to vector<1x128xf32>
    %c0_23 = arith.constant 0 : index
    %c0_24 = arith.constant 0 : index
    %c0_25 = arith.constant 0 : index
    %14 = vector.load %arg9[%c0_23, %c0_24, %c0_25] : memref<2x128x128xbf16, #tpu.memory_space<vmem>>, vector<1x128x128xbf16>
    %15 = vector.shape_cast %14 : vector<1x128x128xbf16> to vector<128x128xbf16>
    %c0_26 = arith.constant 0 : index
    %c0_27 = arith.constant 0 : index
    %c0_28 = arith.constant 0 : index
    %16 = vector.load %arg10[%c0_26, %c0_27, %c0_28] : memref<2x1x128xf32, #tpu.memory_space<vmem>>, vector<1x1x128xf32>
    %17 = vector.shape_cast %16 : vector<1x1x128xf32> to vector<1x128xf32>
    %18 = vector.extract_strided_slice %3 {offsets = [0, 0], sizes = [8, 128], strides = [1, 1]} : vector<16x128xf32> to vector<8x128xf32>
    %19 = vector.extract_strided_slice %3 {offsets = [8, 0], sizes = [8, 128], strides = [1, 1]} : vector<16x128xf32> to vector<8x128xf32>
    %20 = vector.extract_strided_slice %5 {offsets = [0, 0], sizes = [16, 128], strides = [1, 1]} : vector<64x128xf32> to vector<16x128xf32>
    %21 = vector.extract_strided_slice %5 {offsets = [16, 0], sizes = [16, 128], strides = [1, 1]} : vector<64x128xf32> to vector<16x128xf32>
    %22 = arith.addf %20, %21 : vector<16x128xf32>
    %23 = vector.extract_strided_slice %5 {offsets = [32, 0], sizes = [16, 128], strides = [1, 1]} : vector<64x128xf32> to vector<16x128xf32>
    %24 = vector.extract_strided_slice %5 {offsets = [48, 0], sizes = [16, 128], strides = [1, 1]} : vector<64x128xf32> to vector<16x128xf32>
    %25 = arith.addf %23, %24 : vector<16x128xf32>
    %26 = tpu.concatenate %22, %25 in 1 : vector<16x128xf32>, vector<16x128xf32> -> vector<16x256xf32>
    %27 = arith.truncf %26 : vector<16x256xf32> to vector<16x256xbf16>
    %cst = arith.constant dense<0.000000e+00> : vector<8x256xf32>
    %28 = tpu.matmul %1, %27, %cst {dimension_numbers = #tpu.dot_dimension_numbers<[1], [0], [0], [1], [0, 0, 1, 1], [], []>} : vector<8x16xbf16>, vector<16x256xbf16>, vector<8x256xf32> -> vector<8x256xf32>
    %29 = vector.extract_strided_slice %28 {offsets = [0, 0], sizes = [8, 128], strides = [1, 1]} : vector<8x256xf32> to vector<8x128xf32>
    %30 = arith.addf %18, %29 : vector<8x128xf32>
    %31 = vector.extract_strided_slice %28 {offsets = [0, 128], sizes = [8, 128], strides = [1, 1]} : vector<8x256xf32> to vector<8x128xf32>
    %32 = arith.addf %19, %31 : vector<8x128xf32>
    %33 = tpu.concatenate %18, %19 in 1 : vector<8x128xf32>, vector<8x128xf32> -> vector<8x256xf32>
    %34 = arith.truncf %33 : vector<8x256xf32> to vector<8x256xbf16>
    %cst_29 = arith.constant dense<0.000000e+00> : vector<32x256xf32>
    %35 = tpu.matmul %0, %34, %cst_29 {dimension_numbers = #tpu.dot_dimension_numbers<[1], [0], [0], [1], [0, 0, 1, 1], [], []>} : vector<32x8xbf16>, vector<8x256xbf16>, vector<32x256xf32> -> vector<32x256xf32>
    %36 = vector.extract_strided_slice %35 {offsets = [0, 0], sizes = [16, 128], strides = [1, 1]} : vector<32x256xf32> to vector<16x128xf32>
    %37 = vector.extract_strided_slice %35 {offsets = [0, 128], sizes = [16, 128], strides = [1, 1]} : vector<32x256xf32> to vector<16x128xf32>
    %38 = vector.extract_strided_slice %35 {offsets = [16, 0], sizes = [16, 128], strides = [1, 1]} : vector<32x256xf32> to vector<16x128xf32>
    %39 = vector.extract_strided_slice %35 {offsets = [16, 128], sizes = [16, 128], strides = [1, 1]} : vector<32x256xf32> to vector<16x128xf32>
    %40 = arith.addf %36, %38 : vector<16x128xf32>
    %41 = arith.addf %36, %39 : vector<16x128xf32>
    %42 = arith.addf %37, %38 : vector<16x128xf32>
    %43 = arith.addf %37, %39 : vector<16x128xf32>
    %44 = tpu.concatenate %30, %32 in 0 : vector<8x128xf32>, vector<8x128xf32> -> vector<16x128xf32>
    %45 = tpu.concatenate %40, %41, %42, %43 in 0 : vector<16x128xf32>, vector<16x128xf32>, vector<16x128xf32>, vector<16x128xf32> -> vector<64x128xf32>
    %46 = arith.truncf %44 : vector<16x128xf32> to vector<16x128xbf16>
    %cst_30 = arith.constant dense<0.000000e+00> : vector<16x128xf32>
    %47 = tpu.matmul %46, %7, %cst_30 {dimension_numbers = #tpu.dot_dimension_numbers<[1], [0], [0], [1], [0, 0, 1, 1], [], []>} : vector<16x128xbf16>, vector<128x128xbf16>, vector<16x128xf32> -> vector<16x128xf32>
    %48 = vector.broadcast %9 : vector<1x128xf32> to vector<16x128xf32>
    %49 = arith.addf %47, %48 : vector<16x128xf32>
    %cst_31 = arith.constant 0.000000e+00 : f32
    %50 = vector.broadcast %cst_31 : f32 to vector<16x128xf32>
    %51 = arith.maximumf %49, %50 : vector<16x128xf32>
    %52 = arith.truncf %45 : vector<64x128xf32> to vector<64x128xbf16>
    %cst_32 = arith.constant dense<0.000000e+00> : vector<64x128xf32>
    %53 = tpu.matmul %52, %11, %cst_32 {dimension_numbers = #tpu.dot_dimension_numbers<[1], [0], [0], [1], [0, 0, 1, 1], [], []>} : vector<64x128xbf16>, vector<128x128xbf16>, vector<64x128xf32> -> vector<64x128xf32>
    %54 = vector.broadcast %13 : vector<1x128xf32> to vector<64x128xf32>
    %55 = arith.addf %53, %54 : vector<64x128xf32>
    %56 = arith.addf %5, %55 : vector<64x128xf32>
    %57 = arith.truncf %56 : vector<64x128xf32> to vector<64x128xbf16>
    %cst_33 = arith.constant dense<0.000000e+00> : vector<64x128xf32>
    %58 = tpu.matmul %57, %15, %cst_33 {dimension_numbers = #tpu.dot_dimension_numbers<[1], [0], [0], [1], [0, 0, 1, 1], [], []>} : vector<64x128xbf16>, vector<128x128xbf16>, vector<64x128xf32> -> vector<64x128xf32>
    %59 = vector.broadcast %17 : vector<1x128xf32> to vector<64x128xf32>
    %60 = arith.addf %58, %59 : vector<64x128xf32>
    %c1 = arith.constant 1 : index
    %c0_34 = arith.constant 0 : index
    %c0_35 = arith.constant 0 : index
    %61 = vector.load %arg5[%c1, %c0_34, %c0_35] : memref<2x128x128xbf16, #tpu.memory_space<vmem>>, vector<1x128x128xbf16>
    %62 = vector.shape_cast %61 : vector<1x128x128xbf16> to vector<128x128xbf16>
    %c1_36 = arith.constant 1 : index
    %c0_37 = arith.constant 0 : index
    %c0_38 = arith.constant 0 : index
    %63 = vector.load %arg6[%c1_36, %c0_37, %c0_38] : memref<2x1x128xf32, #tpu.memory_space<vmem>>, vector<1x1x128xf32>
    %64 = vector.shape_cast %63 : vector<1x1x128xf32> to vector<1x128xf32>
    %c1_39 = arith.constant 1 : index
    %c0_40 = arith.constant 0 : index
    %c0_41 = arith.constant 0 : index
    %65 = vector.load %arg7[%c1_39, %c0_40, %c0_41] : memref<2x128x128xbf16, #tpu.memory_space<vmem>>, vector<1x128x128xbf16>
    %66 = vector.shape_cast %65 : vector<1x128x128xbf16> to vector<128x128xbf16>
    %c1_42 = arith.constant 1 : index
    %c0_43 = arith.constant 0 : index
    %c0_44 = arith.constant 0 : index
    %67 = vector.load %arg8[%c1_42, %c0_43, %c0_44] : memref<2x1x128xf32, #tpu.memory_space<vmem>>, vector<1x1x128xf32>
    %68 = vector.shape_cast %67 : vector<1x1x128xf32> to vector<1x128xf32>
    %c1_45 = arith.constant 1 : index
    %c0_46 = arith.constant 0 : index
    %c0_47 = arith.constant 0 : index
    %69 = vector.load %arg9[%c1_45, %c0_46, %c0_47] : memref<2x128x128xbf16, #tpu.memory_space<vmem>>, vector<1x128x128xbf16>
    %70 = vector.shape_cast %69 : vector<1x128x128xbf16> to vector<128x128xbf16>
    %c1_48 = arith.constant 1 : index
    %c0_49 = arith.constant 0 : index
    %c0_50 = arith.constant 0 : index
    %71 = vector.load %arg10[%c1_48, %c0_49, %c0_50] : memref<2x1x128xf32, #tpu.memory_space<vmem>>, vector<1x1x128xf32>
    %72 = vector.shape_cast %71 : vector<1x1x128xf32> to vector<1x128xf32>
    %73 = vector.extract_strided_slice %51 {offsets = [0, 0], sizes = [8, 128], strides = [1, 1]} : vector<16x128xf32> to vector<8x128xf32>
    %74 = vector.extract_strided_slice %51 {offsets = [8, 0], sizes = [8, 128], strides = [1, 1]} : vector<16x128xf32> to vector<8x128xf32>
    %75 = vector.extract_strided_slice %60 {offsets = [0, 0], sizes = [16, 128], strides = [1, 1]} : vector<64x128xf32> to vector<16x128xf32>
    %76 = vector.extract_strided_slice %60 {offsets = [16, 0], sizes = [16, 128], strides = [1, 1]} : vector<64x128xf32> to vector<16x128xf32>
    %77 = arith.addf %75, %76 : vector<16x128xf32>
    %78 = vector.extract_strided_slice %60 {offsets = [32, 0], sizes = [16, 128], strides = [1, 1]} : vector<64x128xf32> to vector<16x128xf32>
    %79 = vector.extract_strided_slice %60 {offsets = [48, 0], sizes = [16, 128], strides = [1, 1]} : vector<64x128xf32> to vector<16x128xf32>
    %80 = arith.addf %78, %79 : vector<16x128xf32>
    %81 = tpu.concatenate %77, %80 in 1 : vector<16x128xf32>, vector<16x128xf32> -> vector<16x256xf32>
    %82 = arith.truncf %81 : vector<16x256xf32> to vector<16x256xbf16>
    %cst_51 = arith.constant dense<0.000000e+00> : vector<8x256xf32>
    %83 = tpu.matmul %1, %82, %cst_51 {dimension_numbers = #tpu.dot_dimension_numbers<[1], [0], [0], [1], [0, 0, 1, 1], [], []>} : vector<8x16xbf16>, vector<16x256xbf16>, vector<8x256xf32> -> vector<8x256xf32>
    %84 = vector.extract_strided_slice %83 {offsets = [0, 0], sizes = [8, 128], strides = [1, 1]} : vector<8x256xf32> to vector<8x128xf32>
    %85 = arith.addf %73, %84 : vector<8x128xf32>
    %86 = vector.extract_strided_slice %83 {offsets = [0, 128], sizes = [8, 128], strides = [1, 1]} : vector<8x256xf32> to vector<8x128xf32>
    %87 = arith.addf %74, %86 : vector<8x128xf32>
    %88 = tpu.concatenate %73, %74 in 1 : vector<8x128xf32>, vector<8x128xf32> -> vector<8x256xf32>
    %89 = arith.truncf %88 : vector<8x256xf32> to vector<8x256xbf16>
    %cst_52 = arith.constant dense<0.000000e+00> : vector<32x256xf32>
    %90 = tpu.matmul %0, %89, %cst_52 {dimension_numbers = #tpu.dot_dimension_numbers<[1], [0], [0], [1], [0, 0, 1, 1], [], []>} : vector<32x8xbf16>, vector<8x256xbf16>, vector<32x256xf32> -> vector<32x256xf32>
    %91 = vector.extract_strided_slice %90 {offsets = [0, 0], sizes = [16, 128], strides = [1, 1]} : vector<32x256xf32> to vector<16x128xf32>
    %92 = vector.extract_strided_slice %90 {offsets = [0, 128], sizes = [16, 128], strides = [1, 1]} : vector<32x256xf32> to vector<16x128xf32>
    %93 = vector.extract_strided_slice %90 {offsets = [16, 0], sizes = [16, 128], strides = [1, 1]} : vector<32x256xf32> to vector<16x128xf32>
    %94 = vector.extract_strided_slice %90 {offsets = [16, 128], sizes = [16, 128], strides = [1, 1]} : vector<32x256xf32> to vector<16x128xf32>
    %95 = arith.addf %91, %93 : vector<16x128xf32>
    %96 = arith.addf %91, %94 : vector<16x128xf32>
    %97 = arith.addf %92, %93 : vector<16x128xf32>
    %98 = arith.addf %92, %94 : vector<16x128xf32>
    %99 = tpu.concatenate %85, %87 in 0 : vector<8x128xf32>, vector<8x128xf32> -> vector<16x128xf32>
    %100 = tpu.concatenate %95, %96, %97, %98 in 0 : vector<16x128xf32>, vector<16x128xf32>, vector<16x128xf32>, vector<16x128xf32> -> vector<64x128xf32>
    %101 = arith.truncf %99 : vector<16x128xf32> to vector<16x128xbf16>
    %cst_53 = arith.constant dense<0.000000e+00> : vector<16x128xf32>
    %102 = tpu.matmul %101, %62, %cst_53 {dimension_numbers = #tpu.dot_dimension_numbers<[1], [0], [0], [1], [0, 0, 1, 1], [], []>} : vector<16x128xbf16>, vector<128x128xbf16>, vector<16x128xf32> -> vector<16x128xf32>
    %103 = vector.broadcast %64 : vector<1x128xf32> to vector<16x128xf32>
    %104 = arith.addf %102, %103 : vector<16x128xf32>
    %105 = arith.truncf %100 : vector<64x128xf32> to vector<64x128xbf16>
    %cst_54 = arith.constant dense<0.000000e+00> : vector<64x128xf32>
    %106 = tpu.matmul %105, %66, %cst_54 {dimension_numbers = #tpu.dot_dimension_numbers<[1], [0], [0], [1], [0, 0, 1, 1], [], []>} : vector<64x128xbf16>, vector<128x128xbf16>, vector<64x128xf32> -> vector<64x128xf32>
    %107 = vector.broadcast %68 : vector<1x128xf32> to vector<64x128xf32>
    %108 = arith.addf %106, %107 : vector<64x128xf32>
    %109 = arith.addf %60, %108 : vector<64x128xf32>
    %110 = arith.truncf %109 : vector<64x128xf32> to vector<64x128xbf16>
    %cst_55 = arith.constant dense<0.000000e+00> : vector<64x128xf32>
    %111 = tpu.matmul %110, %70, %cst_55 {dimension_numbers = #tpu.dot_dimension_numbers<[1], [0], [0], [1], [0, 0, 1, 1], [], []>} : vector<64x128xbf16>, vector<128x128xbf16>, vector<64x128xf32> -> vector<64x128xf32>
    %112 = vector.broadcast %72 : vector<1x128xf32> to vector<64x128xf32>
    %113 = arith.addf %111, %112 : vector<64x128xf32>
    %114 = arith.truncf %104 : vector<16x128xf32> to vector<16x128xbf16>
    %c0_56 = arith.constant 0 : index
    %c0_57 = arith.constant 0 : index
    %c0_58 = arith.constant 0 : index
    %115 = vector.load %arg11[%c0_56, %c0_57, %c0_58] : memref<2x128x256xbf16, #tpu.memory_space<vmem>>, vector<1x128x256xbf16>
    %116 = vector.shape_cast %115 : vector<1x128x256xbf16> to vector<128x256xbf16>
    %cst_59 = arith.constant dense<0.000000e+00> : vector<16x256xf32>
    %117 = tpu.matmul %114, %116, %cst_59 {dimension_numbers = #tpu.dot_dimension_numbers<[1], [0], [0], [1], [0, 0, 1, 1], [], []>} : vector<16x128xbf16>, vector<128x256xbf16>, vector<16x256xf32> -> vector<16x256xf32>
    %c0_60 = arith.constant 0 : index
    %c0_61 = arith.constant 0 : index
    %c0_62 = arith.constant 0 : index
    %118 = vector.load %arg12[%c0_60, %c0_61, %c0_62] : memref<2x1x256xf32, #tpu.memory_space<vmem>>, vector<1x1x256xf32>
    %119 = vector.shape_cast %118 : vector<1x1x256xf32> to vector<1x256xf32>
    %120 = vector.broadcast %119 : vector<1x256xf32> to vector<16x256xf32>
    %121 = arith.addf %117, %120 : vector<16x256xf32>
    %cst_63 = arith.constant 0.000000e+00 : f32
    %122 = vector.broadcast %cst_63 : f32 to vector<16x256xf32>
    %123 = arith.maximumf %121, %122 : vector<16x256xf32>
    %124 = arith.truncf %123 : vector<16x256xf32> to vector<16x256xbf16>
    %c0_64 = arith.constant 0 : index
    %c0_65 = arith.constant 0 : index
    %c0_66 = arith.constant 0 : index
    %125 = vector.load %arg13[%c0_64, %c0_65, %c0_66] : memref<2x256x128xbf16, #tpu.memory_space<vmem>>, vector<1x256x128xbf16>
    %126 = vector.shape_cast %125 : vector<1x256x128xbf16> to vector<256x128xbf16>
    %cst_67 = arith.constant dense<0.000000e+00> : vector<16x128xf32>
    %127 = tpu.matmul %124, %126, %cst_67 {dimension_numbers = #tpu.dot_dimension_numbers<[1], [0], [0], [1], [0, 0, 1, 1], [], []>} : vector<16x256xbf16>, vector<256x128xbf16>, vector<16x128xf32> -> vector<16x128xf32>
    %c0_68 = arith.constant 0 : index
    %c0_69 = arith.constant 0 : index
    %c0_70 = arith.constant 0 : index
    %128 = vector.load %arg14[%c0_68, %c0_69, %c0_70] : memref<2x1x128xf32, #tpu.memory_space<vmem>>, vector<1x1x128xf32>
    %129 = vector.shape_cast %128 : vector<1x1x128xf32> to vector<1x128xf32>
    %130 = vector.broadcast %129 : vector<1x128xf32> to vector<16x128xf32>
    %131 = arith.addf %127, %130 : vector<16x128xf32>
    %cst_71 = arith.constant 0.000000e+00 : f32
    %132 = vector.broadcast %cst_71 : f32 to vector<16x128xf32>
    %133 = arith.maximumf %131, %132 : vector<16x128xf32>
    %c0_72 = arith.constant 0 : index
    %c0_73 = arith.constant 0 : index
    %c0_74 = arith.constant 0 : index
    %134 = vector.load %arg15[%c0_72, %c0_73, %c0_74] : memref<2x1x128xf32, #tpu.memory_space<vmem>>, vector<1x1x128xf32>
    %135 = vector.shape_cast %134 : vector<1x1x128xf32> to vector<1x128xf32>
    %136 = vector.broadcast %135 : vector<1x128xf32> to vector<16x128xf32>
    %137 = arith.mulf %133, %136 : vector<16x128xf32>
    %cst_75 = arith.constant dense<0.000000e+00> : vector<16xf32>
    %138 = vector.multi_reduction <add>, %137, %cst_75 [1] : vector<16x128xf32> to vector<16xf32>
    %139 = vector.shape_cast %138 : vector<16xf32> to vector<16x1xf32>
    %c0_76 = arith.constant 0 : index
    %c0_77 = arith.constant 0 : index
    %c0_78 = arith.constant 0 : index
    %140 = vector.load %arg16[%c0_76, %c0_77, %c0_78] : memref<2x1x1xf32, #tpu.memory_space<vmem>>, vector<1x1x1xf32>
    %141 = vector.shape_cast %140 : vector<1x1x1xf32> to vector<1x1xf32>
    %142 = vector.broadcast %141 : vector<1x1xf32> to vector<16x1xf32>
    %143 = arith.addf %139, %142 : vector<16x1xf32>
    %144 = arith.truncf %113 : vector<64x128xf32> to vector<64x128xbf16>
    %c1_79 = arith.constant 1 : index
    %c0_80 = arith.constant 0 : index
    %c0_81 = arith.constant 0 : index
    %145 = vector.load %arg11[%c1_79, %c0_80, %c0_81] : memref<2x128x256xbf16, #tpu.memory_space<vmem>>, vector<1x128x256xbf16>
    %146 = vector.shape_cast %145 : vector<1x128x256xbf16> to vector<128x256xbf16>
    %cst_82 = arith.constant dense<0.000000e+00> : vector<64x256xf32>
    %147 = tpu.matmul %144, %146, %cst_82 {dimension_numbers = #tpu.dot_dimension_numbers<[1], [0], [0], [1], [0, 0, 1, 1], [], []>} : vector<64x128xbf16>, vector<128x256xbf16>, vector<64x256xf32> -> vector<64x256xf32>
    %c1_83 = arith.constant 1 : index
    %c0_84 = arith.constant 0 : index
    %c0_85 = arith.constant 0 : index
    %148 = vector.load %arg12[%c1_83, %c0_84, %c0_85] : memref<2x1x256xf32, #tpu.memory_space<vmem>>, vector<1x1x256xf32>
    %149 = vector.shape_cast %148 : vector<1x1x256xf32> to vector<1x256xf32>
    %150 = vector.broadcast %149 : vector<1x256xf32> to vector<64x256xf32>
    %151 = arith.addf %147, %150 : vector<64x256xf32>
    %cst_86 = arith.constant 0.000000e+00 : f32
    %152 = vector.broadcast %cst_86 : f32 to vector<64x256xf32>
    %153 = arith.maximumf %151, %152 : vector<64x256xf32>
    %154 = arith.truncf %153 : vector<64x256xf32> to vector<64x256xbf16>
    %c1_87 = arith.constant 1 : index
    %c0_88 = arith.constant 0 : index
    %c0_89 = arith.constant 0 : index
    %155 = vector.load %arg13[%c1_87, %c0_88, %c0_89] : memref<2x256x128xbf16, #tpu.memory_space<vmem>>, vector<1x256x128xbf16>
    %156 = vector.shape_cast %155 : vector<1x256x128xbf16> to vector<256x128xbf16>
    %cst_90 = arith.constant dense<0.000000e+00> : vector<64x128xf32>
    %157 = tpu.matmul %154, %156, %cst_90 {dimension_numbers = #tpu.dot_dimension_numbers<[1], [0], [0], [1], [0, 0, 1, 1], [], []>} : vector<64x256xbf16>, vector<256x128xbf16>, vector<64x128xf32> -> vector<64x128xf32>
    %c1_91 = arith.constant 1 : index
    %c0_92 = arith.constant 0 : index
    %c0_93 = arith.constant 0 : index
    %158 = vector.load %arg14[%c1_91, %c0_92, %c0_93] : memref<2x1x128xf32, #tpu.memory_space<vmem>>, vector<1x1x128xf32>
    %159 = vector.shape_cast %158 : vector<1x1x128xf32> to vector<1x128xf32>
    %160 = vector.broadcast %159 : vector<1x128xf32> to vector<64x128xf32>
    %161 = arith.addf %157, %160 : vector<64x128xf32>
    %cst_94 = arith.constant 0.000000e+00 : f32
    %162 = vector.broadcast %cst_94 : f32 to vector<64x128xf32>
    %163 = arith.maximumf %161, %162 : vector<64x128xf32>
    %c1_95 = arith.constant 1 : index
    %c0_96 = arith.constant 0 : index
    %c0_97 = arith.constant 0 : index
    %164 = vector.load %arg15[%c1_95, %c0_96, %c0_97] : memref<2x1x128xf32, #tpu.memory_space<vmem>>, vector<1x1x128xf32>
    %165 = vector.shape_cast %164 : vector<1x1x128xf32> to vector<1x128xf32>
    %166 = vector.broadcast %165 : vector<1x128xf32> to vector<64x128xf32>
    %167 = arith.mulf %163, %166 : vector<64x128xf32>
    %cst_98 = arith.constant dense<0.000000e+00> : vector<64xf32>
    %168 = vector.multi_reduction <add>, %167, %cst_98 [1] : vector<64x128xf32> to vector<64xf32>
    %169 = vector.shape_cast %168 : vector<64xf32> to vector<64x1xf32>
    %c1_99 = arith.constant 1 : index
    %c0_100 = arith.constant 0 : index
    %c0_101 = arith.constant 0 : index
    %170 = vector.load %arg16[%c1_99, %c0_100, %c0_101] : memref<2x1x1xf32, #tpu.memory_space<vmem>>, vector<1x1x1xf32>
    %171 = vector.shape_cast %170 : vector<1x1x1xf32> to vector<1x1xf32>
    %172 = vector.broadcast %171 : vector<1x1xf32> to vector<64x1xf32>
    %173 = arith.addf %169, %172 : vector<64x1xf32>
    %174 = vector.extract_strided_slice %143 {offsets = [0, 0], sizes = [8, 1], strides = [1, 1]} : vector<16x1xf32> to vector<8x1xf32>
    %c0_102 = arith.constant 0 : index
    %c0_103 = arith.constant 0 : index
    %c0_104 = arith.constant 0 : index
    %c0_105 = arith.constant 0 : index
    %175 = vector.load %arg17[%c0_102, %c0_103, %c0_104, %c0_105] : memref<1x2x8x1xf32, #tpu.memory_space<vmem>>, vector<1x1x8x1xf32>
    %176 = vector.shape_cast %175 : vector<1x1x8x1xf32> to vector<8x1xf32>
    %177 = vector.shape_cast %174 : vector<8x1xf32> to vector<1x1x8x1xf32>
    tpu.vector_store %arg17[%c0_102, %c0_103, %c0_104, %c0_105], %177 {strides = array<i32>} : memref<1x2x8x1xf32, #tpu.memory_space<vmem>>, vector<1x1x8x1xf32>,
    %178 = vector.extract_strided_slice %143 {offsets = [8, 0], sizes = [8, 1], strides = [1, 1]} : vector<16x1xf32> to vector<8x1xf32>
    %c0_106 = arith.constant 0 : index
    %c1_107 = arith.constant 1 : index
    %c0_108 = arith.constant 0 : index
    %c0_109 = arith.constant 0 : index
    %179 = vector.load %arg17[%c0_106, %c1_107, %c0_108, %c0_109] : memref<1x2x8x1xf32, #tpu.memory_space<vmem>>, vector<1x1x8x1xf32>
    %180 = vector.shape_cast %179 : vector<1x1x8x1xf32> to vector<8x1xf32>
    %181 = vector.shape_cast %178 : vector<8x1xf32> to vector<1x1x8x1xf32>
    tpu.vector_store %arg17[%c0_106, %c1_107, %c0_108, %c0_109], %181 {strides = array<i32>} : memref<1x2x8x1xf32, #tpu.memory_space<vmem>>, vector<1x1x8x1xf32>,
    %182 = vector.extract_strided_slice %173 {offsets = [0, 0], sizes = [16, 1], strides = [1, 1]} : vector<64x1xf32> to vector<16x1xf32>
    %c0_110 = arith.constant 0 : index
    %c0_111 = arith.constant 0 : index
    %c0_112 = arith.constant 0 : index
    %c0_113 = arith.constant 0 : index
    %183 = vector.load %arg18[%c0_110, %c0_111, %c0_112, %c0_113] : memref<1x4x16x1xf32, #tpu.memory_space<vmem>>, vector<1x1x16x1xf32>
    %184 = vector.shape_cast %183 : vector<1x1x16x1xf32> to vector<16x1xf32>
    %185 = vector.shape_cast %182 : vector<16x1xf32> to vector<1x1x16x1xf32>
    tpu.vector_store %arg18[%c0_110, %c0_111, %c0_112, %c0_113], %185 {strides = array<i32>} : memref<1x4x16x1xf32, #tpu.memory_space<vmem>>, vector<1x1x16x1xf32>,
    %186 = vector.extract_strided_slice %173 {offsets = [16, 0], sizes = [16, 1], strides = [1, 1]} : vector<64x1xf32> to vector<16x1xf32>
    %c0_114 = arith.constant 0 : index
    %c1_115 = arith.constant 1 : index
    %c0_116 = arith.constant 0 : index
    %c0_117 = arith.constant 0 : index
    %187 = vector.load %arg18[%c0_114, %c1_115, %c0_116, %c0_117] : memref<1x4x16x1xf32, #tpu.memory_space<vmem>>, vector<1x1x16x1xf32>
    %188 = vector.shape_cast %187 : vector<1x1x16x1xf32> to vector<16x1xf32>
    %189 = vector.shape_cast %186 : vector<16x1xf32> to vector<1x1x16x1xf32>
    tpu.vector_store %arg18[%c0_114, %c1_115, %c0_116, %c0_117], %189 {strides = array<i32>} : memref<1x4x16x1xf32, #tpu.memory_space<vmem>>, vector<1x1x16x1xf32>,
    %190 = vector.extract_strided_slice %173 {offsets = [32, 0], sizes = [16, 1], strides = [1, 1]} : vector<64x1xf32> to vector<16x1xf32>
    %c0_118 = arith.constant 0 : index
    %c2 = arith.constant 2 : index
    %c0_119 = arith.constant 0 : index
    %c0_120 = arith.constant 0 : index
    %191 = vector.load %arg18[%c0_118, %c2, %c0_119, %c0_120] : memref<1x4x16x1xf32, #tpu.memory_space<vmem>>, vector<1x1x16x1xf32>
    %192 = vector.shape_cast %191 : vector<1x1x16x1xf32> to vector<16x1xf32>
    %193 = vector.shape_cast %190 : vector<16x1xf32> to vector<1x1x16x1xf32>
    tpu.vector_store %arg18[%c0_118, %c2, %c0_119, %c0_120], %193 {strides = array<i32>} : memref<1x4x16x1xf32, #tpu.memory_space<vmem>>, vector<1x1x16x1xf32>,
    %194 = vector.extract_strided_slice %173 {offsets = [48, 0], sizes = [16, 1], strides = [1, 1]} : vector<64x1xf32> to vector<16x1xf32>
    %c0_121 = arith.constant 0 : index
    %c3 = arith.constant 3 : index
    %c0_122 = arith.constant 0 : index
    %c0_123 = arith.constant 0 : index
    %195 = vector.load %arg18[%c0_121, %c3, %c0_122, %c0_123] : memref<1x4x16x1xf32, #tpu.memory_space<vmem>>, vector<1x1x16x1xf32>
    %196 = vector.shape_cast %195 : vector<1x1x16x1xf32> to vector<16x1xf32>
    %197 = vector.shape_cast %194 : vector<16x1xf32> to vector<1x1x16x1xf32>
    tpu.vector_store %arg18[%c0_121, %c3, %c0_122, %c0_123], %197 {strides = array<i32>} : memref<1x4x16x1xf32, #tpu.memory_space<vmem>>, vector<1x1x16x1xf32>,
    return
  }
  func.func @transform_0(%arg0: i32) -> (i32, i32, i32, i32) {
    %c0_i32 = arith.constant 0 : i32
    %c0_i32_0 = arith.constant 0 : i32
    %c0_i32_1 = arith.constant 0 : i32
    %c0_i32_2 = arith.constant 0 : i32
    return %arg0, %c0_i32, %c0_i32_0, %c0_i32_1 : i32, i32, i32, i32
  }
  func.func @transform_1(%arg0: i32) -> (i32, i32, i32, i32) {
    %c0_i32 = arith.constant 0 : i32
    %c0_i32_0 = arith.constant 0 : i32
    %c0_i32_1 = arith.constant 0 : i32
    %c0_i32_2 = arith.constant 0 : i32
    return %arg0, %c0_i32, %c0_i32_0, %c0_i32_1 : i32, i32, i32, i32
  }
  func.func @transform_2(%arg0: i32) -> (i32, i32) {
    %c0_i32 = arith.constant 0 : i32
    %c0_i32_0 = arith.constant 0 : i32
    %c0_i32_1 = arith.constant 0 : i32
    return %c0_i32, %c0_i32_0 : i32, i32
  }
  func.func @transform_3(%arg0: i32) -> (i32, i32) {
    %c0_i32 = arith.constant 0 : i32
    %c0_i32_0 = arith.constant 0 : i32
    %c0_i32_1 = arith.constant 0 : i32
    return %c0_i32, %c0_i32_0 : i32, i32
  }
  func.func @transform_4(%arg0: i32) -> (i32, i32, i32) {
    %c0_i32 = arith.constant 0 : i32
    %c0_i32_0 = arith.constant 0 : i32
    %c0_i32_1 = arith.constant 0 : i32
    %c0_i32_2 = arith.constant 0 : i32
    return %c0_i32, %c0_i32_0, %c0_i32_1 : i32, i32, i32
  }
  func.func @transform_5(%arg0: i32) -> (i32, i32, i32) {
    %c0_i32 = arith.constant 0 : i32
    %c0_i32_0 = arith.constant 0 : i32
    %c0_i32_1 = arith.constant 0 : i32
    %c0_i32_2 = arith.constant 0 : i32
    return %c0_i32, %c0_i32_0, %c0_i32_1 : i32, i32, i32
  }
  func.func @transform_6(%arg0: i32) -> (i32, i32, i32) {
    %c0_i32 = arith.constant 0 : i32
    %c0_i32_0 = arith.constant 0 : i32
    %c0_i32_1 = arith.constant 0 : i32
    %c0_i32_2 = arith.constant 0 : i32
    return %c0_i32, %c0_i32_0, %c0_i32_1 : i32, i32, i32
  }
  func.func @transform_7(%arg0: i32) -> (i32, i32, i32) {
    %c0_i32 = arith.constant 0 : i32
    %c0_i32_0 = arith.constant 0 : i32
    %c0_i32_1 = arith.constant 0 : i32
    %c0_i32_2 = arith.constant 0 : i32
    return %c0_i32, %c0_i32_0, %c0_i32_1 : i32, i32, i32
  }
  func.func @transform_8(%arg0: i32) -> (i32, i32, i32) {
    %c0_i32 = arith.constant 0 : i32
    %c0_i32_0 = arith.constant 0 : i32
    %c0_i32_1 = arith.constant 0 : i32
    %c0_i32_2 = arith.constant 0 : i32
    return %c0_i32, %c0_i32_0, %c0_i32_1 : i32, i32, i32
  }
  func.func @transform_9(%arg0: i32) -> (i32, i32, i32) {
    %c0_i32 = arith.constant 0 : i32
    %c0_i32_0 = arith.constant 0 : i32
    %c0_i32_1 = arith.constant 0 : i32
    %c0_i32_2 = arith.constant 0 : i32
    return %c0_i32, %c0_i32_0, %c0_i32_1 : i32, i32, i32
  }
  func.func @transform_10(%arg0: i32) -> (i32, i32, i32) {
    %c0_i32 = arith.constant 0 : i32
    %c0_i32_0 = arith.constant 0 : i32
    %c0_i32_1 = arith.constant 0 : i32
    %c0_i32_2 = arith.constant 0 : i32
    return %c0_i32, %c0_i32_0, %c0_i32_1 : i32, i32, i32
  }
  func.func @transform_11(%arg0: i32) -> (i32, i32, i32) {
    %c0_i32 = arith.constant 0 : i32
    %c0_i32_0 = arith.constant 0 : i32
    %c0_i32_1 = arith.constant 0 : i32
    %c0_i32_2 = arith.constant 0 : i32
    return %c0_i32, %c0_i32_0, %c0_i32_1 : i32, i32, i32
  }
  func.func @transform_12(%arg0: i32) -> (i32, i32, i32) {
    %c0_i32 = arith.constant 0 : i32
    %c0_i32_0 = arith.constant 0 : i32
    %c0_i32_1 = arith.constant 0 : i32
    %c0_i32_2 = arith.constant 0 : i32
    return %c0_i32, %c0_i32_0, %c0_i32_1 : i32, i32, i32
  }
  func.func @transform_13(%arg0: i32) -> (i32, i32, i32) {
    %c0_i32 = arith.constant 0 : i32
    %c0_i32_0 = arith.constant 0 : i32
    %c0_i32_1 = arith.constant 0 : i32
    %c0_i32_2 = arith.constant 0 : i32
    return %c0_i32, %c0_i32_0, %c0_i32_1 : i32, i32, i32
  }
  func.func @transform_14(%arg0: i32) -> (i32, i32, i32) {
    %c0_i32 = arith.constant 0 : i32
    %c0_i32_0 = arith.constant 0 : i32
    %c0_i32_1 = arith.constant 0 : i32
    %c0_i32_2 = arith.constant 0 : i32
    return %c0_i32, %c0_i32_0, %c0_i32_1 : i32, i32, i32
  }
  func.func @transform_15(%arg0: i32) -> (i32, i32, i32) {
    %c0_i32 = arith.constant 0 : i32
    %c0_i32_0 = arith.constant 0 : i32
    %c0_i32_1 = arith.constant 0 : i32
    %c0_i32_2 = arith.constant 0 : i32
    return %c0_i32, %c0_i32_0, %c0_i32_1 : i32, i32, i32
  }
  func.func @transform_16(%arg0: i32) -> (i32, i32, i32, i32) {
    %c0_i32 = arith.constant 0 : i32
    %c0_i32_0 = arith.constant 0 : i32
    %c0_i32_1 = arith.constant 0 : i32
    %c0_i32_2 = arith.constant 0 : i32
    return %arg0, %c0_i32, %c0_i32_0, %c0_i32_1 : i32, i32, i32, i32
  }
  func.func @transform_17(%arg0: i32) -> (i32, i32, i32, i32) {
    %c0_i32 = arith.constant 0 : i32
    %c0_i32_0 = arith.constant 0 : i32
    %c0_i32_1 = arith.constant 0 : i32
    %c0_i32_2 = arith.constant 0 : i32
    return %arg0, %c0_i32, %c0_i32_0, %c0_i32_1 : i32, i32, i32, i32
  }
}

</mosaic_0001>

<llo_original>
// kernel: tpu_custom_call.1
$region0: #{tpu_custom_call.1}
  #allocation0 [shape = 'u32[]', space=smem, size = 0x4, offset = 0x4, fixed_abs, tag = 'smem constant byte address 0x4 - core index']
  #allocation1 [shape = 'u32[144,128]{1,0:T(1,128)}', space=vmem, size = 0x12000, scoped, tag = 'internal scratch']
  %s0 = inlined_call_operand.hbm [shape: f32[2,2,8,128], index: 0, kind: input, shape index: {}]
  %s1 = inlined_call_operand.hbm [shape: f32[2,4,16,128], index: 1, kind: input, shape index: {}]
  %s2 = inlined_call_operand.hbm [shape: bf16[32,8], index: 2, kind: input, shape index: {}]
  %s3 = inlined_call_operand.hbm [shape: bf16[8,16], index: 3, kind: input, shape index: {}]
  %s4 = inlined_call_operand.hbm [shape: bf16[2,128,128], index: 4, kind: input, shape index: {}]
  %s5 = inlined_call_operand.hbm [shape: f32[2,1,128], index: 5, kind: input, shape index: {}]
  %s6 = inlined_call_operand.hbm [shape: bf16[2,128,128], index: 6, kind: input, shape index: {}]
  %s7 = inlined_call_operand.hbm [shape: f32[2,1,128], index: 7, kind: input, shape index: {}]
  %s8 = inlined_call_operand.hbm [shape: bf16[2,128,128], index: 8, kind: input, shape index: {}]
  %s9 = inlined_call_operand.hbm [shape: f32[2,1,128], index: 9, kind: input, shape index: {}]
  %s10 = inlined_call_operand.hbm [shape: bf16[2,128,256], index: 10, kind: input, shape index: {}]
  %s11 = inlined_call_operand.hbm [shape: f32[2,1,256], index: 11, kind: input, shape index: {}]
  %s12 = inlined_call_operand.hbm [shape: bf16[2,256,128], index: 12, kind: input, shape index: {}]
  %s13 = inlined_call_operand.hbm [shape: f32[2,1,128], index: 13, kind: input, shape index: {}]
  %s14 = inlined_call_operand.hbm [shape: f32[2,1,128], index: 14, kind: input, shape index: {}]
  %s15 = inlined_call_operand.hbm [shape: f32[2,1,1], index: 15, kind: input, shape index: {}]
  %s16 = inlined_call_operand.hbm [shape: f32[2,2,8,1], index: 16, kind: output, shape index: {0}]
  %s17 = inlined_call_operand.hbm [shape: f32[2,4,16,1], index: 17, kind: output, shape index: {1}]
  %18 = xla_tuple %s16, %s17
  %s19 = sld [smem:[#allocation0]]
  $region169: #{tpu_custom_call.1} parent=0
    _
  %s21 = ssub.s32 1, %s19
  %s22 = scalar_select 0, %s21, %s19
  $region1: #{tpu_custom_call.1} parent=0
    #allocation2 [shape = 'u8[16384]{0}', space=vmem, size = 0x4000, scoped, tag = 'input window, operand 0']
    #allocation3 [shape = 's32[2]{0}', space=sflag, size = 0x8, scoped, tag = 'scoped memory for tpu_custom_call.1']
    #allocation4 [shape = 's32[2]{0}', space=sflag, size = 0x8, scoped, tag = 'scoped memory for tpu_custom_call.1']
    #allocation5 [shape = 'u8[65536]{0}', space=vmem, size = 0x10000, scoped, tag = 'input window, operand 1']
    #allocation6 [shape = 's32[2]{0}', space=sflag, size = 0x8, scoped, tag = 'scoped memory for tpu_custom_call.1']
    #allocation7 [shape = 'u8[8192]{0}', space=vmem, size = 0x2000, scoped, tag = 'input window, operand 2, single buffered']
    #allocation8 [shape = 'u8[2048]{0}', space=vmem, size = 0x800, scoped, tag = 'input window, operand 3, single buffered']
    #allocation9 [shape = 's32[1]{0}', space=sflag, size = 0x4, scoped, tag = 'scoped memory for tpu_custom_call.1']
    #allocation10 [shape = 'u8[65536]{0}', space=vmem, size = 0x10000, scoped, tag = 'input window, operand 4, single buffered']
    #allocation11 [shape = 'u8[1024]{0}', space=vmem, size = 0x400, scoped, tag = 'input window, operand 5, single buffered']
    #allocation12 [shape = 's32[1]{0}', space=sflag, size = 0x4, scoped, tag = 'scoped memory for tpu_custom_call.1']
    #allocation13 [shape = 'u8[65536]{0}', space=vmem, size = 0x10000, scoped, tag = 'input window, operand 6, single buffered']
    #allocation14 [shape = 'u8[1024]{0}', space=vmem, size = 0x400, scoped, tag = 'input window, operand 7, single buffered']
    #allocation15 [shape = 's32[1]{0}', space=sflag, size = 0x4, scoped, tag = 'scoped memory for tpu_custom_call.1']
    #allocation16 [shape = 'u8[65536]{0}', space=vmem, size = 0x10000, scoped, tag = 'input window, operand 8, single buffered']
    #allocation17 [shape = 'u8[1024]{0}', space=vmem, size = 0x400, scoped, tag = 'input window, operand 9, single buffered']
    #allocation18 [shape = 's32[1]{0}', space=sflag, size = 0x4, scoped, tag = 'scoped memory for tpu_custom_call.1']
    #allocation19 [shape = 'u8[131072]{0}', space=vmem, size = 0x20000, scoped, tag = 'input window, operand 10, single buffered']
    #allocation20 [shape = 'u8[2048]{0}', space=vmem, size = 0x800, scoped, tag = 'input window, operand 11, single buffered']
    #allocation21 [shape = 's32[1]{0}', space=sflag, size = 0x4, scoped, tag = 'scoped memory for tpu_custom_call.1']
    #allocation22 [shape = 'u8[131072]{0}', space=vmem, size = 0x20000, scoped, tag = 'input window, operand 12, single buffered']
    #allocation23 [shape = 'u8[1024]{0}', space=vmem, size = 0x400, scoped, tag = 'input window, operand 13, single buffered']
    #allocation24 [shape = 's32[1]{0}', space=sflag, size = 0x4, scoped, tag = 'scoped memory for tpu_custom_call.1']
    #allocation25 [shape = 'u8[1024]{0}', space=vmem, size = 0x400, scoped, tag = 'input window, operand 14, single buffered']
    #allocation26 [shape = 'u8[1024]{0}', space=vmem, size = 0x400, scoped, tag = 'input window, operand 15, single buffered']
    #allocation27 [shape = 's32[1]{0}', space=sflag, size = 0x4, scoped, tag = 'scoped memory for tpu_custom_call.1']
    #allocation28 [shape = 'u8[16384]{0}', space=vmem, size = 0x4000, scoped, tag = 'output window, operand 0']
    #allocation29 [shape = 'u8[65536]{0}', space=vmem, size = 0x10000, scoped, tag = 'output window, operand 1']
    #allocation30 [shape = 's32[2]{0}', space=sflag, size = 0x8, scoped, tag = 'scoped memory for tpu_custom_call.1']
    %23 = vsyncpa [#allocation3], 0
    %s24 = scalar_lea.sflag [#allocation3], 1
    %25 = vsyncpa %s24, 0
    %26 = vsyncpa [#allocation6], 0
    %s27 = scalar_lea.sflag [#allocation6], 1
    %28 = vsyncpa %s27, 0
    %29 = vsyncpa [#allocation9], 0
    %30 = vsyncpa [#allocation12], 0
    %31 = vsyncpa [#allocation15], 0
    %32 = vsyncpa [#allocation18], 0
    %33 = vsyncpa [#allocation21], 0
    %34 = vsyncpa [#allocation24], 0
    %35 = vsyncpa [#allocation27], 0
    %36 = vsyncpa [#allocation4], 0
    %s37 = scalar_lea.sflag [#allocation4], 1
    %38 = vsyncpa %s37, 0
    %39 = vsyncpa [#allocation30], 0
    %s40 = scalar_lea.sflag [#allocation30], 1
    %41 = vsyncpa %s40, 0
    loop: start=0, step=1, limit=4
    $region2: #{tpu_custom_call.1} parent=1 // loop_pre_header
      _
    $region3: #{tpu_custom_call.1} parent=1 // loop_header
      %s43 = sphi 0, %s47
      %p44 = scmp.ge.s32.totalorder %s43, 4
      %s53 = sphi 0, %s55
      %s56 = sphi 0, %s53
      %s57 = sphi 0, %s56
      %s73 = sphi 0, %s57
      %s79 = sphi 0, %s81
      %s82 = sphi 0, %s79
      %s83 = sphi 0, %s82
      %s99 = sphi 0, %s83
      %s103 = sphi 0, %s103
      %s105 = sphi 0, %s103
      %s106 = sphi 0, %s105
      %s120 = sphi 0, %s106
      %s124 = sphi 0, %s124
      %s126 = sphi 0, %s124
      %s127 = sphi 0, %s126
      %s141 = sphi 0, %s127
      %s145 = sphi 0, %s145
      %s147 = sphi 0, %s145
      %s148 = sphi 0, %s147
      %s162 = sphi 0, %s148
      %s166 = sphi 0, %s166
      %s168 = sphi 0, %s166
      %s169 = sphi 0, %s168
      %s183 = sphi 0, %s169
      %s187 = sphi 0, %s187
      %s189 = sphi 0, %s187
      %s190 = sphi 0, %s189
      %s204 = sphi 0, %s190
      %s208 = sphi 0, %s208
      %s210 = sphi 0, %s208
      %s211 = sphi 0, %s210
      %s225 = sphi 0, %s211
      %s229 = sphi 0, %s229
      %s231 = sphi 0, %s229
      %s232 = sphi 0, %s231
      %s246 = sphi 0, %s232
      %s250 = sphi 0, %s250
      %s252 = sphi 0, %s250
      %s253 = sphi 0, %s252
      %s267 = sphi 0, %s253
      %s271 = sphi 0, %s271
      %s273 = sphi 0, %s271
      %s274 = sphi 0, %s273
      %s288 = sphi 0, %s274
      %s292 = sphi 0, %s292
      %s294 = sphi 0, %s292
      %s295 = sphi 0, %s294
      %s309 = sphi 0, %s295
      %s313 = sphi 0, %s313
      %s315 = sphi 0, %s313
      %s316 = sphi 0, %s315
      %s330 = sphi 0, %s316
      %s334 = sphi 0, %s334
      %s336 = sphi 0, %s334
      %s337 = sphi 0, %s336
      %s351 = sphi 0, %s337
      %s355 = sphi 0, %s355
      %s357 = sphi 0, %s355
      %s358 = sphi 0, %s357
      %s372 = sphi 0, %s358
      %s376 = sphi 0, %s376
      %s378 = sphi 0, %s376
      %s379 = sphi 0, %s378
      %s393 = sphi 0, %s379
      %s399 = sphi 0, %s401
      %s402 = sphi 0, %s399
      %s403 = sphi 0, %s402
      %s419 = sphi 0, %s403
      %s425 = sphi 0, %s427
      %s428 = sphi 0, %s425
      %s429 = sphi 0, %s428
      %s445 = sphi 0, %s429
    $region4: #{tpu_custom_call.1} parent=1 // loop_header_branch
      %46 = sbr.rel (%p44) target = $region8
    $region5: #{tpu_custom_call.1} parent=1 // loop_body
      %s48 = ssub.s32 %s43, 1
      %s49 = ssub.s32 %s43, 2
      %s50 = sadd.s32 %s43, 1
      %s51 = ssub.s32 %s43, %s50
      %p52 = scmp.eq.s32.totalorder %s51, 0
      %s54 = sadd.s32 %s53, 1
      %s55 = scalar_select %p52, %s53, %s54
      %p58 = pneg %p52
      %p59 = scmp.eq.s32.totalorder %s43, 1
      %p60 = por %p58, %p59
      %p61 = scmp.ne.s32.totalorder %s53, %s56
      %p62 = scmp.eq.s32.totalorder %s43, 0
      %p63 = por %p61, %p62
      %p64 = scmp.ne.s32.totalorder %s53, %s56
      %p65 = scmp.eq.s32.totalorder %s48, 1
      %p66 = por %p64, %p65
      %p67 = scmp.ne.s32.totalorder %s56, %s57
      %p68 = scmp.eq.s32.totalorder %s48, 0
      %p69 = por %p67, %p68
      %p70 = scmp.ne.s32.totalorder %s56, %s57
      %p71 = scmp.eq.s32.totalorder %s49, 1
      %p72 = por %p70, %p71
      %p74 = scmp.ne.s32.totalorder %s57, %s73
      %p75 = scmp.eq.s32.totalorder %s49, 0
      %p76 = por %p74, %p75
      %s77 = ssub.s32 %s43, %s50
      %p78 = scmp.eq.s32.totalorder %s77, 0
      %s80 = sadd.s32 %s79, 1
      %s81 = scalar_select %p78, %s79, %s80
      %p84 = pneg %p78
      %p85 = scmp.eq.s32.totalorder %s43, 1
      %p86 = por %p84, %p85
      %p87 = scmp.ne.s32.totalorder %s79, %s82
      %p88 = scmp.eq.s32.totalorder %s43, 0
      %p89 = por %p87, %p88
      %p90 = scmp.ne.s32.totalorder %s79, %s82
      %p91 = scmp.eq.s32.totalorder %s48, 1
      %p92 = por %p90, %p91
      %p93 = scmp.ne.s32.totalorder %s82, %s83
      %p94 = scmp.eq.s32.totalorder %s48, 0
      %p95 = por %p93, %p94
      %p96 = scmp.ne.s32.totalorder %s82, %s83
      %p97 = scmp.eq.s32.totalorder %s49, 1
      %p98 = por %p96, %p97
      %p100 = scmp.ne.s32.totalorder %s83, %s99
      %p101 = scmp.eq.s32.totalorder %s49, 0
      %p102 = por %p100, %p101
      %s104 = sadd.s32 %s103, 1
      %p107 = scmp.eq.s32.totalorder %s43, 1
      %p108 = scmp.ne.s32.totalorder %s103, %s105
      %p109 = scmp.eq.s32.totalorder %s43, 0
      %p110 = por %p108, %p109
      %p111 = scmp.ne.s32.totalorder %s103, %s105
      %p112 = scmp.eq.s32.totalorder %s48, 1
      %p113 = por %p111, %p112
      %p114 = scmp.ne.s32.totalorder %s105, %s106
      %p115 = scmp.eq.s32.totalorder %s48, 0
      %p116 = por %p114, %p115
      %p117 = scmp.ne.s32.totalorder %s105, %s106
      %p118 = scmp.eq.s32.totalorder %s49, 1
      %p119 = por %p117, %p118
      %p121 = scmp.ne.s32.totalorder %s106, %s120
      %p122 = scmp.eq.s32.totalorder %s49, 0
      %p123 = por %p121, %p122
      %s125 = sadd.s32 %s124, 1
      %p128 = scmp.eq.s32.totalorder %s43, 1
      %p129 = scmp.ne.s32.totalorder %s124, %s126
      %p130 = scmp.eq.s32.totalorder %s43, 0
      %p131 = por %p129, %p130
      %p132 = scmp.ne.s32.totalorder %s124, %s126
      %p133 = scmp.eq.s32.totalorder %s48, 1
      %p134 = por %p132, %p133
      %p135 = scmp.ne.s32.totalorder %s126, %s127
      %p136 = scmp.eq.s32.totalorder %s48, 0
      %p137 = por %p135, %p136
      %p138 = scmp.ne.s32.totalorder %s126, %s127
      %p139 = scmp.eq.s32.totalorder %s49, 1
      %p140 = por %p138, %p139
      %p142 = scmp.ne.s32.totalorder %s127, %s141
      %p143 = scmp.eq.s32.totalorder %s49, 0
      %p144 = por %p142, %p143
      %s146 = sadd.s32 %s145, 1
      %p149 = scmp.eq.s32.totalorder %s43, 1
      %p150 = scmp.ne.s32.totalorder %s145, %s147
      %p151 = scmp.eq.s32.totalorder %s43, 0
      %p152 = por %p150, %p151
      %p153 = scmp.ne.s32.totalorder %s145, %s147
      %p154 = scmp.eq.s32.totalorder %s48, 1
      %p155 = por %p153, %p154
      %p156 = scmp.ne.s32.totalorder %s147, %s148
      %p157 = scmp.eq.s32.totalorder %s48, 0
      %p158 = por %p156, %p157
      %p159 = scmp.ne.s32.totalorder %s147, %s148
      %p160 = scmp.eq.s32.totalorder %s49, 1
      %p161 = por %p159, %p160
      %p163 = scmp.ne.s32.totalorder %s148, %s162
      %p164 = scmp.eq.s32.totalorder %s49, 0
      %p165 = por %p163, %p164
      %s167 = sadd.s32 %s166, 1
      %p170 = scmp.eq.s32.totalorder %s43, 1
      %p171 = scmp.ne.s32.totalorder %s166, %s168
      %p172 = scmp.eq.s32.totalorder %s43, 0
      %p173 = por %p171, %p172
      %p174 = scmp.ne.s32.totalorder %s166, %s168
      %p175 = scmp.eq.s32.totalorder %s48, 1
      %p176 = por %p174, %p175
      %p177 = scmp.ne.s32.totalorder %s168, %s169
      %p178 = scmp.eq.s32.totalorder %s48, 0
      %p179 = por %p177, %p178
      %p180 = scmp.ne.s32.totalorder %s168, %s169
      %p181 = scmp.eq.s32.totalorder %s49, 1
      %p182 = por %p180, %p181
      %p184 = scmp.ne.s32.totalorder %s169, %s183
      %p185 = scmp.eq.s32.totalorder %s49, 0
      %p186 = por %p184, %p185
      %s188 = sadd.s32 %s187, 1
      %p191 = scmp.eq.s32.totalorder %s43, 1
      %p192 = scmp.ne.s32.totalorder %s187, %s189
      %p193 = scmp.eq.s32.totalorder %s43, 0
      %p194 = por %p192, %p193
      %p195 = scmp.ne.s32.totalorder %s187, %s189
      %p196 = scmp.eq.s32.totalorder %s48, 1
      %p197 = por %p195, %p196
      %p198 = scmp.ne.s32.totalorder %s189, %s190
      %p199 = scmp.eq.s32.totalorder %s48, 0
      %p200 = por %p198, %p199
      %p201 = scmp.ne.s32.totalorder %s189, %s190
      %p202 = scmp.eq.s32.totalorder %s49, 1
      %p203 = por %p201, %p202
      %p205 = scmp.ne.s32.totalorder %s190, %s204
      %p206 = scmp.eq.s32.totalorder %s49, 0
      %p207 = por %p205, %p206
      %s209 = sadd.s32 %s208, 1
      %p212 = scmp.eq.s32.totalorder %s43, 1
      %p213 = scmp.ne.s32.totalorder %s208, %s210
      %p214 = scmp.eq.s32.totalorder %s43, 0
      %p215 = por %p213, %p214
      %p216 = scmp.ne.s32.totalorder %s208, %s210
      %p217 = scmp.eq.s32.totalorder %s48, 1
      %p218 = por %p216, %p217
      %p219 = scmp.ne.s32.totalorder %s210, %s211
      %p220 = scmp.eq.s32.totalorder %s48, 0
      %p221 = por %p219, %p220
      %p222 = scmp.ne.s32.totalorder %s210, %s211
      %p223 = scmp.eq.s32.totalorder %s49, 1
      %p224 = por %p222, %p223
      %p226 = scmp.ne.s32.totalorder %s211, %s225
      %p227 = scmp.eq.s32.totalorder %s49, 0
      %p228 = por %p226, %p227
      %s230 = sadd.s32 %s229, 1
      %p233 = scmp.eq.s32.totalorder %s43, 1
      %p234 = scmp.ne.s32.totalorder %s229, %s231
      %p235 = scmp.eq.s32.totalorder %s43, 0
      %p236 = por %p234, %p235
      %p237 = scmp.ne.s32.totalorder %s229, %s231
      %p238 = scmp.eq.s32.totalorder %s48, 1
      %p239 = por %p237, %p238
      %p240 = scmp.ne.s32.totalorder %s231, %s232
      %p241 = scmp.eq.s32.totalorder %s48, 0
      %p242 = por %p240, %p241
      %p243 = scmp.ne.s32.totalorder %s231, %s232
      %p244 = scmp.eq.s32.totalorder %s49, 1
      %p245 = por %p243, %p244
      %p247 = scmp.ne.s32.totalorder %s232, %s246
      %p248 = scmp.eq.s32.totalorder %s49, 0
      %p249 = por %p247, %p248
      %s251 = sadd.s32 %s250, 1
      %p254 = scmp.eq.s32.totalorder %s43, 1
      %p255 = scmp.ne.s32.totalorder %s250, %s252
      %p256 = scmp.eq.s32.totalorder %s43, 0
      %p257 = por %p255, %p256
      %p258 = scmp.ne.s32.totalorder %s250, %s252
      %p259 = scmp.eq.s32.totalorder %s48, 1
      %p260 = por %p258, %p259
      %p261 = scmp.ne.s32.totalorder %s252, %s253
      %p262 = scmp.eq.s32.totalorder %s48, 0
      %p263 = por %p261, %p262
      %p264 = scmp.ne.s32.totalorder %s252, %s253
      %p265 = scmp.eq.s32.totalorder %s49, 1
      %p266 = por %p264, %p265
      %p268 = scmp.ne.s32.totalorder %s253, %s267
      %p269 = scmp.eq.s32.totalorder %s49, 0
      %p270 = por %p268, %p269
      %s272 = sadd.s32 %s271, 1
      %p275 = scmp.eq.s32.totalorder %s43, 1
      %p276 = scmp.ne.s32.totalorder %s271, %s273
      %p277 = scmp.eq.s32.totalorder %s43, 0
      %p278 = por %p276, %p277
      %p279 = scmp.ne.s32.totalorder %s271, %s273
      %p280 = scmp.eq.s32.totalorder %s48, 1
      %p281 = por %p279, %p280
      %p282 = scmp.ne.s32.totalorder %s273, %s274
      %p283 = scmp.eq.s32.totalorder %s48, 0
      %p284 = por %p282, %p283
      %p285 = scmp.ne.s32.totalorder %s273, %s274
      %p286 = scmp.eq.s32.totalorder %s49, 1
      %p287 = por %p285, %p286
      %p289 = scmp.ne.s32.totalorder %s274, %s288
      %p290 = scmp.eq.s32.totalorder %s49, 0
      %p291 = por %p289, %p290
      %s293 = sadd.s32 %s292, 1
      %p296 = scmp.eq.s32.totalorder %s43, 1
      %p297 = scmp.ne.s32.totalorder %s292, %s294
      %p298 = scmp.eq.s32.totalorder %s43, 0
      %p299 = por %p297, %p298
      %p300 = scmp.ne.s32.totalorder %s292, %s294
      %p301 = scmp.eq.s32.totalorder %s48, 1
      %p302 = por %p300, %p301
      %p303 = scmp.ne.s32.totalorder %s294, %s295
      %p304 = scmp.eq.s32.totalorder %s48, 0
      %p305 = por %p303, %p304
      %p306 = scmp.ne.s32.totalorder %s294, %s295
      %p307 = scmp.eq.s32.totalorder %s49, 1
      %p308 = por %p306, %p307
      %p310 = scmp.ne.s32.totalorder %s295, %s309
      %p311 = scmp.eq.s32.totalorder %s49, 0
      %p312 = por %p310, %p311
      %s314 = sadd.s32 %s313, 1
      %p317 = scmp.eq.s32.totalorder %s43, 1
      %p318 = scmp.ne.s32.totalorder %s313, %s315
      %p319 = scmp.eq.s32.totalorder %s43, 0
      %p320 = por %p318, %p319
      %p321 = scmp.ne.s32.totalorder %s313, %s315
      %p322 = scmp.eq.s32.totalorder %s48, 1
      %p323 = por %p321, %p322
      %p324 = scmp.ne.s32.totalorder %s315, %s316
      %p325 = scmp.eq.s32.totalorder %s48, 0
      %p326 = por %p324, %p325
      %p327 = scmp.ne.s32.totalorder %s315, %s316
      %p328 = scmp.eq.s32.totalorder %s49, 1
      %p329 = por %p327, %p328
      %p331 = scmp.ne.s32.totalorder %s316, %s330
      %p332 = scmp.eq.s32.totalorder %s49, 0
      %p333 = por %p331, %p332
      %s335 = sadd.s32 %s334, 1
      %p338 = scmp.eq.s32.totalorder %s43, 1
      %p339 = scmp.ne.s32.totalorder %s334, %s336
      %p340 = scmp.eq.s32.totalorder %s43, 0
      %p341 = por %p339, %p340
      %p342 = scmp.ne.s32.totalorder %s334, %s336
      %p343 = scmp.eq.s32.totalorder %s48, 1
      %p344 = por %p342, %p343
      %p345 = scmp.ne.s32.totalorder %s336, %s337
      %p346 = scmp.eq.s32.totalorder %s48, 0
      %p347 = por %p345, %p346
      %p348 = scmp.ne.s32.totalorder %s336, %s337
      %p349 = scmp.eq.s32.totalorder %s49, 1
      %p350 = por %p348, %p349
      %p352 = scmp.ne.s32.totalorder %s337, %s351
      %p353 = scmp.eq.s32.totalorder %s49, 0
      %p354 = por %p352, %p353
      %s356 = sadd.s32 %s355, 1
      %p359 = scmp.eq.s32.totalorder %s43, 1
      %p360 = scmp.ne.s32.totalorder %s355, %s357
      %p361 = scmp.eq.s32.totalorder %s43, 0
      %p362 = por %p360, %p361
      %p363 = scmp.ne.s32.totalorder %s355, %s357
      %p364 = scmp.eq.s32.totalorder %s48, 1
      %p365 = por %p363, %p364
      %p366 = scmp.ne.s32.totalorder %s357, %s358
      %p367 = scmp.eq.s32.totalorder %s48, 0
      %p368 = por %p366, %p367
      %p369 = scmp.ne.s32.totalorder %s357, %s358
      %p370 = scmp.eq.s32.totalorder %s49, 1
      %p371 = por %p369, %p370
      %p373 = scmp.ne.s32.totalorder %s358, %s372
      %p374 = scmp.eq.s32.totalorder %s49, 0
      %p375 = por %p373, %p374
      %s377 = sadd.s32 %s376, 1
      %p380 = scmp.eq.s32.totalorder %s43, 1
      %p381 = scmp.ne.s32.totalorder %s376, %s378
      %p382 = scmp.eq.s32.totalorder %s43, 0
      %p383 = por %p381, %p382
      %p384 = scmp.ne.s32.totalorder %s376, %s378
      %p385 = scmp.eq.s32.totalorder %s48, 1
      %p386 = por %p384, %p385
      %p387 = scmp.ne.s32.totalorder %s378, %s379
      %p388 = scmp.eq.s32.totalorder %s48, 0
      %p389 = por %p387, %p388
      %p390 = scmp.ne.s32.totalorder %s378, %s379
      %p391 = scmp.eq.s32.totalorder %s49, 1
      %p392 = por %p390, %p391
      %p394 = scmp.ne.s32.totalorder %s379, %s393
      %p395 = scmp.eq.s32.totalorder %s49, 0
      %p396 = por %p394, %p395
      %s397 = ssub.s32 %s43, %s50
      %p398 = scmp.eq.s32.totalorder %s397, 0
      %s400 = sadd.s32 %s399, 1
      %s401 = scalar_select %p398, %s399, %s400
      %p404 = pneg %p398
      %p405 = scmp.eq.s32.totalorder %s43, 1
      %p406 = por %p404, %p405
      %p407 = scmp.ne.s32.totalorder %s399, %s402
      %p408 = scmp.eq.s32.totalorder %s43, 0
      %p409 = por %p407, %p408
      %p410 = scmp.ne.s32.totalorder %s399, %s402
      %p411 = scmp.eq.s32.totalorder %s48, 1
      %p412 = por %p410, %p411
      %p413 = scmp.ne.s32.totalorder %s402, %s403
      %p414 = scmp.eq.s32.totalorder %s48, 0
      %p415 = por %p413, %p414
      %p416 = scmp.ne.s32.totalorder %s402, %s403
      %p417 = scmp.eq.s32.totalorder %s49, 1
      %p418 = por %p416, %p417
      %p420 = scmp.ne.s32.totalorder %s403, %s419
      %p421 = scmp.eq.s32.totalorder %s49, 0
      %p422 = por %p420, %p421
      %s423 = ssub.s32 %s43, %s50
      %p424 = scmp.eq.s32.totalorder %s423, 0
      %s426 = sadd.s32 %s425, 1
      %s427 = scalar_select %p424, %s425, %s426
      %p430 = pneg %p424
      %p431 = scmp.eq.s32.totalorder %s43, 1
      %p432 = por %p430, %p431
      %p433 = scmp.ne.s32.totalorder %s425, %s428
      %p434 = scmp.eq.s32.totalorder %s43, 0
      %p435 = por %p433, %p434
      %p436 = scmp.ne.s32.totalorder %s425, %s428
      %p437 = scmp.eq.s32.totalorder %s48, 1
      %p438 = por %p436, %p437
      %p439 = scmp.ne.s32.totalorder %s428, %s429
      %p440 = scmp.eq.s32.totalorder %s48, 0
      %p441 = por %p439, %p440
      %p442 = scmp.ne.s32.totalorder %s428, %s429
      %p443 = scmp.eq.s32.totalorder %s49, 1
      %p444 = por %p442, %p443
      %p446 = scmp.ne.s32.totalorder %s429, %s445
      %p447 = scmp.eq.s32.totalorder %s49, 0
      %p448 = por %p446, %p447
      %p449 = scmp.le.s32.totalorder 1, %s43
      %p450 = scmp.lt.s32.totalorder %s43, 3
      %p451 = pnand %p449, %p450
      %p452 = pneg %p451
      // Predicated region
      $region9: #{tpu_custom_call.1} parent=5 // pred_check
        _
      $region10: #{tpu_custom_call.1} parent=5 // pred_check_branch
        %454 = sbr.rel (%p451) target = $region12
      $region11: #{tpu_custom_call.1} parent=5 // pred_region
        %s455 = ssub.s32 %s43, 1
        // Predicated region
        $region13: #{tpu_custom_call.1} parent=11 // pred_check
          %p456 = pneg %p116
        $region14: #{tpu_custom_call.1} parent=11 // pred_check_branch
          %458 = sbr.rel (%p456) target = $region16
        $region15: #{tpu_custom_call.1} parent=11 // pred_region
          %s460 = ssub.s32 256, 256
          %461 = vsyncadd [#allocation6], %s460
          %s462 = sshll.u32 [#allocation7], 4
          %s463 = int_to_ptr.vmem [resolvable:$true] %s462
          %468 = dma.hbm_to_vmem [thread:$0]  %s2, 256, %s463, [#allocation6], 64, 64, 4
        $region16: #{tpu_custom_call.1} parent=11 // pred_fallthru
          _
        // Predicated region
        $region17: #{tpu_custom_call.1} parent=11 // pred_check
          %p469 = pneg %p137
        $region18: #{tpu_custom_call.1} parent=11 // pred_check_branch
          %471 = sbr.rel (%p469) target = $region20
        $region19: #{tpu_custom_call.1} parent=11 // pred_region
          %s473 = ssub.s32 64, 64
          %474 = vsyncadd [#allocation9], %s473
          %s476 = sshll.u32 [#allocation8], 4
          %s477 = int_to_ptr.vmem [resolvable:$true] %s476
          %479 = dma.hbm_to_vmem [thread:$0]  %s3, 64, %s477, [#allocation9]
        $region20: #{tpu_custom_call.1} parent=11 // pred_fallthru
          _
        // Predicated region
        $region21: #{tpu_custom_call.1} parent=11 // pred_check
          %p480 = pneg %p158
        $region22: #{tpu_custom_call.1} parent=11 // pred_check_branch
          %482 = sbr.rel (%p480) target = $region24
        $region23: #{tpu_custom_call.1} parent=11 // pred_region
          %s484 = ssub.s32 2048, 2048
          %485 = vsyncadd [#allocation9], %s484
          %s486 = sshll.u32 [#allocation10], 4
          %s487 = int_to_ptr.vmem [resolvable:$true] %s486
          %492 = dma.hbm_to_vmem [thread:$0]  %s4, 2048, %s487, [#allocation9], 64, 64, 4
        $region24: #{tpu_custom_call.1} parent=11 // pred_fallthru
          _
        // Predicated region
        $region25: #{tpu_custom_call.1} parent=11 // pred_check
          %p493 = pneg %p179
        $region26: #{tpu_custom_call.1} parent=11 // pred_check_branch
          %495 = sbr.rel (%p493) target = $region28
        $region27: #{tpu_custom_call.1} parent=11 // pred_region
          %s497 = ssub.s32 32, 32
          %498 = vsyncadd [#allocation12], %s497
          %s499 = sshll.u32 [#allocation11], 4
          %s500 = int_to_ptr.vmem [resolvable:$true] %s499
          %505 = dma.hbm_to_vmem [thread:$0]  %s5, 32, %s500, [#allocation12], 16, 16, 1
        $region28: #{tpu_custom_call.1} parent=11 // pred_fallthru
          _
        // Predicated region
        $region29: #{tpu_custom_call.1} parent=11 // pred_check
          %p506 = pneg %p200
        $region30: #{tpu_custom_call.1} parent=11 // pred_check_branch
          %508 = sbr.rel (%p506) target = $region32
        $region31: #{tpu_custom_call.1} parent=11 // pred_region
          %s510 = ssub.s32 2048, 2048
          %511 = vsyncadd [#allocation12], %s510
          %s512 = sshll.u32 [#allocation13], 4
          %s513 = int_to_ptr.vmem [resolvable:$true] %s512
          %518 = dma.hbm_to_vmem [thread:$0]  %s6, 2048, %s513, [#allocation12], 64, 64, 4
        $region32: #{tpu_custom_call.1} parent=11 // pred_fallthru
          _
        // Predicated region
        $region33: #{tpu_custom_call.1} parent=11 // pred_check
          %p519 = pneg %p221
        $region34: #{tpu_custom_call.1} parent=11 // pred_check_branch
          %521 = sbr.rel (%p519) target = $region36
        $region35: #{tpu_custom_call.1} parent=11 // pred_region
          %s523 = ssub.s32 32, 32
          %524 = vsyncadd [#allocation15], %s523
          %s525 = sshll.u32 [#allocation14], 4
          %s526 = int_to_ptr.vmem [resolvable:$true] %s525
          %531 = dma.hbm_to_vmem [thread:$0]  %s7, 32, %s526, [#allocation15], 16, 16, 1
        $region36: #{tpu_custom_call.1} parent=11 // pred_fallthru
          _
        // Predicated region
        $region37: #{tpu_custom_call.1} parent=11 // pred_check
          %p532 = pneg %p242
        $region38: #{tpu_custom_call.1} parent=11 // pred_check_branch
          %534 = sbr.rel (%p532) target = $region40
        $region39: #{tpu_custom_call.1} parent=11 // pred_region
          %s536 = ssub.s32 2048, 2048
          %537 = vsyncadd [#allocation15], %s536
          %s538 = sshll.u32 [#allocation16], 4
          %s539 = int_to_ptr.vmem [resolvable:$true] %s538
          %544 = dma.hbm_to_vmem [thread:$0]  %s8, 2048, %s539, [#allocation15], 64, 64, 4
        $region40: #{tpu_custom_call.1} parent=11 // pred_fallthru
          _
        // Predicated region
        $region41: #{tpu_custom_call.1} parent=11 // pred_check
          %p545 = pneg %p263
        $region42: #{tpu_custom_call.1} parent=11 // pred_check_branch
          %547 = sbr.rel (%p545) target = $region44
        $region43: #{tpu_custom_call.1} parent=11 // pred_region
          %s549 = ssub.s32 32, 32
          %550 = vsyncadd [#allocation18], %s549
          %s551 = sshll.u32 [#allocation17], 4
          %s552 = int_to_ptr.vmem [resolvable:$true] %s551
          %557 = dma.hbm_to_vmem [thread:$0]  %s9, 32, %s552, [#allocation18], 16, 16, 1
        $region44: #{tpu_custom_call.1} parent=11 // pred_fallthru
          _
        // Predicated region
        $region45: #{tpu_custom_call.1} parent=11 // pred_check
          %p558 = pneg %p284
        $region46: #{tpu_custom_call.1} parent=11 // pred_check_branch
          %560 = sbr.rel (%p558) target = $region48
        $region47: #{tpu_custom_call.1} parent=11 // pred_region
          %s562 = ssub.s32 4096, 4096
          %563 = vsyncadd [#allocation18], %s562
          %s564 = sshll.u32 [#allocation19], 4
          %s565 = int_to_ptr.vmem [resolvable:$true] %s564
          %570 = dma.hbm_to_vmem [thread:$0]  %s10, 4096, %s565, [#allocation18], 128, 128, 8
        $region48: #{tpu_custom_call.1} parent=11 // pred_fallthru
          _
        // Predicated region
        $region49: #{tpu_custom_call.1} parent=11 // pred_check
          %p571 = pneg %p305
        $region50: #{tpu_custom_call.1} parent=11 // pred_check_branch
          %573 = sbr.rel (%p571) target = $region52
        $region51: #{tpu_custom_call.1} parent=11 // pred_region
          %s575 = ssub.s32 64, 64
          %576 = vsyncadd [#allocation21], %s575
          %s577 = sshll.u32 [#allocation20], 4
          %s578 = int_to_ptr.vmem [resolvable:$true] %s577
          %583 = dma.hbm_to_vmem [thread:$0]  %s11, 64, %s578, [#allocation21], 32, 32, 2
        $region52: #{tpu_custom_call.1} parent=11 // pred_fallthru
          _
        // Predicated region
        $region53: #{tpu_custom_call.1} parent=11 // pred_check
          %p584 = pneg %p326
        $region54: #{tpu_custom_call.1} parent=11 // pred_check_branch
          %586 = sbr.rel (%p584) target = $region56
        $region55: #{tpu_custom_call.1} parent=11 // pred_region
          %s588 = ssub.s32 4096, 4096
          %589 = vsyncadd [#allocation21], %s588
          %s590 = sshll.u32 [#allocation22], 4
          %s591 = int_to_ptr.vmem [resolvable:$true] %s590
          %596 = dma.hbm_to_vmem [thread:$0]  %s12, 4096, %s591, [#allocation21], 64, 64, 4
        $region56: #{tpu_custom_call.1} parent=11 // pred_fallthru
          _
        // Predicated region
        $region57: #{tpu_custom_call.1} parent=11 // pred_check
          %p597 = pneg %p347
        $region58: #{tpu_custom_call.1} parent=11 // pred_check_branch
          %599 = sbr.rel (%p597) target = $region60
        $region59: #{tpu_custom_call.1} parent=11 // pred_region
          %s601 = ssub.s32 32, 32
          %602 = vsyncadd [#allocation24], %s601
          %s603 = sshll.u32 [#allocation23], 4
          %s604 = int_to_ptr.vmem [resolvable:$true] %s603
          %609 = dma.hbm_to_vmem [thread:$0]  %s13, 32, %s604, [#allocation24], 16, 16, 1
        $region60: #{tpu_custom_call.1} parent=11 // pred_fallthru
          _
        // Predicated region
        $region61: #{tpu_custom_call.1} parent=11 // pred_check
          %p610 = pneg %p368
        $region62: #{tpu_custom_call.1} parent=11 // pred_check_branch
          %612 = sbr.rel (%p610) target = $region64
        $region63: #{tpu_custom_call.1} parent=11 // pred_region
          %s614 = ssub.s32 32, 32
          %615 = vsyncadd [#allocation24], %s614
          %s616 = sshll.u32 [#allocation25], 4
          %s617 = int_to_ptr.vmem [resolvable:$true] %s616
          %622 = dma.hbm_to_vmem [thread:$0]  %s14, 32, %s617, [#allocation24], 16, 16, 1
        $region64: #{tpu_custom_call.1} parent=11 // pred_fallthru
          _
        // Predicated region
        $region65: #{tpu_custom_call.1} parent=11 // pred_check
          %p623 = pneg %p389
        $region66: #{tpu_custom_call.1} parent=11 // pred_check_branch
          %625 = sbr.rel (%p623) target = $region68
        $region67: #{tpu_custom_call.1} parent=11 // pred_region
          %s627 = ssub.s32 32, 32
          %628 = vsyncadd [#allocation27], %s627
          %s629 = sshll.u32 [#allocation26], 4
          %s630 = int_to_ptr.vmem [resolvable:$true] %s629
          %635 = dma.hbm_to_vmem [thread:$0]  %s15, 32, %s630, [#allocation27], 16, 16, 1
        $region68: #{tpu_custom_call.1} parent=11 // pred_fallthru
          _
      $region12: #{tpu_custom_call.1} parent=5 // pred_fallthru
        _
      %p636 = scmp.lt.s32.totalorder %s43, 2
      // Predicated region
      $region69: #{tpu_custom_call.1} parent=5 // pred_check
        %p637 = pneg %p636
      $region70: #{tpu_custom_call.1} parent=5 // pred_check_branch
        %639 = sbr.rel (%p637) target = $region72
      $region71: #{tpu_custom_call.1} parent=5 // pred_region
        // Predicated region
        $region73: #{tpu_custom_call.1} parent=71 // pred_check
          %p640 = pneg %p63
        $region74: #{tpu_custom_call.1} parent=71 // pred_check_branch
          %642 = sbr.rel (%p640) target = $region76
        $region75: #{tpu_custom_call.1} parent=71 // pred_region
          %s643 = sand.u32 %s53, 1
          %s644 = scalar_lea.sflag [#allocation3], %s643
          %s645 = sand.u32 %s53, 1
          %s646 = smul.addr %s645, 16
          %s647 = scalar_lea.vmem [#allocation2], %s646
          %s649 = ssub.s32 256, 256
          %650 = vsyncadd %s644, %s649
          %s651 = smul.addr %s43, 2
          %s652 = smul.addr %s651, 128
          %s653 = scalar_lea.hbm %s0, %s652
          %s654 = sshll.u32 %s647, 4
          %s655 = int_to_ptr.vmem [resolvable:$true] %s654
          %660 = dma.hbm_to_vmem [thread:$0]  %s653, 256, %s655, %s644, 128, 128, 8
        $region76: #{tpu_custom_call.1} parent=71 // pred_fallthru
          _
        // Predicated region
        $region77: #{tpu_custom_call.1} parent=71 // pred_check
          %p661 = pneg %p89
        $region78: #{tpu_custom_call.1} parent=71 // pred_check_branch
          %663 = sbr.rel (%p661) target = $region80
        $region79: #{tpu_custom_call.1} parent=71 // pred_region
          %s664 = sand.u32 %s43, 1
          %s665 = scalar_lea.sflag [#allocation6], %s664
          %s666 = sand.u32 %s79, 1
          %s667 = smul.addr %s666, 64
          %s668 = scalar_lea.vmem [#allocation5], %s667
          %s670 = ssub.s32 1024, 1024
          %671 = vsyncadd %s665, %s670
          %s672 = smul.addr %s43, 8
          %s673 = smul.addr %s672, 128
          %s674 = scalar_lea.hbm %s1, %s673
          %s675 = sshll.u32 %s668, 4
          %s676 = int_to_ptr.vmem [resolvable:$true] %s675
          %681 = dma.hbm_to_vmem [thread:$0]  %s674, 1024, %s676, %s665, 128, 128, 8
        $region80: #{tpu_custom_call.1} parent=71 // pred_fallthru
          _
      $region72: #{tpu_custom_call.1} parent=5 // pred_fallthru
        _
      %p682 = scmp.le.s32.totalorder 1, %s43
      %p683 = scmp.lt.s32.totalorder %s43, 3
      %p684 = pnand %p682, %p683
      %p685 = pneg %p684
      // Predicated region
      $region81: #{tpu_custom_call.1} parent=5 // pred_check
        _
      $region82: #{tpu_custom_call.1} parent=5 // pred_check_branch
        %687 = sbr.rel (%p684) target = $region84
      $region83: #{tpu_custom_call.1} parent=5 // pred_region
        %s688 = ssub.s32 %s43, 1
        %s689 = sand.u32 %s56, 1
        %s690 = scalar_lea.sflag [#allocation3], %s689
        %s691 = sand.u32 %s56, 1
        %s692 = smul.addr %s691, 16
        %s693 = scalar_lea.vmem [#allocation2], %s692
        // Predicated region
        $region85: #{tpu_custom_call.1} parent=83 // pred_check
          %p694 = pneg %p69
        $region86: #{tpu_custom_call.1} parent=83 // pred_check_branch
          %696 = sbr.rel (%p694) target = $region88
        $region87: #{tpu_custom_call.1} parent=83 // pred_region
          %697 = dma.done %s690, 256
        $region88: #{tpu_custom_call.1} parent=83 // pred_fallthru
          _
        %s698 = sand.u32 %s48, 1
        %s699 = scalar_lea.sflag [#allocation6], %s698
        %s700 = sand.u32 %s82, 1
        %s701 = smul.addr %s700, 64
        %s702 = scalar_lea.vmem [#allocation5], %s701
        // Predicated region
        $region89: #{tpu_custom_call.1} parent=83 // pred_check
          %p703 = pneg %p95
        $region90: #{tpu_custom_call.1} parent=83 // pred_check_branch
          %705 = sbr.rel (%p703) target = $region92
        $region91: #{tpu_custom_call.1} parent=83 // pred_region
          %706 = dma.done %s699, 1024
        $region92: #{tpu_custom_call.1} parent=83 // pred_fallthru
          _
        // Predicated region
        $region93: #{tpu_custom_call.1} parent=83 // pred_check
          %p707 = pneg %p116
        $region94: #{tpu_custom_call.1} parent=83 // pred_check_branch
          %709 = sbr.rel (%p707) target = $region96
        $region95: #{tpu_custom_call.1} parent=83 // pred_region
          %710 = dma.done [#allocation6], 256
        $region96: #{tpu_custom_call.1} parent=83 // pred_fallthru
          _
        // Predicated region
        $region97: #{tpu_custom_call.1} parent=83 // pred_check
          %p711 = pneg %p137
        $region98: #{tpu_custom_call.1} parent=83 // pred_check_branch
          %713 = sbr.rel (%p711) target = $region100
        $region99: #{tpu_custom_call.1} parent=83 // pred_region
          %714 = dma.done [#allocation9], 64
        $region100: #{tpu_custom_call.1} parent=83 // pred_fallthru
          _
        // Predicated region
        $region101: #{tpu_custom_call.1} parent=83 // pred_check
          %p715 = pneg %p158
        $region102: #{tpu_custom_call.1} parent=83 // pred_check_branch
          %717 = sbr.rel (%p715) target = $region104
        $region103: #{tpu_custom_call.1} parent=83 // pred_region
          %718 = dma.done [#allocation9], 2048
        $region104: #{tpu_custom_call.1} parent=83 // pred_fallthru
          _
        // Predicated region
        $region105: #{tpu_custom_call.1} parent=83 // pred_check
          %p719 = pneg %p179
        $region106: #{tpu_custom_call.1} parent=83 // pred_check_branch
          %721 = sbr.rel (%p719) target = $region108
        $region107: #{tpu_custom_call.1} parent=83 // pred_region
          %722 = dma.done [#allocation12], 32
        $region108: #{tpu_custom_call.1} parent=83 // pred_fallthru
          _
        // Predicated region
        $region109: #{tpu_custom_call.1} parent=83 // pred_check
          %p723 = pneg %p200
        $region110: #{tpu_custom_call.1} parent=83 // pred_check_branch
          %725 = sbr.rel (%p723) target = $region112
        $region111: #{tpu_custom_call.1} parent=83 // pred_region
          %726 = dma.done [#allocation12], 2048
        $region112: #{tpu_custom_call.1} parent=83 // pred_fallthru
          _
        // Predicated region
        $region113: #{tpu_custom_call.1} parent=83 // pred_check
          %p727 = pneg %p221
        $region114: #{tpu_custom_call.1} parent=83 // pred_check_branch
          %729 = sbr.rel (%p727) target = $region116
        $region115: #{tpu_custom_call.1} parent=83 // pred_region
          %730 = dma.done [#allocation15], 32
        $region116: #{tpu_custom_call.1} parent=83 // pred_fallthru
          _
        // Predicated region
        $region117: #{tpu_custom_call.1} parent=83 // pred_check
          %p731 = pneg %p242
        $region118: #{tpu_custom_call.1} parent=83 // pred_check_branch
          %733 = sbr.rel (%p731) target = $region120
        $region119: #{tpu_custom_call.1} parent=83 // pred_region
          %734 = dma.done [#allocation15], 2048
        $region120: #{tpu_custom_call.1} parent=83 // pred_fallthru
          _
        // Predicated region
        $region121: #{tpu_custom_call.1} parent=83 // pred_check
          %p735 = pneg %p263
        $region122: #{tpu_custom_call.1} parent=83 // pred_check_branch
          %737 = sbr.rel (%p735) target = $region124
        $region123: #{tpu_custom_call.1} parent=83 // pred_region
          %738 = dma.done [#allocation18], 32
        $region124: #{tpu_custom_call.1} parent=83 // pred_fallthru
          _
        // Predicated region
        $region125: #{tpu_custom_call.1} parent=83 // pred_check
          %p739 = pneg %p284
        $region126: #{tpu_custom_call.1} parent=83 // pred_check_branch
          %741 = sbr.rel (%p739) target = $region128
        $region127: #{tpu_custom_call.1} parent=83 // pred_region
          %742 = dma.done [#allocation18], 4096
        $region128: #{tpu_custom_call.1} parent=83 // pred_fallthru
          _
        // Predicated region
        $region129: #{tpu_custom_call.1} parent=83 // pred_check
          %p743 = pneg %p305
        $region130: #{tpu_custom_call.1} parent=83 // pred_check_branch
          %745 = sbr.rel (%p743) target = $region132
        $region131: #{tpu_custom_call.1} parent=83 // pred_region
          %746 = dma.done [#allocation21], 64
        $region132: #{tpu_custom_call.1} parent=83 // pred_fallthru
          _
        // Predicated region
        $region133: #{tpu_custom_call.1} parent=83 // pred_check
          %p747 = pneg %p326
        $region134: #{tpu_custom_call.1} parent=83 // pred_check_branch
          %749 = sbr.rel (%p747) target = $region136
        $region135: #{tpu_custom_call.1} parent=83 // pred_region
          %750 = dma.done [#allocation21], 4096
        $region136: #{tpu_custom_call.1} parent=83 // pred_fallthru
          _
        // Predicated region
        $region137: #{tpu_custom_call.1} parent=83 // pred_check
          %p751 = pneg %p347
        $region138: #{tpu_custom_call.1} parent=83 // pred_check_branch
          %753 = sbr.rel (%p751) target = $region140
        $region139: #{tpu_custom_call.1} parent=83 // pred_region
          %754 = dma.done [#allocation24], 32
        $region140: #{tpu_custom_call.1} parent=83 // pred_fallthru
          _
        // Predicated region
        $region141: #{tpu_custom_call.1} parent=83 // pred_check
          %p755 = pneg %p368
        $region142: #{tpu_custom_call.1} parent=83 // pred_check_branch
          %757 = sbr.rel (%p755) target = $region144
        $region143: #{tpu_custom_call.1} parent=83 // pred_region
          %758 = dma.done [#allocation24], 32
        $region144: #{tpu_custom_call.1} parent=83 // pred_fallthru
          _
        // Predicated region
        $region145: #{tpu_custom_call.1} parent=83 // pred_check
          %p759 = pneg %p389
        $region146: #{tpu_custom_call.1} parent=83 // pred_check_branch
          %761 = sbr.rel (%p759) target = $region148
        $region147: #{tpu_custom_call.1} parent=83 // pred_region
          %762 = dma.done [#allocation27], 32
        $region148: #{tpu_custom_call.1} parent=83 // pred_fallthru
          _
        %s763 = sand.u32 %s56, 1
        %s764 = scalar_lea.sflag [#allocation3], %s763
        %s765 = sand.u32 %s56, 1
        %s766 = smul.addr %s765, 16
        %s767 = scalar_lea.vmem [#allocation2], %s766
        %p768 = pneg %p69
        %p769 = pneg %p66
        %s770 = sand.u32 %s48, 1
        %s771 = scalar_lea.sflag [#allocation6], %s770
        %s772 = sand.u32 %s82, 1
        %s773 = smul.addr %s772, 64
        %s774 = scalar_lea.vmem [#allocation5], %s773
        %p775 = pneg %p95
        %p776 = pneg %p92
        %p777 = pneg %p116
        %p778 = pneg %p113
        %p779 = pneg %p137
        %p780 = pneg %p134
        %p781 = pneg %p158
        %p782 = pneg %p155
        %p783 = pneg %p179
        %p784 = pneg %p176
        %p785 = pneg %p200
        %p786 = pneg %p197
        %p787 = pneg %p221
        %p788 = pneg %p218
        %p789 = pneg %p242
        %p790 = pneg %p239
        %p791 = pneg %p263
        %p792 = pneg %p260
        %p793 = pneg %p284
        %p794 = pneg %p281
        %p795 = pneg %p305
        %p796 = pneg %p302
        %p797 = pneg %p326
        %p798 = pneg %p323
        %p799 = pneg %p347
        %p800 = pneg %p344
        %p801 = pneg %p368
        %p802 = pneg %p365
        %p803 = pneg %p389
        %p804 = pneg %p386
        %p805 = pneg %p415
        %p806 = pneg %p412
        %s807 = sand.u32 %s402, 1
        %s808 = scalar_lea.sflag [#allocation4], %s807
        %s809 = sand.u32 %s402, 1
        %s810 = smul.addr %s809, 16
        %s811 = scalar_lea.vmem [#allocation28], %s810
        %p812 = pneg %p441
        %p813 = pneg %p438
        %s814 = sand.u32 %s428, 1
        %s815 = scalar_lea.sflag [#allocation30], %s814
        %s816 = sand.u32 %s428, 1
        %s817 = smul.addr %s816, 64
        %s818 = scalar_lea.vmem [#allocation29], %s817
        %v820 = vld [vmem:[#allocation7] sm:$0xf]
        %v821 = vld [vmem:[#allocation7 + $0x4] sm:$0xf]
        %v822 = vld [vmem:[#allocation7 + $0x8] sm:$0xf]
        %v823 = vld [vmem:[#allocation7 + $0xc] sm:$0xf]
        %v824 = vld [vmem:[#allocation8] sm:$0xf]
        %v825 = vld [vmem:[%s693] sm:$0xff]
        %v826 = vld [vmem:[%s693 + $0x8] sm:$0xff]
        %v827 = vld [vmem:[%s702] sm:$0xff]
        %v828 = vld [vmem:[%s702 + $0x8] sm:$0xff]
        %v829 = vld [vmem:[%s702 + $0x10] sm:$0xff]
        %v830 = vld [vmem:[%s702 + $0x18] sm:$0xff]
        %v831 = vld [vmem:[%s702 + $0x20] sm:$0xff]
        %v832 = vld [vmem:[%s702 + $0x28] sm:$0xff]
        %v833 = vld [vmem:[%s702 + $0x30] sm:$0xff]
        %v834 = vld [vmem:[%s702 + $0x38] sm:$0xff]
        %v835 = vld [vmem:[#allocation10] sm:$0xf]
        %v836 = vld [vmem:[#allocation10 + $0x4] sm:$0xf]
        %v837 = vld [vmem:[#allocation10 + $0x8] sm:$0xf]
        %v838 = vld [vmem:[#allocation10 + $0xc] sm:$0xf]
        %v839 = vld [vmem:[#allocation10 + $0x10] sm:$0xf]
        %v840 = vld [vmem:[#allocation10 + $0x14] sm:$0xf]
        %v841 = vld [vmem:[#allocation10 + $0x18] sm:$0xf]
        %v842 = vld [vmem:[#allocation10 + $0x1c] sm:$0xf]
        %v843 = vld [vmem:[#allocation10 + $0x20] sm:$0xf]
        %v844 = vld [vmem:[#allocation10 + $0x24] sm:$0xf]
        %v845 = vld [vmem:[#allocation10 + $0x28] sm:$0xf]
        %v846 = vld [vmem:[#allocation10 + $0x2c] sm:$0xf]
        %v847 = vld [vmem:[#allocation10 + $0x30] sm:$0xf]
        %v848 = vld [vmem:[#allocation10 + $0x34] sm:$0xf]
        %v849 = vld [vmem:[#allocation10 + $0x38] sm:$0xf]
        %v850 = vld [vmem:[#allocation10 + $0x3c] sm:$0xf]
        %v851 = vld [vmem:[#allocation11] sm:$0x1]
        %v852 = vld [vmem:[#allocation13] sm:$0xf]
        %v853 = vld [vmem:[#allocation13 + $0x4] sm:$0xf]
        %v854 = vld [vmem:[#allocation13 + $0x8] sm:$0xf]
        %v855 = vld [vmem:[#allocation13 + $0xc] sm:$0xf]
        %v856 = vld [vmem:[#allocation13 + $0x10] sm:$0xf]
        %v857 = vld [vmem:[#allocation13 + $0x14] sm:$0xf]
        %v858 = vld [vmem:[#allocation13 + $0x18] sm:$0xf]
        %v859 = vld [vmem:[#allocation13 + $0x1c] sm:$0xf]
        %v860 = vld [vmem:[#allocation13 + $0x20] sm:$0xf]
        %v861 = vld [vmem:[#allocation13 + $0x24] sm:$0xf]
        %v862 = vld [vmem:[#allocation13 + $0x28] sm:$0xf]
        %v863 = vld [vmem:[#allocation13 + $0x2c] sm:$0xf]
        %v864 = vld [vmem:[#allocation13 + $0x30] sm:$0xf]
        %v865 = vld [vmem:[#allocation13 + $0x34] sm:$0xf]
        %v866 = vld [vmem:[#allocation13 + $0x38] sm:$0xf]
        %v867 = vld [vmem:[#allocation13 + $0x3c] sm:$0xf]
        %v868 = vld [vmem:[#allocation14] sm:$0x1]
        %v869 = vld [vmem:[#allocation16] sm:$0xf]
        %v870 = vld [vmem:[#allocation16 + $0x4] sm:$0xf]
        %v871 = vld [vmem:[#allocation16 + $0x8] sm:$0xf]
        %v872 = vld [vmem:[#allocation16 + $0xc] sm:$0xf]
        %v873 = vld [vmem:[#allocation16 + $0x10] sm:$0xf]
        %v874 = vld [vmem:[#allocation16 + $0x14] sm:$0xf]
        %v875 = vld [vmem:[#allocation16 + $0x18] sm:$0xf]
        %v876 = vld [vmem:[#allocation16 + $0x1c] sm:$0xf]
        %v877 = vld [vmem:[#allocation16 + $0x20] sm:$0xf]
        %v878 = vld [vmem:[#allocation16 + $0x24] sm:$0xf]
        %v879 = vld [vmem:[#allocation16 + $0x28] sm:$0xf]
        %v880 = vld [vmem:[#allocation16 + $0x2c] sm:$0xf]
        %v881 = vld [vmem:[#allocation16 + $0x30] sm:$0xf]
        %v882 = vld [vmem:[#allocation16 + $0x34] sm:$0xf]
        %v883 = vld [vmem:[#allocation16 + $0x38] sm:$0xf]
        %v884 = vld [vmem:[#allocation16 + $0x3c] sm:$0xf]
        %v885 = vld [vmem:[#allocation17] sm:$0x1]
        %v886 = vadd.f32 %v827, %v829
        %v887 = vadd.f32 %v828, %v830
        %v888 = vadd.f32 %v831, %v833
        %v889 = vadd.f32 %v832, %v834
        %v890 = vpack.c.bf16 %v887, %v886
        %v891 = vpack.c.bf16 %v889, %v888
        %vm892 = vcmask 130048
        %v894 = vsel %vm892, %v824, 0
        %896 = vmatprep.subr.bf16.mxu0 %v891
        %897 = vmatpush1.bf16.msra.mxu0 %v890
        %898 = vmatprep.subr.bf16.mxu0 0
        %899 = vmatpush1.bf16.msra.mxu0 0
        %900 = vmatprep.subr.bf16.mxu0 0
        %901 = vmatpush1.bf16.msra.mxu0 0
        %902 = vmatprep.subr.bf16.mxu0 0
        %903 = vmatpush1.bf16.msra.mxu0 0
        %904 = vmatprep.subr.bf16.mxu0 0
        %905 = vmatpush1.bf16.msra.mxu0 0
        %906 = vmatprep.subr.bf16.mxu0 0
        %907 = vmatpush1.bf16.msra.mxu0 0
        %908 = vmatprep.subr.bf16.mxu0 0
        %909 = vmatpush1.bf16.msra.mxu0 0
        %910 = vmatprep.subr.bf16.mxu0 0
        %911 = vmatpush1.bf16.msra.mxu0 0
        %912 = vmatprep.subr.bf16.mxu0 0
        %913 = vmatpush1.bf16.msra.mxu0 0
        %914 = vmatprep.subr.bf16.mxu0 0
        %915 = vmatpush1.bf16.msra.mxu0 0
        %916 = vmatprep.subr.bf16.mxu0 0
        %917 = vmatpush1.bf16.msra.mxu0 0
        %918 = vmatprep.subr.bf16.mxu0 0
        %919 = vmatpush1.bf16.msra.mxu0 0
        %920 = vmatprep.subr.bf16.mxu0 0
        %921 = vmatpush1.bf16.msra.mxu0 0
        %922 = vmatprep.subr.bf16.mxu0 0
        %923 = vmatpush1.bf16.msra.mxu0 0
        %924 = vmatprep.subr.bf16.mxu0 0
        %925 = vmatpush1.bf16.msra.mxu0 0
        %926 = vmatprep.subr.bf16.mxu0 0
        %927 = vmatpush1.bf16.msra.mxu0 0
        %928 = vmatprep.mubr.bf16.mxu0 0
        %929 = vmatmul.mubr.bf16.gmra.mrb[0].mxu0 %v894
        %v930 = vpop.f32.mrb[0].mxu0
        %v931 = vadd.f32 0.0, %v930
        %v932 = vpop.f32.mrb[0].mxu0
        %v933 = vadd.f32 0.0, %v932
        %v934 = vpop.f32.mrb[0].mxu0
        %v935 = vpop.f32.mrb[0].mxu0
        %936 = vdwg.mxu0
        %v937 = vadd.f32 %v825, %v931
        %v938 = vadd.f32 %v826, %v933
        %v939 = vpack.c.bf16 %v825, %v825
        %v940 = vpack.c.bf16 %v826, %v826
        %v945 = vunpack.c.l.b16 %v820
        %v946 = vunpack.c.l.b16 %v821
        %v947 = vunpack.c.l.b16 %v822
        %v948 = vunpack.c.l.b16 %v823
        %v949 = vpack.c.b16 %v946, %v945
        %v950 = vpack.c.b16 %v948, %v947
        %vm951 = vcmask 64512
        %v953 = vsel %vm951, %v949, 0
        %v956 = vsel %vm951, %v950, 0
        %vm958 = vcmask 1043456
        %v960 = vsel %vm958, %v939, 0
        %v963 = vsel %vm958, %v940, 0
        %965 = vmatprep.subr.bf16.mxu0 %v963
        %966 = vmatpush1.bf16.msra.mxu0 %v960
        %967 = vmatprep.subr.bf16.mxu0 0
        %968 = vmatpush1.bf16.msra.mxu0 0
        %969 = vmatprep.subr.bf16.mxu0 0
        %970 = vmatpush1.bf16.msra.mxu0 0
        %971 = vmatprep.subr.bf16.mxu0 0
        %972 = vmatpush1.bf16.msra.mxu0 0
        %973 = vmatprep.subr.bf16.mxu0 0
        %974 = vmatpush1.bf16.msra.mxu0 0
        %975 = vmatprep.subr.bf16.mxu0 0
        %976 = vmatpush1.bf16.msra.mxu0 0
        %977 = vmatprep.subr.bf16.mxu0 0
        %978 = vmatpush1.bf16.msra.mxu0 0
        %979 = vmatprep.subr.bf16.mxu0 0
        %980 = vmatpush1.bf16.msra.mxu0 0
        %981 = vmatprep.subr.bf16.mxu0 0
        %982 = vmatpush1.bf16.msra.mxu0 0
        %983 = vmatprep.subr.bf16.mxu0 0
        %984 = vmatpush1.bf16.msra.mxu0 0
        %985 = vmatprep.subr.bf16.mxu0 0
        %986 = vmatpush1.bf16.msra.mxu0 0
        %987 = vmatprep.subr.bf16.mxu0 0
        %988 = vmatpush1.bf16.msra.mxu0 0
        %989 = vmatprep.subr.bf16.mxu0 0
        %990 = vmatpush1.bf16.msra.mxu0 0
        %991 = vmatprep.subr.bf16.mxu0 0
        %992 = vmatpush1.bf16.msra.mxu0 0
        %993 = vmatprep.subr.bf16.mxu0 0
        %994 = vmatpush1.bf16.msra.mxu0 0
        %995 = vmatprep.subr.bf16.mxu0 0
        %996 = vmatpush1.bf16.msra.mxu0 0
        %997 = vmatprep.mubr.bf16.mxu0 0
        %998 = vmatmul.mubr.bf16.gmra.mrb[0].mxu0 %v953
        %v999 = vpop.f32.mrb[0].mxu0
        %v1000 = vadd.f32 0.0, %v999
        %v1001 = vpop.f32.mrb[0].mxu0
        %v1002 = vadd.f32 0.0, %v1001
        %v1003 = vpop.f32.mrb[0].mxu0
        %v1004 = vadd.f32 0.0, %v1003
        %v1005 = vpop.f32.mrb[0].mxu0
        %v1006 = vadd.f32 0.0, %v1005
        %1007 = vmatprep.mubr.bf16.mxu0 0
        %1008 = vmatmul.mubr.bf16.gmra.mrb[0].mxu0 %v956
        %v1009 = vpop.f32.mrb[0].mxu0
        %v1010 = vadd.f32 0.0, %v1009
        %v1011 = vpop.f32.mrb[0].mxu0
        %v1012 = vadd.f32 0.0, %v1011
        %v1013 = vpop.f32.mrb[0].mxu0
        %v1014 = vadd.f32 0.0, %v1013
        %v1015 = vpop.f32.mrb[0].mxu0
        %v1016 = vadd.f32 0.0, %v1015
        %1017 = vdwg.mxu0
        %v1018 = vadd.f32 %v1000, %v1010
        %v1019 = vadd.f32 %v1004, %v1014
        %v1020 = vadd.f32 %v1000, %v1012
        %v1021 = vadd.f32 %v1004, %v1016
        %v1022 = vadd.f32 %v1002, %v1010
        %v1023 = vadd.f32 %v1006, %v1014
        %v1024 = vadd.f32 %v1002, %v1012
        %v1025 = vadd.f32 %v1006, %v1016
        %v1026 = vpack.c.bf16 %v938, %v937
        %v1028 = vlaneseq
        %v1029 = vshrl.u32 %v1028, 7
        %v1030 = vsub.s32 0, %v1029
        %v1031 = vrot.slane %v851, %v1030
        %v1049 = vunpack.c.l.b16 %v835
        %v1050 = vunpack.c.l.b16 %v836
        %v1051 = vunpack.c.l.b16 %v837
        %v1052 = vunpack.c.l.b16 %v838
        %v1053 = vunpack.c.l.b16 %v839
        %v1054 = vunpack.c.l.b16 %v840
        %v1055 = vunpack.c.l.b16 %v841
        %v1056 = vunpack.c.l.b16 %v842
        %v1057 = vunpack.c.l.b16 %v843
        %v1058 = vunpack.c.l.b16 %v844
        %v1059 = vunpack.c.l.b16 %v845
        %v1060 = vunpack.c.l.b16 %v846
        %v1061 = vunpack.c.l.b16 %v847
        %v1062 = vunpack.c.l.b16 %v848
        %v1063 = vunpack.c.l.b16 %v849
        %v1064 = vunpack.c.l.b16 %v850
        %v1065 = vpack.c.b16 %v1050, %v1049
        %v1066 = vpack.c.b16 %v1052, %v1051
        %v1067 = vpack.c.b16 %v1054, %v1053
        %v1068 = vpack.c.b16 %v1056, %v1055
        %v1069 = vpack.c.b16 %v1058, %v1057
        %v1070 = vpack.c.b16 %v1060, %v1059
        %v1071 = vpack.c.b16 %v1062, %v1061
        %v1072 = vpack.c.b16 %v1064, %v1063
        %1081 = vmatprep.subr.bf16.mxu0 0
        %1082 = vmatpush1.bf16.msra.mxu0 %v1065
        %1083 = vmatprep.subr.bf16.mxu0 0
        %1084 = vmatpush1.bf16.msra.mxu0 %v1066
        %1085 = vmatprep.subr.bf16.mxu0 0
        %1086 = vmatpush1.bf16.msra.mxu0 %v1067
        %1087 = vmatprep.subr.bf16.mxu0 0
        %1088 = vmatpush1.bf16.msra.mxu0 %v1068
        %1089 = vmatprep.subr.bf16.mxu0 0
        %1090 = vmatpush1.bf16.msra.mxu0 %v1069
        %1091 = vmatprep.subr.bf16.mxu0 0
        %1092 = vmatpush1.bf16.msra.mxu0 %v1070
        %1093 = vmatprep.subr.bf16.mxu0 0
        %1094 = vmatpush1.bf16.msra.mxu0 %v1071
        %1095 = vmatprep.subr.bf16.mxu0 0
        %1096 = vmatpush1.bf16.msra.mxu0 %v1072
        %1097 = vmatprep.subr.bf16.mxu0 0
        %1098 = vmatpush1.bf16.msra.mxu0 0
        %1099 = vmatprep.subr.bf16.mxu0 0
        %1100 = vmatpush1.bf16.msra.mxu0 0
        %1101 = vmatprep.subr.bf16.mxu0 0
        %1102 = vmatpush1.bf16.msra.mxu0 0
        %1103 = vmatprep.subr.bf16.mxu0 0
        %1104 = vmatpush1.bf16.msra.mxu0 0
        %1105 = vmatprep.subr.bf16.mxu0 0
        %1106 = vmatpush1.bf16.msra.mxu0 0
        %1107 = vmatprep.subr.bf16.mxu0 0
        %1108 = vmatpush1.bf16.msra.mxu0 0
        %1109 = vmatprep.subr.bf16.mxu0 0
        %1110 = vmatpush1.bf16.msra.mxu0 0
        %1111 = vmatprep.subr.bf16.mxu0 0
        %1112 = vmatpush1.bf16.msra.mxu0 0
        %1113 = vmatprep.mubr.bf16.mxu0 0
        %1114 = vmatmul.mubr.bf16.gmra.mrb[0].mxu0 %v1026
        %v1115 = vpop.f32.mrb[0].mxu0
        %v1116 = vadd.f32 %v1031, %v1115
        %v1117 = vpop.f32.mrb[0].mxu0
        %v1118 = vpop.f32.mrb[0].mxu0
        %v1119 = vadd.f32 %v1031, %v1118
        %v1120 = vpop.f32.mrb[0].mxu0
        %1121 = vdwg.mxu0
        %v1122 = vmax.f32 %v1116, 0.0
        %v1123 = vmax.f32 %v1119, 0.0
        %v1124 = vpack.c.bf16 %v1019, %v1018
        %v1125 = vpack.c.bf16 %v1021, %v1020
        %v1126 = vpack.c.bf16 %v1023, %v1022
        %v1127 = vpack.c.bf16 %v1025, %v1024
        %v1129 = vlaneseq
        %v1130 = vshrl.u32 %v1129, 7
        %v1131 = vsub.s32 0, %v1130
        %v1132 = vrot.slane %v868, %v1131
        %v1150 = vunpack.c.l.b16 %v852
        %v1151 = vunpack.c.l.b16 %v853
        %v1152 = vunpack.c.l.b16 %v854
        %v1153 = vunpack.c.l.b16 %v855
        %v1154 = vunpack.c.l.b16 %v856
        %v1155 = vunpack.c.l.b16 %v857
        %v1156 = vunpack.c.l.b16 %v858
        %v1157 = vunpack.c.l.b16 %v859
        %v1158 = vunpack.c.l.b16 %v860
        %v1159 = vunpack.c.l.b16 %v861
        %v1160 = vunpack.c.l.b16 %v862
        %v1161 = vunpack.c.l.b16 %v863
        %v1162 = vunpack.c.l.b16 %v864
        %v1163 = vunpack.c.l.b16 %v865
        %v1164 = vunpack.c.l.b16 %v866
        %v1165 = vunpack.c.l.b16 %v867
        %v1166 = vpack.c.b16 %v1151, %v1150
        %v1167 = vpack.c.b16 %v1153, %v1152
        %v1168 = vpack.c.b16 %v1155, %v1154
        %v1169 = vpack.c.b16 %v1157, %v1156
        %v1170 = vpack.c.b16 %v1159, %v1158
        %v1171 = vpack.c.b16 %v1161, %v1160
        %v1172 = vpack.c.b16 %v1163, %v1162
        %v1173 = vpack.c.b16 %v1165, %v1164
        %1182 = vmatprep.subr.bf16.mxu0 0
        %1183 = vmatpush1.bf16.msra.mxu0 %v1166
        %1184 = vmatprep.subr.bf16.mxu0 0
        %1185 = vmatpush1.bf16.msra.mxu0 %v1167
        %1186 = vmatprep.subr.bf16.mxu0 0
        %1187 = vmatpush1.bf16.msra.mxu0 %v1168
        %1188 = vmatprep.subr.bf16.mxu0 0
        %1189 = vmatpush1.bf16.msra.mxu0 %v1169
        %1190 = vmatprep.subr.bf16.mxu0 0
        %1191 = vmatpush1.bf16.msra.mxu0 %v1170
        %1192 = vmatprep.subr.bf16.mxu0 0
        %1193 = vmatpush1.bf16.msra.mxu0 %v1171
        %1194 = vmatprep.subr.bf16.mxu0 0
        %1195 = vmatpush1.bf16.msra.mxu0 %v1172
        %1196 = vmatprep.subr.bf16.mxu0 0
        %1197 = vmatpush1.bf16.msra.mxu0 %v1173
        %1198 = vmatprep.subr.bf16.mxu0 0
        %1199 = vmatpush1.bf16.msra.mxu0 0
        %1200 = vmatprep.subr.bf16.mxu0 0
        %1201 = vmatpush1.bf16.msra.mxu0 0
        %1202 = vmatprep.subr.bf16.mxu0 0
        %1203 = vmatpush1.bf16.msra.mxu0 0
        %1204 = vmatprep.subr.bf16.mxu0 0
        %1205 = vmatpush1.bf16.msra.mxu0 0
        %1206 = vmatprep.subr.bf16.mxu0 0
        %1207 = vmatpush1.bf16.msra.mxu0 0
        %1208 = vmatprep.subr.bf16.mxu0 0
        %1209 = vmatpush1.bf16.msra.mxu0 0
        %1210 = vmatprep.subr.bf16.mxu0 0
        %1211 = vmatpush1.bf16.msra.mxu0 0
        %1212 = vmatprep.subr.bf16.mxu0 0
        %1213 = vmatpush1.bf16.msra.mxu0 0
        %1214 = vmatprep.mubr.bf16.mxu0 0
        %1215 = vmatmul.mubr.bf16.gmra.mrb[0].mxu0 %v1124
        %v1216 = vpop.f32.mrb[0].mxu0
        %v1217 = vadd.f32 %v1132, %v1216
        %v1218 = vpop.f32.mrb[0].mxu0
        %v1219 = vpop.f32.mrb[0].mxu0
        %v1220 = vadd.f32 %v1132, %v1219
        %v1221 = vpop.f32.mrb[0].mxu0
        %1222 = vmatprep.mubr.bf16.mxu0 0
        %1223 = vmatmul.mubr.bf16.gmra.mrb[0].mxu0 %v1125
        %v1224 = vpop.f32.mrb[0].mxu0
        %v1225 = vadd.f32 %v1132, %v1224
        %v1226 = vpop.f32.mrb[0].mxu0
        %v1227 = vpop.f32.mrb[0].mxu0
        %v1228 = vadd.f32 %v1132, %v1227
        %v1229 = vpop.f32.mrb[0].mxu0
        %1230 = vmatprep.mubr.bf16.mxu0 0
        %1231 = vmatmul.mubr.bf16.gmra.mrb[0].mxu0 %v1126
        %v1232 = vpop.f32.mrb[0].mxu0
        %v1233 = vadd.f32 %v1132, %v1232
        %v1234 = vpop.f32.mrb[0].mxu0
        %v1235 = vpop.f32.mrb[0].mxu0
        %v1236 = vadd.f32 %v1132, %v1235
        %v1237 = vpop.f32.mrb[0].mxu0
        %1238 = vmatprep.mubr.bf16.mxu0 0
        %1239 = vmatmul.mubr.bf16.gmra.mrb[0].mxu0 %v1127
        %v1240 = vpop.f32.mrb[0].mxu0
        %v1241 = vadd.f32 %v1132, %v1240
        %v1242 = vpop.f32.mrb[0].mxu0
        %v1243 = vpop.f32.mrb[0].mxu0
        %v1244 = vadd.f32 %v1132, %v1243
        %v1245 = vpop.f32.mrb[0].mxu0
        %1246 = vdwg.mxu0
        %v1247 = vadd.f32 %v827, %v1217
        %v1248 = vadd.f32 %v828, %v1220
        %v1249 = vadd.f32 %v829, %v1225
        %v1250 = vadd.f32 %v830, %v1228
        %v1251 = vadd.f32 %v831, %v1233
        %v1252 = vadd.f32 %v832, %v1236
        %v1253 = vadd.f32 %v833, %v1241
        %v1254 = vadd.f32 %v834, %v1244
        %v1255 = vpack.c.bf16 %v1248, %v1247
        %v1256 = vpack.c.bf16 %v1250, %v1249
        %v1257 = vpack.c.bf16 %v1252, %v1251
        %v1258 = vpack.c.bf16 %v1254, %v1253
        %v1260 = vlaneseq
        %v1261 = vshrl.u32 %v1260, 7
        %v1262 = vsub.s32 0, %v1261
        %v1263 = vrot.slane %v885, %v1262
        %v1281 = vunpack.c.l.b16 %v869
        %v1282 = vunpack.c.l.b16 %v870
        %v1283 = vunpack.c.l.b16 %v871
        %v1284 = vunpack.c.l.b16 %v872
        %v1285 = vunpack.c.l.b16 %v873
        %v1286 = vunpack.c.l.b16 %v874
        %v1287 = vunpack.c.l.b16 %v875
        %v1288 = vunpack.c.l.b16 %v876
        %v1289 = vunpack.c.l.b16 %v877
        %v1290 = vunpack.c.l.b16 %v878
        %v1291 = vunpack.c.l.b16 %v879
        %v1292 = vunpack.c.l.b16 %v880
        %v1293 = vunpack.c.l.b16 %v881
        %v1294 = vunpack.c.l.b16 %v882
        %v1295 = vunpack.c.l.b16 %v883
        %v1296 = vunpack.c.l.b16 %v884
        %v1297 = vpack.c.b16 %v1282, %v1281
        %v1298 = vpack.c.b16 %v1284, %v1283
        %v1299 = vpack.c.b16 %v1286, %v1285
        %v1300 = vpack.c.b16 %v1288, %v1287
        %v1301 = vpack.c.b16 %v1290, %v1289
        %v1302 = vpack.c.b16 %v1292, %v1291
        %v1303 = vpack.c.b16 %v1294, %v1293
        %v1304 = vpack.c.b16 %v1296, %v1295
        %1313 = vmatprep.subr.bf16.mxu0 0
        %1314 = vmatpush1.bf16.msra.mxu0 %v1297
        %1315 = vmatprep.subr.bf16.mxu0 0
        %1316 = vmatpush1.bf16.msra.mxu0 %v1298
        %1317 = vmatprep.subr.bf16.mxu0 0
        %1318 = vmatpush1.bf16.msra.mxu0 %v1299
        %1319 = vmatprep.subr.bf16.mxu0 0
        %1320 = vmatpush1.bf16.msra.mxu0 %v1300
        %1321 = vmatprep.subr.bf16.mxu0 0
        %1322 = vmatpush1.bf16.msra.mxu0 %v1301
        %1323 = vmatprep.subr.bf16.mxu0 0
        %1324 = vmatpush1.bf16.msra.mxu0 %v1302
        %1325 = vmatprep.subr.bf16.mxu0 0
        %1326 = vmatpush1.bf16.msra.mxu0 %v1303
        %1327 = vmatprep.subr.bf16.mxu0 0
        %1328 = vmatpush1.bf16.msra.mxu0 %v1304
        %1329 = vmatprep.subr.bf16.mxu0 0
        %1330 = vmatpush1.bf16.msra.mxu0 0
        %1331 = vmatprep.subr.bf16.mxu0 0
        %1332 = vmatpush1.bf16.msra.mxu0 0
        %1333 = vmatprep.subr.bf16.mxu0 0
        %1334 = vmatpush1.bf16.msra.mxu0 0
        %1335 = vmatprep.subr.bf16.mxu0 0
        %1336 = vmatpush1.bf16.msra.mxu0 0
        %1337 = vmatprep.subr.bf16.mxu0 0
        %1338 = vmatpush1.bf16.msra.mxu0 0
        %1339 = vmatprep.subr.bf16.mxu0 0
        %1340 = vmatpush1.bf16.msra.mxu0 0
        %1341 = vmatprep.subr.bf16.mxu0 0
        %1342 = vmatpush1.bf16.msra.mxu0 0
        %1343 = vmatprep.subr.bf16.mxu0 0
        %1344 = vmatpush1.bf16.msra.mxu0 0
        %1345 = vmatprep.mubr.bf16.mxu0 0
        %1346 = vmatmul.mubr.bf16.gmra.mrb[0].mxu0 %v1255
        %v1347 = vpop.f32.mrb[0].mxu0
        %v1348 = vadd.f32 %v1263, %v1347
        %v1349 = vpop.f32.mrb[0].mxu0
        %v1350 = vpop.f32.mrb[0].mxu0
        %v1351 = vadd.f32 %v1263, %v1350
        %v1352 = vpop.f32.mrb[0].mxu0
        %1353 = vmatprep.mubr.bf16.mxu0 0
        %1354 = vmatmul.mubr.bf16.gmra.mrb[0].mxu0 %v1256
        %v1355 = vpop.f32.mrb[0].mxu0
        %v1356 = vadd.f32 %v1263, %v1355
        %v1357 = vpop.f32.mrb[0].mxu0
        %v1358 = vpop.f32.mrb[0].mxu0
        %v1359 = vadd.f32 %v1263, %v1358
        %v1360 = vpop.f32.mrb[0].mxu0
        %1361 = vmatprep.mubr.bf16.mxu0 0
        %1362 = vmatmul.mubr.bf16.gmra.mrb[0].mxu0 %v1257
        %v1363 = vpop.f32.mrb[0].mxu0
        %v1364 = vadd.f32 %v1263, %v1363
        %v1365 = vpop.f32.mrb[0].mxu0
        %v1366 = vpop.f32.mrb[0].mxu0
        %v1367 = vadd.f32 %v1263, %v1366
        %v1368 = vpop.f32.mrb[0].mxu0
        %1369 = vmatprep.mubr.bf16.mxu0 0
        %1370 = vmatmul.mubr.bf16.gmra.mrb[0].mxu0 %v1258
        %v1371 = vpop.f32.mrb[0].mxu0
        %v1372 = vadd.f32 %v1263, %v1371
        %v1373 = vpop.f32.mrb[0].mxu0
        %v1374 = vpop.f32.mrb[0].mxu0
        %v1375 = vadd.f32 %v1263, %v1374
        %v1376 = vpop.f32.mrb[0].mxu0
        %1377 = vdwg.mxu0
        %s1378 = scalar_lea.vmem [#allocation10], 64
        %v1379 = vld [vmem:[%s1378] sm:$0xf]
        %v1380 = vld [vmem:[%s1378 + $0x4] sm:$0xf]
        %v1381 = vld [vmem:[%s1378 + $0x8] sm:$0xf]
        %v1382 = vld [vmem:[%s1378 + $0xc] sm:$0xf]
        %v1383 = vld [vmem:[%s1378 + $0x10] sm:$0xf]
        %v1384 = vld [vmem:[%s1378 + $0x14] sm:$0xf]
        %v1385 = vld [vmem:[%s1378 + $0x18] sm:$0xf]
        %v1386 = vld [vmem:[%s1378 + $0x1c] sm:$0xf]
        %v1387 = vld [vmem:[%s1378 + $0x20] sm:$0xf]
        %v1388 = vld [vmem:[%s1378 + $0x24] sm:$0xf]
        %v1389 = vld [vmem:[%s1378 + $0x28] sm:$0xf]
        %v1390 = vld [vmem:[%s1378 + $0x2c] sm:$0xf]
        %v1391 = vld [vmem:[%s1378 + $0x30] sm:$0xf]
        %v1392 = vld [vmem:[%s1378 + $0x34] sm:$0xf]
        %v1393 = vld [vmem:[%s1378 + $0x38] sm:$0xf]
        %v1394 = vld [vmem:[%s1378 + $0x3c] sm:$0xf]
        %s1395 = scalar_lea.vmem [#allocation11], 1
        %v1396 = vld [vmem:[%s1395] sm:$0x1]
        %s1397 = scalar_lea.vmem [#allocation13], 64
        %v1398 = vld [vmem:[%s1397] sm:$0xf]
        %v1399 = vld [vmem:[%s1397 + $0x4] sm:$0xf]
        %v1400 = vld [vmem:[%s1397 + $0x8] sm:$0xf]
        %v1401 = vld [vmem:[%s1397 + $0xc] sm:$0xf]
        %v1402 = vld [vmem:[%s1397 + $0x10] sm:$0xf]
        %v1403 = vld [vmem:[%s1397 + $0x14] sm:$0xf]
        %v1404 = vld [vmem:[%s1397 + $0x18] sm:$0xf]
        %v1405 = vld [vmem:[%s1397 + $0x1c] sm:$0xf]
        %v1406 = vld [vmem:[%s1397 + $0x20] sm:$0xf]
        %v1407 = vld [vmem:[%s1397 + $0x24] sm:$0xf]
        %v1408 = vld [vmem:[%s1397 + $0x28] sm:$0xf]
        %v1409 = vld [vmem:[%s1397 + $0x2c] sm:$0xf]
        %v1410 = vld [vmem:[%s1397 + $0x30] sm:$0xf]
        %v1411 = vld [vmem:[%s1397 + $0x34] sm:$0xf]
        %v1412 = vld [vmem:[%s1397 + $0x38] sm:$0xf]
        %v1413 = vld [vmem:[%s1397 + $0x3c] sm:$0xf]
        %s1414 = scalar_lea.vmem [#allocation14], 1
        %v1415 = vld [vmem:[%s1414] sm:$0x1]
        %s1416 = scalar_lea.vmem [#allocation16], 64
        %v1417 = vld [vmem:[%s1416] sm:$0xf]
        %v1418 = vld [vmem:[%s1416 + $0x4] sm:$0xf]
        %v1419 = vld [vmem:[%s1416 + $0x8] sm:$0xf]
        %v1420 = vld [vmem:[%s1416 + $0xc] sm:$0xf]
        %v1421 = vld [vmem:[%s1416 + $0x10] sm:$0xf]
        %v1422 = vld [vmem:[%s1416 + $0x14] sm:$0xf]
        %v1423 = vld [vmem:[%s1416 + $0x18] sm:$0xf]
        %v1424 = vld [vmem:[%s1416 + $0x1c] sm:$0xf]
        %v1425 = vld [vmem:[%s1416 + $0x20] sm:$0xf]
        %v1426 = vld [vmem:[%s1416 + $0x24] sm:$0xf]
        %v1427 = vld [vmem:[%s1416 + $0x28] sm:$0xf]
        %v1428 = vld [vmem:[%s1416 + $0x2c] sm:$0xf]
        %v1429 = vld [vmem:[%s1416 + $0x30] sm:$0xf]
        %v1430 = vld [vmem:[%s1416 + $0x34] sm:$0xf]
        %v1431 = vld [vmem:[%s1416 + $0x38] sm:$0xf]
        %v1432 = vld [vmem:[%s1416 + $0x3c] sm:$0xf]
        %s1433 = scalar_lea.vmem [#allocation17], 1
        %v1434 = vld [vmem:[%s1433] sm:$0x1]
        %v1435 = vadd.f32 %v1348, %v1356
        %v1436 = vadd.f32 %v1351, %v1359
        %v1437 = vadd.f32 %v1364, %v1372
        %v1438 = vadd.f32 %v1367, %v1375
        %v1439 = vpack.c.bf16 %v1436, %v1435
        %v1440 = vpack.c.bf16 %v1438, %v1437
        %1441 = vmatprep.subr.bf16.mxu0 %v1440
        %1442 = vmatpush1.bf16.msra.mxu0 %v1439
        %1443 = vmatprep.subr.bf16.mxu0 0
        %1444 = vmatpush1.bf16.msra.mxu0 0
        %1445 = vmatprep.subr.bf16.mxu0 0
        %1446 = vmatpush1.bf16.msra.mxu0 0
        %1447 = vmatprep.subr.bf16.mxu0 0
        %1448 = vmatpush1.bf16.msra.mxu0 0
        %1449 = vmatprep.subr.bf16.mxu0 0
        %1450 = vmatpush1.bf16.msra.mxu0 0
        %1451 = vmatprep.subr.bf16.mxu0 0
        %1452 = vmatpush1.bf16.msra.mxu0 0
        %1453 = vmatprep.subr.bf16.mxu0 0
        %1454 = vmatpush1.bf16.msra.mxu0 0
        %1455 = vmatprep.subr.bf16.mxu0 0
        %1456 = vmatpush1.bf16.msra.mxu0 0
        %1457 = vmatprep.subr.bf16.mxu0 0
        %1458 = vmatpush1.bf16.msra.mxu0 0
        %1459 = vmatprep.subr.bf16.mxu0 0
        %1460 = vmatpush1.bf16.msra.mxu0 0
        %1461 = vmatprep.subr.bf16.mxu0 0
        %1462 = vmatpush1.bf16.msra.mxu0 0
        %1463 = vmatprep.subr.bf16.mxu0 0
        %1464 = vmatpush1.bf16.msra.mxu0 0
        %1465 = vmatprep.subr.bf16.mxu0 0
        %1466 = vmatpush1.bf16.msra.mxu0 0
        %1467 = vmatprep.subr.bf16.mxu0 0
        %1468 = vmatpush1.bf16.msra.mxu0 0
        %1469 = vmatprep.subr.bf16.mxu0 0
        %1470 = vmatpush1.bf16.msra.mxu0 0
        %1471 = vmatprep.subr.bf16.mxu0 0
        %1472 = vmatpush1.bf16.msra.mxu0 0
        %1473 = vmatprep.mubr.bf16.mxu0 0
        %1474 = vmatmul.mubr.bf16.gmra.mrb[0].mxu0 %v894
        %v1475 = vpop.f32.mrb[0].mxu0
        %v1476 = vadd.f32 0.0, %v1475
        %v1477 = vpop.f32.mrb[0].mxu0
        %v1478 = vadd.f32 0.0, %v1477
        %v1479 = vpop.f32.mrb[0].mxu0
        %v1480 = vpop.f32.mrb[0].mxu0
        %1481 = vdwg.mxu0
        %v1482 = vadd.f32 %v1122, %v1476
        %v1483 = vadd.f32 %v1123, %v1478
        %v1484 = vpack.c.bf16 %v1122, %v1122
        %v1485 = vpack.c.bf16 %v1123, %v1123
        %v1487 = vsel %vm958, %v1484, 0
        %v1490 = vsel %vm958, %v1485, 0
        %1492 = vmatprep.subr.bf16.mxu0 %v1490
        %1493 = vmatpush1.bf16.msra.mxu0 %v1487
        %1494 = vmatprep.subr.bf16.mxu0 0
        %1495 = vmatpush1.bf16.msra.mxu0 0
        %1496 = vmatprep.subr.bf16.mxu0 0
        %1497 = vmatpush1.bf16.msra.mxu0 0
        %1498 = vmatprep.subr.bf16.mxu0 0
        %1499 = vmatpush1.bf16.msra.mxu0 0
        %1500 = vmatprep.subr.bf16.mxu0 0
        %1501 = vmatpush1.bf16.msra.mxu0 0
        %1502 = vmatprep.subr.bf16.mxu0 0
        %1503 = vmatpush1.bf16.msra.mxu0 0
        %1504 = vmatprep.subr.bf16.mxu0 0
        %1505 = vmatpush1.bf16.msra.mxu0 0
        %1506 = vmatprep.subr.bf16.mxu0 0
        %1507 = vmatpush1.bf16.msra.mxu0 0
        %1508 = vmatprep.subr.bf16.mxu0 0
        %1509 = vmatpush1.bf16.msra.mxu0 0
        %1510 = vmatprep.subr.bf16.mxu0 0
        %1511 = vmatpush1.bf16.msra.mxu0 0
        %1512 = vmatprep.subr.bf16.mxu0 0
        %1513 = vmatpush1.bf16.msra.mxu0 0
        %1514 = vmatprep.subr.bf16.mxu0 0
        %1515 = vmatpush1.bf16.msra.mxu0 0
        %1516 = vmatprep.subr.bf16.mxu0 0
        %1517 = vmatpush1.bf16.msra.mxu0 0
        %1518 = vmatprep.subr.bf16.mxu0 0
        %1519 = vmatpush1.bf16.msra.mxu0 0
        %1520 = vmatprep.subr.bf16.mxu0 0
        %1521 = vmatpush1.bf16.msra.mxu0 0
        %1522 = vmatprep.subr.bf16.mxu0 0
        %1523 = vmatpush1.bf16.msra.mxu0 0
        %1524 = vmatprep.mubr.bf16.mxu0 0
        %1525 = vmatmul.mubr.bf16.gmra.mrb[0].mxu0 %v953
        %v1526 = vpop.f32.mrb[0].mxu0
        %v1527 = vadd.f32 0.0, %v1526
        %v1528 = vpop.f32.mrb[0].mxu0
        %v1529 = vadd.f32 0.0, %v1528
        %v1530 = vpop.f32.mrb[0].mxu0
        %v1531 = vadd.f32 0.0, %v1530
        %v1532 = vpop.f32.mrb[0].mxu0
        %v1533 = vadd.f32 0.0, %v1532
        %1534 = vmatprep.mubr.bf16.mxu0 0
        %1535 = vmatmul.mubr.bf16.gmra.mrb[0].mxu0 %v956
        %v1536 = vpop.f32.mrb[0].mxu0
        %v1537 = vadd.f32 0.0, %v1536
        %v1538 = vpop.f32.mrb[0].mxu0
        %v1539 = vadd.f32 0.0, %v1538
        %v1540 = vpop.f32.mrb[0].mxu0
        %v1541 = vadd.f32 0.0, %v1540
        %v1542 = vpop.f32.mrb[0].mxu0
        %v1543 = vadd.f32 0.0, %v1542
        %1544 = vdwg.mxu0
        %v1545 = vadd.f32 %v1527, %v1537
        %v1546 = vadd.f32 %v1531, %v1541
        %v1547 = vadd.f32 %v1527, %v1539
        %v1548 = vadd.f32 %v1531, %v1543
        %v1549 = vadd.f32 %v1529, %v1537
        %v1550 = vadd.f32 %v1533, %v1541
        %v1551 = vadd.f32 %v1529, %v1539
        %v1552 = vadd.f32 %v1533, %v1543
        %v1553 = vpack.c.bf16 %v1483, %v1482
        %v1555 = vlaneseq
        %v1556 = vshrl.u32 %v1555, 7
        %v1557 = vsub.s32 0, %v1556
        %v1558 = vrot.slane %v1396, %v1557
        %v1576 = vunpack.c.l.b16 %v1379
        %v1577 = vunpack.c.l.b16 %v1380
        %v1578 = vunpack.c.l.b16 %v1381
        %v1579 = vunpack.c.l.b16 %v1382
        %v1580 = vunpack.c.l.b16 %v1383
        %v1581 = vunpack.c.l.b16 %v1384
        %v1582 = vunpack.c.l.b16 %v1385
        %v1583 = vunpack.c.l.b16 %v1386
        %v1584 = vunpack.c.l.b16 %v1387
        %v1585 = vunpack.c.l.b16 %v1388
        %v1586 = vunpack.c.l.b16 %v1389
        %v1587 = vunpack.c.l.b16 %v1390
        %v1588 = vunpack.c.l.b16 %v1391
        %v1589 = vunpack.c.l.b16 %v1392
        %v1590 = vunpack.c.l.b16 %v1393
        %v1591 = vunpack.c.l.b16 %v1394
        %v1592 = vpack.c.b16 %v1577, %v1576
        %v1593 = vpack.c.b16 %v1579, %v1578
        %v1594 = vpack.c.b16 %v1581, %v1580
        %v1595 = vpack.c.b16 %v1583, %v1582
        %v1596 = vpack.c.b16 %v1585, %v1584
        %v1597 = vpack.c.b16 %v1587, %v1586
        %v1598 = vpack.c.b16 %v1589, %v1588
        %v1599 = vpack.c.b16 %v1591, %v1590
        %1608 = vmatprep.subr.bf16.mxu0 0
        %1609 = vmatpush1.bf16.msra.mxu0 %v1592
        %1610 = vmatprep.subr.bf16.mxu0 0
        %1611 = vmatpush1.bf16.msra.mxu0 %v1593
        %1612 = vmatprep.subr.bf16.mxu0 0
        %1613 = vmatpush1.bf16.msra.mxu0 %v1594
        %1614 = vmatprep.subr.bf16.mxu0 0
        %1615 = vmatpush1.bf16.msra.mxu0 %v1595
        %1616 = vmatprep.subr.bf16.mxu0 0
        %1617 = vmatpush1.bf16.msra.mxu0 %v1596
        %1618 = vmatprep.subr.bf16.mxu0 0
        %1619 = vmatpush1.bf16.msra.mxu0 %v1597
        %1620 = vmatprep.subr.bf16.mxu0 0
        %1621 = vmatpush1.bf16.msra.mxu0 %v1598
        %1622 = vmatprep.subr.bf16.mxu0 0
        %1623 = vmatpush1.bf16.msra.mxu0 %v1599
        %1624 = vmatprep.subr.bf16.mxu0 0
        %1625 = vmatpush1.bf16.msra.mxu0 0
        %1626 = vmatprep.subr.bf16.mxu0 0
        %1627 = vmatpush1.bf16.msra.mxu0 0
        %1628 = vmatprep.subr.bf16.mxu0 0
        %1629 = vmatpush1.bf16.msra.mxu0 0
        %1630 = vmatprep.subr.bf16.mxu0 0
        %1631 = vmatpush1.bf16.msra.mxu0 0
        %1632 = vmatprep.subr.bf16.mxu0 0
        %1633 = vmatpush1.bf16.msra.mxu0 0
        %1634 = vmatprep.subr.bf16.mxu0 0
        %1635 = vmatpush1.bf16.msra.mxu0 0
        %1636 = vmatprep.subr.bf16.mxu0 0
        %1637 = vmatpush1.bf16.msra.mxu0 0
        %1638 = vmatprep.subr.bf16.mxu0 0
        %1639 = vmatpush1.bf16.msra.mxu0 0
        %1640 = vmatprep.mubr.bf16.mxu0 0
        %1641 = vmatmul.mubr.bf16.gmra.mrb[0].mxu0 %v1553
        %v1642 = vpop.f32.mrb[0].mxu0
        %v1643 = vadd.f32 %v1558, %v1642
        %v1644 = vpop.f32.mrb[0].mxu0
        %v1645 = vpop.f32.mrb[0].mxu0
        %v1646 = vadd.f32 %v1558, %v1645
        %v1647 = vpop.f32.mrb[0].mxu0
        %1648 = vdwg.mxu0
        %v1649 = vpack.c.bf16 %v1546, %v1545
        %v1650 = vpack.c.bf16 %v1548, %v1547
        %v1651 = vpack.c.bf16 %v1550, %v1549
        %v1652 = vpack.c.bf16 %v1552, %v1551
        %v1654 = vlaneseq
        %v1655 = vshrl.u32 %v1654, 7
        %v1656 = vsub.s32 0, %v1655
        %v1657 = vrot.slane %v1415, %v1656
        %v1675 = vunpack.c.l.b16 %v1398
        %v1676 = vunpack.c.l.b16 %v1399
        %v1677 = vunpack.c.l.b16 %v1400
        %v1678 = vunpack.c.l.b16 %v1401
        %v1679 = vunpack.c.l.b16 %v1402
        %v1680 = vunpack.c.l.b16 %v1403
        %v1681 = vunpack.c.l.b16 %v1404
        %v1682 = vunpack.c.l.b16 %v1405
        %v1683 = vunpack.c.l.b16 %v1406
        %v1684 = vunpack.c.l.b16 %v1407
        %v1685 = vunpack.c.l.b16 %v1408
        %v1686 = vunpack.c.l.b16 %v1409
        %v1687 = vunpack.c.l.b16 %v1410
        %v1688 = vunpack.c.l.b16 %v1411
        %v1689 = vunpack.c.l.b16 %v1412
        %v1690 = vunpack.c.l.b16 %v1413
        %v1691 = vpack.c.b16 %v1676, %v1675
        %v1692 = vpack.c.b16 %v1678, %v1677
        %v1693 = vpack.c.b16 %v1680, %v1679
        %v1694 = vpack.c.b16 %v1682, %v1681
        %v1695 = vpack.c.b16 %v1684, %v1683
        %v1696 = vpack.c.b16 %v1686, %v1685
        %v1697 = vpack.c.b16 %v1688, %v1687
        %v1698 = vpack.c.b16 %v1690, %v1689
        %1707 = vmatprep.subr.bf16.mxu0 0
        %1708 = vmatpush1.bf16.msra.mxu0 %v1691
        %1709 = vmatprep.subr.bf16.mxu0 0
        %1710 = vmatpush1.bf16.msra.mxu0 %v1692
        %1711 = vmatprep.subr.bf16.mxu0 0
        %1712 = vmatpush1.bf16.msra.mxu0 %v1693
        %1713 = vmatprep.subr.bf16.mxu0 0
        %1714 = vmatpush1.bf16.msra.mxu0 %v1694
        %1715 = vmatprep.subr.bf16.mxu0 0
        %1716 = vmatpush1.bf16.msra.mxu0 %v1695
        %1717 = vmatprep.subr.bf16.mxu0 0
        %1718 = vmatpush1.bf16.msra.mxu0 %v1696
        %1719 = vmatprep.subr.bf16.mxu0 0
        %1720 = vmatpush1.bf16.msra.mxu0 %v1697
        %1721 = vmatprep.subr.bf16.mxu0 0
        %1722 = vmatpush1.bf16.msra.mxu0 %v1698
        %1723 = vmatprep.subr.bf16.mxu0 0
        %1724 = vmatpush1.bf16.msra.mxu0 0
        %1725 = vmatprep.subr.bf16.mxu0 0
        %1726 = vmatpush1.bf16.msra.mxu0 0
        %1727 = vmatprep.subr.bf16.mxu0 0
        %1728 = vmatpush1.bf16.msra.mxu0 0
        %1729 = vmatprep.subr.bf16.mxu0 0
        %1730 = vmatpush1.bf16.msra.mxu0 0
        %1731 = vmatprep.subr.bf16.mxu0 0
        %1732 = vmatpush1.bf16.msra.mxu0 0
        %1733 = vmatprep.subr.bf16.mxu0 0
        %1734 = vmatpush1.bf16.msra.mxu0 0
        %1735 = vmatprep.subr.bf16.mxu0 0
        %1736 = vmatpush1.bf16.msra.mxu0 0
        %1737 = vmatprep.subr.bf16.mxu0 0
        %1738 = vmatpush1.bf16.msra.mxu0 0
        %1739 = vmatprep.mubr.bf16.mxu0 0
        %1740 = vmatmul.mubr.bf16.gmra.mrb[0].mxu0 %v1649
        %v1741 = vpop.f32.mrb[0].mxu0
        %v1742 = vadd.f32 %v1657, %v1741
        %v1743 = vpop.f32.mrb[0].mxu0
        %v1744 = vpop.f32.mrb[0].mxu0
        %v1745 = vadd.f32 %v1657, %v1744
        %v1746 = vpop.f32.mrb[0].mxu0
        %1747 = vmatprep.mubr.bf16.mxu0 0
        %1748 = vmatmul.mubr.bf16.gmra.mrb[0].mxu0 %v1650
        %v1749 = vpop.f32.mrb[0].mxu0
        %v1750 = vadd.f32 %v1657, %v1749
        %v1751 = vpop.f32.mrb[0].mxu0
        %v1752 = vpop.f32.mrb[0].mxu0
        %v1753 = vadd.f32 %v1657, %v1752
        %v1754 = vpop.f32.mrb[0].mxu0
        %1755 = vmatprep.mubr.bf16.mxu0 0
        %1756 = vmatmul.mubr.bf16.gmra.mrb[0].mxu0 %v1651
        %v1757 = vpop.f32.mrb[0].mxu0
        %v1758 = vadd.f32 %v1657, %v1757
        %v1759 = vpop.f32.mrb[0].mxu0
        %v1760 = vpop.f32.mrb[0].mxu0
        %v1761 = vadd.f32 %v1657, %v1760
        %v1762 = vpop.f32.mrb[0].mxu0
        %1763 = vmatprep.mubr.bf16.mxu0 0
        %1764 = vmatmul.mubr.bf16.gmra.mrb[0].mxu0 %v1652
        %v1765 = vpop.f32.mrb[0].mxu0
        %v1766 = vadd.f32 %v1657, %v1765
        %v1767 = vpop.f32.mrb[0].mxu0
        %v1768 = vpop.f32.mrb[0].mxu0
        %v1769 = vadd.f32 %v1657, %v1768
        %v1770 = vpop.f32.mrb[0].mxu0
        %1771 = vdwg.mxu0
        %v1772 = vadd.f32 %v1348, %v1742
        %v1773 = vadd.f32 %v1351, %v1745
        %v1774 = vadd.f32 %v1356, %v1750
        %v1775 = vadd.f32 %v1359, %v1753
        %v1776 = vadd.f32 %v1364, %v1758
        %v1777 = vadd.f32 %v1367, %v1761
        %v1778 = vadd.f32 %v1372, %v1766
        %v1779 = vadd.f32 %v1375, %v1769
        %v1780 = vpack.c.bf16 %v1773, %v1772
        %v1781 = vpack.c.bf16 %v1775, %v1774
        %v1782 = vpack.c.bf16 %v1777, %v1776
        %v1783 = vpack.c.bf16 %v1779, %v1778
        %v1785 = vlaneseq
        %v1786 = vshrl.u32 %v1785, 7
        %v1787 = vsub.s32 0, %v1786
        %v1788 = vrot.slane %v1434, %v1787
        %v1806 = vunpack.c.l.b16 %v1417
        %v1807 = vunpack.c.l.b16 %v1418
        %v1808 = vunpack.c.l.b16 %v1419
        %v1809 = vunpack.c.l.b16 %v1420
        %v1810 = vunpack.c.l.b16 %v1421
        %v1811 = vunpack.c.l.b16 %v1422
        %v1812 = vunpack.c.l.b16 %v1423
        %v1813 = vunpack.c.l.b16 %v1424
        %v1814 = vunpack.c.l.b16 %v1425
        %v1815 = vunpack.c.l.b16 %v1426
        %v1816 = vunpack.c.l.b16 %v1427
        %v1817 = vunpack.c.l.b16 %v1428
        %v1818 = vunpack.c.l.b16 %v1429
        %v1819 = vunpack.c.l.b16 %v1430
        %v1820 = vunpack.c.l.b16 %v1431
        %v1821 = vunpack.c.l.b16 %v1432
        %v1822 = vpack.c.b16 %v1807, %v1806
        %v1823 = vpack.c.b16 %v1809, %v1808
        %v1824 = vpack.c.b16 %v1811, %v1810
        %v1825 = vpack.c.b16 %v1813, %v1812
        %v1826 = vpack.c.b16 %v1815, %v1814
        %v1827 = vpack.c.b16 %v1817, %v1816
        %v1828 = vpack.c.b16 %v1819, %v1818
        %v1829 = vpack.c.b16 %v1821, %v1820
        %1838 = vmatprep.subr.bf16.mxu0 0
        %1839 = vmatpush1.bf16.msra.mxu0 %v1822
        %1840 = vmatprep.subr.bf16.mxu0 0
        %1841 = vmatpush1.bf16.msra.mxu0 %v1823
        %1842 = vmatprep.subr.bf16.mxu0 0
        %1843 = vmatpush1.bf16.msra.mxu0 %v1824
        %1844 = vmatprep.subr.bf16.mxu0 0
        %1845 = vmatpush1.bf16.msra.mxu0 %v1825
        %1846 = vmatprep.subr.bf16.mxu0 0
        %1847 = vmatpush1.bf16.msra.mxu0 %v1826
        %1848 = vmatprep.subr.bf16.mxu0 0
        %1849 = vmatpush1.bf16.msra.mxu0 %v1827
        %1850 = vmatprep.subr.bf16.mxu0 0
        %1851 = vmatpush1.bf16.msra.mxu0 %v1828
        %1852 = vmatprep.subr.bf16.mxu0 0
        %1853 = vmatpush1.bf16.msra.mxu0 %v1829
        %1854 = vmatprep.subr.bf16.mxu0 0
        %1855 = vmatpush1.bf16.msra.mxu0 0
        %1856 = vmatprep.subr.bf16.mxu0 0
        %1857 = vmatpush1.bf16.msra.mxu0 0
        %1858 = vmatprep.subr.bf16.mxu0 0
        %1859 = vmatpush1.bf16.msra.mxu0 0
        %1860 = vmatprep.subr.bf16.mxu0 0
        %1861 = vmatpush1.bf16.msra.mxu0 0
        %1862 = vmatprep.subr.bf16.mxu0 0
        %1863 = vmatpush1.bf16.msra.mxu0 0
        %1864 = vmatprep.subr.bf16.mxu0 0
        %1865 = vmatpush1.bf16.msra.mxu0 0
        %1866 = vmatprep.subr.bf16.mxu0 0
        %1867 = vmatpush1.bf16.msra.mxu0 0
        %1868 = vmatprep.subr.bf16.mxu0 0
        %1869 = vmatpush1.bf16.msra.mxu0 0
        %1870 = vmatprep.mubr.bf16.mxu0 0
        %1871 = vmatmul.mubr.bf16.gmra.mrb[0].mxu0 %v1780
        %v1872 = vpop.f32.mrb[0].mxu0
        %v1873 = vadd.f32 %v1788, %v1872
        %v1874 = vpop.f32.mrb[0].mxu0
        %v1875 = vpop.f32.mrb[0].mxu0
        %v1876 = vadd.f32 %v1788, %v1875
        %v1877 = vpop.f32.mrb[0].mxu0
        %1878 = vmatprep.mubr.bf16.mxu0 0
        %1879 = vmatmul.mubr.bf16.gmra.mrb[0].mxu0 %v1781
        %v1880 = vpop.f32.mrb[0].mxu0
        %v1881 = vadd.f32 %v1788, %v1880
        %v1882 = vpop.f32.mrb[0].mxu0
        %v1883 = vpop.f32.mrb[0].mxu0
        %v1884 = vadd.f32 %v1788, %v1883
        %v1885 = vpop.f32.mrb[0].mxu0
        %1886 = vmatprep.mubr.bf16.mxu0 0
        %1887 = vmatmul.mubr.bf16.gmra.mrb[0].mxu0 %v1782
        %v1888 = vpop.f32.mrb[0].mxu0
        %v1889 = vadd.f32 %v1788, %v1888
        %v1890 = vpop.f32.mrb[0].mxu0
        %v1891 = vpop.f32.mrb[0].mxu0
        %v1892 = vadd.f32 %v1788, %v1891
        %v1893 = vpop.f32.mrb[0].mxu0
        %1894 = vmatprep.mubr.bf16.mxu0 0
        %1895 = vmatmul.mubr.bf16.gmra.mrb[0].mxu0 %v1783
        %v1896 = vpop.f32.mrb[0].mxu0
        %v1897 = vadd.f32 %v1788, %v1896
        %v1898 = vpop.f32.mrb[0].mxu0
        %v1899 = vpop.f32.mrb[0].mxu0
        %v1900 = vadd.f32 %v1788, %v1899
        %v1901 = vpop.f32.mrb[0].mxu0
        %1902 = vdwg.mxu0
        %v1903 = vpack.c.bf16 %v1646, %v1643
        %v1904 = vld [vmem:[#allocation19] sm:$0xff]
        %v1905 = vld [vmem:[#allocation19 + $0x8] sm:$0xff]
        %v1906 = vld [vmem:[#allocation19 + $0x10] sm:$0xff]
        %v1907 = vld [vmem:[#allocation19 + $0x18] sm:$0xff]
        %v1908 = vld [vmem:[#allocation19 + $0x20] sm:$0xff]
        %v1909 = vld [vmem:[#allocation19 + $0x28] sm:$0xff]
        %v1910 = vld [vmem:[#allocation19 + $0x30] sm:$0xff]
        %v1911 = vld [vmem:[#allocation19 + $0x38] sm:$0xff]
        %v1912 = vld [vmem:[#allocation19 + $0x40] sm:$0xff]
        %v1913 = vld [vmem:[#allocation19 + $0x48] sm:$0xff]
        %v1914 = vld [vmem:[#allocation19 + $0x50] sm:$0xff]
        %v1915 = vld [vmem:[#allocation19 + $0x58] sm:$0xff]
        %v1916 = vld [vmem:[#allocation19 + $0x60] sm:$0xff]
        %v1917 = vld [vmem:[#allocation19 + $0x68] sm:$0xff]
        %v1918 = vld [vmem:[#allocation19 + $0x70] sm:$0xff]
        %v1919 = vld [vmem:[#allocation19 + $0x78] sm:$0xff]
        %v1920 = vld [vmem:[#allocation20] sm:$0x3]
        %v1922 = vlaneseq
        %v1923 = vshrl.u32 %v1922, 7
        %v1924 = vsub.s32 0, %v1923
        %v1925 = vrot.slane %v1920, %v1924
        %v1926 = vlaneseq
        %v1927 = vshrl.u32 %v1926, 7
        %v1928 = vsub.s32 1, %v1927
        %v1929 = vrot.slane %v1920, %v1928
        %v1948 = vunpack.c.l.b16 %v1904
        %v1949 = vunpack.c.h.b16 %v1904
        %v1950 = vunpack.c.l.b16 %v1905
        %v1951 = vunpack.c.h.b16 %v1905
        %v1952 = vunpack.c.l.b16 %v1906
        %v1953 = vunpack.c.h.b16 %v1906
        %v1954 = vunpack.c.l.b16 %v1907
        %v1955 = vunpack.c.h.b16 %v1907
        %v1956 = vunpack.c.l.b16 %v1908
        %v1957 = vunpack.c.h.b16 %v1908
        %v1958 = vunpack.c.l.b16 %v1909
        %v1959 = vunpack.c.h.b16 %v1909
        %v1960 = vunpack.c.l.b16 %v1910
        %v1961 = vunpack.c.h.b16 %v1910
        %v1962 = vunpack.c.l.b16 %v1911
        %v1963 = vunpack.c.h.b16 %v1911
        %v1964 = vunpack.c.l.b16 %v1912
        %v1965 = vunpack.c.h.b16 %v1912
        %v1966 = vunpack.c.l.b16 %v1913
        %v1967 = vunpack.c.h.b16 %v1913
        %v1968 = vunpack.c.l.b16 %v1914
        %v1969 = vunpack.c.h.b16 %v1914
        %v1970 = vunpack.c.l.b16 %v1915
        %v1971 = vunpack.c.h.b16 %v1915
        %v1972 = vunpack.c.l.b16 %v1916
        %v1973 = vunpack.c.h.b16 %v1916
        %v1974 = vunpack.c.l.b16 %v1917
        %v1975 = vunpack.c.h.b16 %v1917
        %v1976 = vunpack.c.l.b16 %v1918
        %v1977 = vunpack.c.h.b16 %v1918
        %v1978 = vunpack.c.l.b16 %v1919
        %v1979 = vunpack.c.h.b16 %v1919
        %v1980 = vpack.c.b16 %v1950, %v1948
        %v1981 = vpack.c.b16 %v1951, %v1949
        %v1982 = vpack.c.b16 %v1954, %v1952
        %v1983 = vpack.c.b16 %v1955, %v1953
        %v1984 = vpack.c.b16 %v1958, %v1956
        %v1985 = vpack.c.b16 %v1959, %v1957
        %v1986 = vpack.c.b16 %v1962, %v1960
        %v1987 = vpack.c.b16 %v1963, %v1961
        %v1988 = vpack.c.b16 %v1966, %v1964
        %v1989 = vpack.c.b16 %v1967, %v1965
        %v1990 = vpack.c.b16 %v1970, %v1968
        %v1991 = vpack.c.b16 %v1971, %v1969
        %v1992 = vpack.c.b16 %v1974, %v1972
        %v1993 = vpack.c.b16 %v1975, %v1973
        %v1994 = vpack.c.b16 %v1978, %v1976
        %v1995 = vpack.c.b16 %v1979, %v1977
        %2012 = vmatprep.subr.bf16.mxu0 %v1981
        %2013 = vmatpush1.bf16.msra.mxu0 %v1980
        %2014 = vmatprep.subr.bf16.mxu0 %v1983
        %2015 = vmatpush1.bf16.msra.mxu0 %v1982
        %2016 = vmatprep.subr.bf16.mxu0 %v1985
        %2017 = vmatpush1.bf16.msra.mxu0 %v1984
        %2018 = vmatprep.subr.bf16.mxu0 %v1987
        %2019 = vmatpush1.bf16.msra.mxu0 %v1986
        %2020 = vmatprep.subr.bf16.mxu0 %v1989
        %2021 = vmatpush1.bf16.msra.mxu0 %v1988
        %2022 = vmatprep.subr.bf16.mxu0 %v1991
        %2023 = vmatpush1.bf16.msra.mxu0 %v1990
        %2024 = vmatprep.subr.bf16.mxu0 %v1993
        %2025 = vmatpush1.bf16.msra.mxu0 %v1992
        %2026 = vmatprep.subr.bf16.mxu0 %v1995
        %2027 = vmatpush1.bf16.msra.mxu0 %v1994
        %2028 = vmatprep.subr.bf16.mxu0 0
        %2029 = vmatpush1.bf16.msra.mxu0 0
        %2030 = vmatprep.subr.bf16.mxu0 0
        %2031 = vmatpush1.bf16.msra.mxu0 0
        %2032 = vmatprep.subr.bf16.mxu0 0
        %2033 = vmatpush1.bf16.msra.mxu0 0
        %2034 = vmatprep.subr.bf16.mxu0 0
        %2035 = vmatpush1.bf16.msra.mxu0 0
        %2036 = vmatprep.subr.bf16.mxu0 0
        %2037 = vmatpush1.bf16.msra.mxu0 0
        %2038 = vmatprep.subr.bf16.mxu0 0
        %2039 = vmatpush1.bf16.msra.mxu0 0
        %2040 = vmatprep.subr.bf16.mxu0 0
        %2041 = vmatpush1.bf16.msra.mxu0 0
        %2042 = vmatprep.subr.bf16.mxu0 0
        %2043 = vmatpush1.bf16.msra.mxu0 0
        %2044 = vmatprep.mubr.bf16.mxu0 0
        %2045 = vmatmul.mubr.bf16.gmra.mrb[0].mxu0 %v1903
        %v2046 = vpop.f32.mrb[0].mxu0
        %v2047 = vadd.f32 %v1925, %v2046
        %v2048 = vpop.f32.mrb[0].mxu0
        %v2049 = vadd.f32 %v1929, %v2048
        %v2050 = vpop.f32.mrb[0].mxu0
        %v2051 = vadd.f32 %v1925, %v2050
        %v2052 = vpop.f32.mrb[0].mxu0
        %v2053 = vadd.f32 %v1929, %v2052
        %2054 = vdwg.mxu0
        %v2055 = vmax.f32 %v2047, 0.0
        %v2056 = vmax.f32 %v2049, 0.0
        %v2057 = vmax.f32 %v2051, 0.0
        %v2058 = vmax.f32 %v2053, 0.0
        %v2059 = vpack.c.bf16 %v2057, %v2055
        %v2060 = vpack.c.bf16 %v2058, %v2056
        %v2061 = vld [vmem:[#allocation22] sm:$0xf]
        %v2062 = vld [vmem:[#allocation22 + $0x4] sm:$0xf]
        %v2063 = vld [vmem:[#allocation22 + $0x8] sm:$0xf]
        %v2064 = vld [vmem:[#allocation22 + $0xc] sm:$0xf]
        %v2065 = vld [vmem:[#allocation22 + $0x10] sm:$0xf]
        %v2066 = vld [vmem:[#allocation22 + $0x14] sm:$0xf]
        %v2067 = vld [vmem:[#allocation22 + $0x18] sm:$0xf]
        %v2068 = vld [vmem:[#allocation22 + $0x1c] sm:$0xf]
        %v2069 = vld [vmem:[#allocation22 + $0x20] sm:$0xf]
        %v2070 = vld [vmem:[#allocation22 + $0x24] sm:$0xf]
        %v2071 = vld [vmem:[#allocation22 + $0x28] sm:$0xf]
        %v2072 = vld [vmem:[#allocation22 + $0x2c] sm:$0xf]
        %v2073 = vld [vmem:[#allocation22 + $0x30] sm:$0xf]
        %v2074 = vld [vmem:[#allocation22 + $0x34] sm:$0xf]
        %v2075 = vld [vmem:[#allocation22 + $0x38] sm:$0xf]
        %v2076 = vld [vmem:[#allocation22 + $0x3c] sm:$0xf]
        %v2077 = vld [vmem:[#allocation22 + $0x40] sm:$0xf]
        %v2078 = vld [vmem:[#allocation22 + $0x44] sm:$0xf]
        %v2079 = vld [vmem:[#allocation22 + $0x48] sm:$0xf]
        %v2080 = vld [vmem:[#allocation22 + $0x4c] sm:$0xf]
        %v2081 = vld [vmem:[#allocation22 + $0x50] sm:$0xf]
        %v2082 = vld [vmem:[#allocation22 + $0x54] sm:$0xf]
        %v2083 = vld [vmem:[#allocation22 + $0x58] sm:$0xf]
        %v2084 = vld [vmem:[#allocation22 + $0x5c] sm:$0xf]
        %v2085 = vld [vmem:[#allocation22 + $0x60] sm:$0xf]
        %v2086 = vld [vmem:[#allocation22 + $0x64] sm:$0xf]
        %v2087 = vld [vmem:[#allocation22 + $0x68] sm:$0xf]
        %v2088 = vld [vmem:[#allocation22 + $0x6c] sm:$0xf]
        %v2089 = vld [vmem:[#allocation22 + $0x70] sm:$0xf]
        %v2090 = vld [vmem:[#allocation22 + $0x74] sm:$0xf]
        %v2091 = vld [vmem:[#allocation22 + $0x78] sm:$0xf]
        %v2092 = vld [vmem:[#allocation22 + $0x7c] sm:$0xf]
        %v2093 = vld [vmem:[#allocation23] sm:$0x1]
        %v2095 = vlaneseq
        %v2096 = vshrl.u32 %v2095, 7
        %v2097 = vsub.s32 0, %v2096
        %v2098 = vrot.slane %v2093, %v2097
        %v2132 = vunpack.c.l.b16 %v2061
        %v2133 = vunpack.c.l.b16 %v2062
        %v2134 = vunpack.c.l.b16 %v2063
        %v2135 = vunpack.c.l.b16 %v2064
        %v2136 = vunpack.c.l.b16 %v2065
        %v2137 = vunpack.c.l.b16 %v2066
        %v2138 = vunpack.c.l.b16 %v2067
        %v2139 = vunpack.c.l.b16 %v2068
        %v2140 = vunpack.c.l.b16 %v2069
        %v2141 = vunpack.c.l.b16 %v2070
        %v2142 = vunpack.c.l.b16 %v2071
        %v2143 = vunpack.c.l.b16 %v2072
        %v2144 = vunpack.c.l.b16 %v2073
        %v2145 = vunpack.c.l.b16 %v2074
        %v2146 = vunpack.c.l.b16 %v2075
        %v2147 = vunpack.c.l.b16 %v2076
        %v2148 = vunpack.c.l.b16 %v2077
        %v2149 = vunpack.c.l.b16 %v2078
        %v2150 = vunpack.c.l.b16 %v2079
        %v2151 = vunpack.c.l.b16 %v2080
        %v2152 = vunpack.c.l.b16 %v2081
        %v2153 = vunpack.c.l.b16 %v2082
        %v2154 = vunpack.c.l.b16 %v2083
        %v2155 = vunpack.c.l.b16 %v2084
        %v2156 = vunpack.c.l.b16 %v2085
        %v2157 = vunpack.c.l.b16 %v2086
        %v2158 = vunpack.c.l.b16 %v2087
        %v2159 = vunpack.c.l.b16 %v2088
        %v2160 = vunpack.c.l.b16 %v2089
        %v2161 = vunpack.c.l.b16 %v2090
        %v2162 = vunpack.c.l.b16 %v2091
        %v2163 = vunpack.c.l.b16 %v2092
        %v2164 = vpack.c.b16 %v2133, %v2132
        %v2165 = vpack.c.b16 %v2135, %v2134
        %v2166 = vpack.c.b16 %v2137, %v2136
        %v2167 = vpack.c.b16 %v2139, %v2138
        %v2168 = vpack.c.b16 %v2141, %v2140
        %v2169 = vpack.c.b16 %v2143, %v2142
        %v2170 = vpack.c.b16 %v2145, %v2144
        %v2171 = vpack.c.b16 %v2147, %v2146
        %v2172 = vpack.c.b16 %v2149, %v2148
        %v2173 = vpack.c.b16 %v2151, %v2150
        %v2174 = vpack.c.b16 %v2153, %v2152
        %v2175 = vpack.c.b16 %v2155, %v2154
        %v2176 = vpack.c.b16 %v2157, %v2156
        %v2177 = vpack.c.b16 %v2159, %v2158
        %v2178 = vpack.c.b16 %v2161, %v2160
        %v2179 = vpack.c.b16 %v2163, %v2162
        %2196 = vmatprep.subr.bf16.mxu0 0
        %2197 = vmatpush1.bf16.msra.mxu0 %v2164
        %2198 = vmatprep.subr.bf16.mxu0 0
        %2199 = vmatpush1.bf16.msra.mxu0 %v2165
        %2200 = vmatprep.subr.bf16.mxu0 0
        %2201 = vmatpush1.bf16.msra.mxu0 %v2166
        %2202 = vmatprep.subr.bf16.mxu0 0
        %2203 = vmatpush1.bf16.msra.mxu0 %v2167
        %2204 = vmatprep.subr.bf16.mxu0 0
        %2205 = vmatpush1.bf16.msra.mxu0 %v2168
        %2206 = vmatprep.subr.bf16.mxu0 0
        %2207 = vmatpush1.bf16.msra.mxu0 %v2169
        %2208 = vmatprep.subr.bf16.mxu0 0
        %2209 = vmatpush1.bf16.msra.mxu0 %v2170
        %2210 = vmatprep.subr.bf16.mxu0 0
        %2211 = vmatpush1.bf16.msra.mxu0 %v2171
        %2212 = vmatprep.subr.bf16.mxu0 0
        %2213 = vmatpush1.bf16.msra.mxu0 %v2172
        %2214 = vmatprep.subr.bf16.mxu0 0
        %2215 = vmatpush1.bf16.msra.mxu0 %v2173
        %2216 = vmatprep.subr.bf16.mxu0 0
        %2217 = vmatpush1.bf16.msra.mxu0 %v2174
        %2218 = vmatprep.subr.bf16.mxu0 0
        %2219 = vmatpush1.bf16.msra.mxu0 %v2175
        %2220 = vmatprep.subr.bf16.mxu0 0
        %2221 = vmatpush1.bf16.msra.mxu0 %v2176
        %2222 = vmatprep.subr.bf16.mxu0 0
        %2223 = vmatpush1.bf16.msra.mxu0 %v2177
        %2224 = vmatprep.subr.bf16.mxu0 0
        %2225 = vmatpush1.bf16.msra.mxu0 %v2178
        %2226 = vmatprep.subr.bf16.mxu0 0
        %2227 = vmatpush1.bf16.msra.mxu0 %v2179
        %2228 = vmatprep.mubr.bf16.mxu0 %v2060
        %2229 = vmatmul.mubr.bf16.gmra.mrb[0].mxu0 %v2059
        %v2230 = vpop.f32.mrb[0].mxu0
        %v2231 = vadd.f32 %v2098, %v2230
        %v2232 = vpop.f32.mrb[0].mxu0
        %v2233 = vpop.f32.mrb[0].mxu0
        %v2234 = vadd.f32 %v2098, %v2233
        %v2235 = vpop.f32.mrb[0].mxu0
        %2236 = vdwg.mxu0
        %v2237 = vmax.f32 %v2231, 0.0
        %v2238 = vmax.f32 %v2234, 0.0
        %v2239 = vld [vmem:[#allocation25] sm:$0x1]
        %v2241 = vlaneseq
        %v2242 = vshrl.u32 %v2241, 7
        %v2243 = vsub.s32 0, %v2242
        %v2244 = vrot.slane %v2239, %v2243
        %v2246 = vmul.f32 %v2237, %v2244
        %v2247 = vmul.f32 %v2238, %v2244
        %2248 = vadd.xlane.f32.xlu0 %v2246
        %v2249 = vpop.xlane.xlu0 %2248
        %2250 = vadd.xlane.f32.xlu0 %v2247
        %v2251 = vpop.xlane.xlu0 %2250
        %v2252 = vld [vmem:[#allocation26] sm:$0x1]
        %v2254 = vlaneseq
        %v2255 = vshrl.u32 %v2254, 7
        %v2256 = vsub.s32 0, %v2255
        %v2257 = vrot.slane %v2252, %v2256
        %v2259 = vadd.f32 %v2249, %v2257
        %v2260 = vadd.f32 %v2251, %v2257
        %v2261 = vpack.c.bf16 %v1876, %v1873
        %v2262 = vpack.c.bf16 %v1884, %v1881
        %v2263 = vpack.c.bf16 %v1892, %v1889
        %v2264 = vpack.c.bf16 %v1900, %v1897
        %s2265 = scalar_lea.vmem [#allocation19], 128
        %v2266 = vld [vmem:[%s2265] sm:$0xff]
        %v2267 = vld [vmem:[%s2265 + $0x8] sm:$0xff]
        %v2268 = vld [vmem:[%s2265 + $0x10] sm:$0xff]
        %v2269 = vld [vmem:[%s2265 + $0x18] sm:$0xff]
        %v2270 = vld [vmem:[%s2265 + $0x20] sm:$0xff]
        %v2271 = vld [vmem:[%s2265 + $0x28] sm:$0xff]
        %v2272 = vld [vmem:[%s2265 + $0x30] sm:$0xff]
        %v2273 = vld [vmem:[%s2265 + $0x38] sm:$0xff]
        %v2274 = vld [vmem:[%s2265 + $0x40] sm:$0xff]
        %v2275 = vld [vmem:[%s2265 + $0x48] sm:$0xff]
        %v2276 = vld [vmem:[%s2265 + $0x50] sm:$0xff]
        %v2277 = vld [vmem:[%s2265 + $0x58] sm:$0xff]
        %v2278 = vld [vmem:[%s2265 + $0x60] sm:$0xff]
        %v2279 = vld [vmem:[%s2265 + $0x68] sm:$0xff]
        %v2280 = vld [vmem:[%s2265 + $0x70] sm:$0xff]
        %v2281 = vld [vmem:[%s2265 + $0x78] sm:$0xff]
        %s2282 = scalar_lea.vmem [#allocation20], 2
        %v2283 = vld [vmem:[%s2282] sm:$0x3]
        %v2285 = vlaneseq
        %v2286 = vshrl.u32 %v2285, 7
        %v2287 = vsub.s32 0, %v2286
        %v2288 = vrot.slane %v2283, %v2287
        %v2289 = vlaneseq
        %v2290 = vshrl.u32 %v2289, 7
        %v2291 = vsub.s32 1, %v2290
        %v2292 = vrot.slane %v2283, %v2291
        %v2311 = vunpack.c.l.b16 %v2266
        %v2312 = vunpack.c.h.b16 %v2266
        %v2313 = vunpack.c.l.b16 %v2267
        %v2314 = vunpack.c.h.b16 %v2267
        %v2315 = vunpack.c.l.b16 %v2268
        %v2316 = vunpack.c.h.b16 %v2268
        %v2317 = vunpack.c.l.b16 %v2269
        %v2318 = vunpack.c.h.b16 %v2269
        %v2319 = vunpack.c.l.b16 %v2270
        %v2320 = vunpack.c.h.b16 %v2270
        %v2321 = vunpack.c.l.b16 %v2271
        %v2322 = vunpack.c.h.b16 %v2271
        %v2323 = vunpack.c.l.b16 %v2272
        %v2324 = vunpack.c.h.b16 %v2272
        %v2325 = vunpack.c.l.b16 %v2273
        %v2326 = vunpack.c.h.b16 %v2273
        %v2327 = vunpack.c.l.b16 %v2274
        %v2328 = vunpack.c.h.b16 %v2274
        %v2329 = vunpack.c.l.b16 %v2275
        %v2330 = vunpack.c.h.b16 %v2275
        %v2331 = vunpack.c.l.b16 %v2276
        %v2332 = vunpack.c.h.b16 %v2276
        %v2333 = vunpack.c.l.b16 %v2277
        %v2334 = vunpack.c.h.b16 %v2277
        %v2335 = vunpack.c.l.b16 %v2278
        %v2336 = vunpack.c.h.b16 %v2278
        %v2337 = vunpack.c.l.b16 %v2279
        %v2338 = vunpack.c.h.b16 %v2279
        %v2339 = vunpack.c.l.b16 %v2280
        %v2340 = vunpack.c.h.b16 %v2280
        %v2341 = vunpack.c.l.b16 %v2281
        %v2342 = vunpack.c.h.b16 %v2281
        %v2343 = vpack.c.b16 %v2313, %v2311
        %v2344 = vpack.c.b16 %v2314, %v2312
        %v2345 = vpack.c.b16 %v2317, %v2315
        %v2346 = vpack.c.b16 %v2318, %v2316
        %v2347 = vpack.c.b16 %v2321, %v2319
        %v2348 = vpack.c.b16 %v2322, %v2320
        %v2349 = vpack.c.b16 %v2325, %v2323
        %v2350 = vpack.c.b16 %v2326, %v2324
        %v2351 = vpack.c.b16 %v2329, %v2327
        %v2352 = vpack.c.b16 %v2330, %v2328
        %v2353 = vpack.c.b16 %v2333, %v2331
        %v2354 = vpack.c.b16 %v2334, %v2332
        %v2355 = vpack.c.b16 %v2337, %v2335
        %v2356 = vpack.c.b16 %v2338, %v2336
        %v2357 = vpack.c.b16 %v2341, %v2339
        %v2358 = vpack.c.b16 %v2342, %v2340
        %2375 = vmatprep.subr.bf16.mxu0 %v2344
        %2376 = vmatpush1.bf16.msra.mxu0 %v2343
        %2377 = vmatprep.subr.bf16.mxu0 %v2346
        %2378 = vmatpush1.bf16.msra.mxu0 %v2345
        %2379 = vmatprep.subr.bf16.mxu0 %v2348
        %2380 = vmatpush1.bf16.msra.mxu0 %v2347
        %2381 = vmatprep.subr.bf16.mxu0 %v2350
        %2382 = vmatpush1.bf16.msra.mxu0 %v2349
        %2383 = vmatprep.subr.bf16.mxu0 %v2352
        %2384 = vmatpush1.bf16.msra.mxu0 %v2351
        %2385 = vmatprep.subr.bf16.mxu0 %v2354
        %2386 = vmatpush1.bf16.msra.mxu0 %v2353
        %2387 = vmatprep.subr.bf16.mxu0 %v2356
        %2388 = vmatpush1.bf16.msra.mxu0 %v2355
        %2389 = vmatprep.subr.bf16.mxu0 %v2358
        %2390 = vmatpush1.bf16.msra.mxu0 %v2357
        %2391 = vmatprep.subr.bf16.mxu0 0
        %2392 = vmatpush1.bf16.msra.mxu0 0
        %2393 = vmatprep.subr.bf16.mxu0 0
        %2394 = vmatpush1.bf16.msra.mxu0 0
        %2395 = vmatprep.subr.bf16.mxu0 0
        %2396 = vmatpush1.bf16.msra.mxu0 0
        %2397 = vmatprep.subr.bf16.mxu0 0
        %2398 = vmatpush1.bf16.msra.mxu0 0
        %2399 = vmatprep.subr.bf16.mxu0 0
        %2400 = vmatpush1.bf16.msra.mxu0 0
        %2401 = vmatprep.subr.bf16.mxu0 0
        %2402 = vmatpush1.bf16.msra.mxu0 0
        %2403 = vmatprep.subr.bf16.mxu0 0
        %2404 = vmatpush1.bf16.msra.mxu0 0
        %2405 = vmatprep.subr.bf16.mxu0 0
        %2406 = vmatpush1.bf16.msra.mxu0 0
        %2407 = vmatprep.mubr.bf16.mxu0 0
        %2408 = vmatmul.mubr.bf16.gmra.mrb[0].mxu0 %v2261
        %v2409 = vpop.f32.mrb[0].mxu0
        %v2410 = vadd.f32 %v2288, %v2409
        %v2411 = vpop.f32.mrb[0].mxu0
        %v2412 = vadd.f32 %v2292, %v2411
        %v2413 = vpop.f32.mrb[0].mxu0
        %v2414 = vadd.f32 %v2288, %v2413
        %v2415 = vpop.f32.mrb[0].mxu0
        %v2416 = vadd.f32 %v2292, %v2415
        %2417 = vmatprep.mubr.bf16.mxu0 0
        %2418 = vmatmul.mubr.bf16.gmra.mrb[0].mxu0 %v2262
        %v2419 = vpop.f32.mrb[0].mxu0
        %v2420 = vadd.f32 %v2288, %v2419
        %v2421 = vpop.f32.mrb[0].mxu0
        %v2422 = vadd.f32 %v2292, %v2421
        %v2423 = vpop.f32.mrb[0].mxu0
        %v2424 = vadd.f32 %v2288, %v2423
        %v2425 = vpop.f32.mrb[0].mxu0
        %v2426 = vadd.f32 %v2292, %v2425
        %2427 = vmatprep.mubr.bf16.mxu0 0
        %2428 = vmatmul.mubr.bf16.gmra.mrb[0].mxu0 %v2263
        %v2429 = vpop.f32.mrb[0].mxu0
        %v2430 = vadd.f32 %v2288, %v2429
        %v2431 = vpop.f32.mrb[0].mxu0
        %v2432 = vadd.f32 %v2292, %v2431
        %v2433 = vpop.f32.mrb[0].mxu0
        %v2434 = vadd.f32 %v2288, %v2433
        %v2435 = vpop.f32.mrb[0].mxu0
        %v2436 = vadd.f32 %v2292, %v2435
        %2437 = vmatprep.mubr.bf16.mxu0 0
        %2438 = vmatmul.mubr.bf16.gmra.mrb[0].mxu0 %v2264
        %v2439 = vpop.f32.mrb[0].mxu0
        %v2440 = vadd.f32 %v2288, %v2439
        %v2441 = vpop.f32.mrb[0].mxu0
        %v2442 = vadd.f32 %v2292, %v2441
        %v2443 = vpop.f32.mrb[0].mxu0
        %v2444 = vadd.f32 %v2288, %v2443
        %v2445 = vpop.f32.mrb[0].mxu0
        %v2446 = vadd.f32 %v2292, %v2445
        %2447 = vdwg.mxu0
        %v2448 = vmax.f32 %v2410, 0.0
        %v2449 = vmax.f32 %v2412, 0.0
        %v2450 = vmax.f32 %v2414, 0.0
        %v2451 = vmax.f32 %v2416, 0.0
        %v2452 = vmax.f32 %v2420, 0.0
        %v2453 = vmax.f32 %v2422, 0.0
        %v2454 = vmax.f32 %v2424, 0.0
        %v2455 = vmax.f32 %v2426, 0.0
        %v2456 = vmax.f32 %v2430, 0.0
        %v2457 = vmax.f32 %v2432, 0.0
        %v2458 = vmax.f32 %v2434, 0.0
        %v2459 = vmax.f32 %v2436, 0.0
        %v2460 = vmax.f32 %v2440, 0.0
        %v2461 = vmax.f32 %v2442, 0.0
        %v2462 = vmax.f32 %v2444, 0.0
        %v2463 = vmax.f32 %v2446, 0.0
        %v2464 = vpack.c.bf16 %v2450, %v2448
        %v2465 = vpack.c.bf16 %v2451, %v2449
        %v2466 = vpack.c.bf16 %v2454, %v2452
        %v2467 = vpack.c.bf16 %v2455, %v2453
        %v2468 = vpack.c.bf16 %v2458, %v2456
        %v2469 = vpack.c.bf16 %v2459, %v2457
        %v2470 = vpack.c.bf16 %v2462, %v2460
        %v2471 = vpack.c.bf16 %v2463, %v2461
        %s2472 = scalar_lea.vmem [#allocation22], 128
        %v2473 = vld [vmem:[%s2472] sm:$0xf]
        %v2474 = vld [vmem:[%s2472 + $0x4] sm:$0xf]
        %v2475 = vld [vmem:[%s2472 + $0x8] sm:$0xf]
        %v2476 = vld [vmem:[%s2472 + $0xc] sm:$0xf]
        %v2477 = vld [vmem:[%s2472 + $0x10] sm:$0xf]
        %v2478 = vld [vmem:[%s2472 + $0x14] sm:$0xf]
        %v2479 = vld [vmem:[%s2472 + $0x18] sm:$0xf]
        %v2480 = vld [vmem:[%s2472 + $0x1c] sm:$0xf]
        %v2481 = vld [vmem:[%s2472 + $0x20] sm:$0xf]
        %v2482 = vld [vmem:[%s2472 + $0x24] sm:$0xf]
        %v2483 = vld [vmem:[%s2472 + $0x28] sm:$0xf]
        %v2484 = vld [vmem:[%s2472 + $0x2c] sm:$0xf]
        %v2485 = vld [vmem:[%s2472 + $0x30] sm:$0xf]
        %v2486 = vld [vmem:[%s2472 + $0x34] sm:$0xf]
        %v2487 = vld [vmem:[%s2472 + $0x38] sm:$0xf]
        %v2488 = vld [vmem:[%s2472 + $0x3c] sm:$0xf]
        %v2489 = vld [vmem:[%s2472 + $0x40] sm:$0xf]
        %v2490 = vld [vmem:[%s2472 + $0x44] sm:$0xf]
        %v2491 = vld [vmem:[%s2472 + $0x48] sm:$0xf]
        %v2492 = vld [vmem:[%s2472 + $0x4c] sm:$0xf]
        %v2493 = vld [vmem:[%s2472 + $0x50] sm:$0xf]
        %v2494 = vld [vmem:[%s2472 + $0x54] sm:$0xf]
        %v2495 = vld [vmem:[%s2472 + $0x58] sm:$0xf]
        %v2496 = vld [vmem:[%s2472 + $0x5c] sm:$0xf]
        %v2497 = vld [vmem:[%s2472 + $0x60] sm:$0xf]
        %v2498 = vld [vmem:[%s2472 + $0x64] sm:$0xf]
        %v2499 = vld [vmem:[%s2472 + $0x68] sm:$0xf]
        %v2500 = vld [vmem:[%s2472 + $0x6c] sm:$0xf]
        %v2501 = vld [vmem:[%s2472 + $0x70] sm:$0xf]
        %v2502 = vld [vmem:[%s2472 + $0x74] sm:$0xf]
        %v2503 = vld [vmem:[%s2472 + $0x78] sm:$0xf]
        %v2504 = vld [vmem:[%s2472 + $0x7c] sm:$0xf]
        %s2505 = scalar_lea.vmem [#allocation23], 1
        %v2506 = vld [vmem:[%s2505] sm:$0x1]
        %v2508 = vlaneseq
        %v2509 = vshrl.u32 %v2508, 7
        %v2510 = vsub.s32 0, %v2509
        %v2511 = vrot.slane %v2506, %v2510
        %v2545 = vunpack.c.l.b16 %v2473
        %v2546 = vunpack.c.l.b16 %v2474
        %v2547 = vunpack.c.l.b16 %v2475
        %v2548 = vunpack.c.l.b16 %v2476
        %v2549 = vunpack.c.l.b16 %v2477
        %v2550 = vunpack.c.l.b16 %v2478
        %v2551 = vunpack.c.l.b16 %v2479
        %v2552 = vunpack.c.l.b16 %v2480
        %v2553 = vunpack.c.l.b16 %v2481
        %v2554 = vunpack.c.l.b16 %v2482
        %v2555 = vunpack.c.l.b16 %v2483
        %v2556 = vunpack.c.l.b16 %v2484
        %v2557 = vunpack.c.l.b16 %v2485
        %v2558 = vunpack.c.l.b16 %v2486
        %v2559 = vunpack.c.l.b16 %v2487
        %v2560 = vunpack.c.l.b16 %v2488
        %v2561 = vunpack.c.l.b16 %v2489
        %v2562 = vunpack.c.l.b16 %v2490
        %v2563 = vunpack.c.l.b16 %v2491
        %v2564 = vunpack.c.l.b16 %v2492
        %v2565 = vunpack.c.l.b16 %v2493
        %v2566 = vunpack.c.l.b16 %v2494
        %v2567 = vunpack.c.l.b16 %v2495
        %v2568 = vunpack.c.l.b16 %v2496
        %v2569 = vunpack.c.l.b16 %v2497
        %v2570 = vunpack.c.l.b16 %v2498
        %v2571 = vunpack.c.l.b16 %v2499
        %v2572 = vunpack.c.l.b16 %v2500
        %v2573 = vunpack.c.l.b16 %v2501
        %v2574 = vunpack.c.l.b16 %v2502
        %v2575 = vunpack.c.l.b16 %v2503
        %v2576 = vunpack.c.l.b16 %v2504
        %v2577 = vpack.c.b16 %v2546, %v2545
        %v2578 = vpack.c.b16 %v2548, %v2547
        %v2579 = vpack.c.b16 %v2550, %v2549
        %v2580 = vpack.c.b16 %v2552, %v2551
        %v2581 = vpack.c.b16 %v2554, %v2553
        %v2582 = vpack.c.b16 %v2556, %v2555
        %v2583 = vpack.c.b16 %v2558, %v2557
        %v2584 = vpack.c.b16 %v2560, %v2559
        %v2585 = vpack.c.b16 %v2562, %v2561
        %v2586 = vpack.c.b16 %v2564, %v2563
        %v2587 = vpack.c.b16 %v2566, %v2565
        %v2588 = vpack.c.b16 %v2568, %v2567
        %v2589 = vpack.c.b16 %v2570, %v2569
        %v2590 = vpack.c.b16 %v2572, %v2571
        %v2591 = vpack.c.b16 %v2574, %v2573
        %v2592 = vpack.c.b16 %v2576, %v2575
        %2609 = vmatprep.subr.bf16.mxu0 0
        %2610 = vmatpush1.bf16.msra.mxu0 %v2577
        %2611 = vmatprep.subr.bf16.mxu0 0
        %2612 = vmatpush1.bf16.msra.mxu0 %v2578
        %2613 = vmatprep.subr.bf16.mxu0 0
        %2614 = vmatpush1.bf16.msra.mxu0 %v2579
        %2615 = vmatprep.subr.bf16.mxu0 0
        %2616 = vmatpush1.bf16.msra.mxu0 %v2580
        %2617 = vmatprep.subr.bf16.mxu0 0
        %2618 = vmatpush1.bf16.msra.mxu0 %v2581
        %2619 = vmatprep.subr.bf16.mxu0 0
        %2620 = vmatpush1.bf16.msra.mxu0 %v2582
        %2621 = vmatprep.subr.bf16.mxu0 0
        %2622 = vmatpush1.bf16.msra.mxu0 %v2583
        %2623 = vmatprep.subr.bf16.mxu0 0
        %2624 = vmatpush1.bf16.msra.mxu0 %v2584
        %2625 = vmatprep.subr.bf16.mxu0 0
        %2626 = vmatpush1.bf16.msra.mxu0 %v2585
        %2627 = vmatprep.subr.bf16.mxu0 0
        %2628 = vmatpush1.bf16.msra.mxu0 %v2586
        %2629 = vmatprep.subr.bf16.mxu0 0
        %2630 = vmatpush1.bf16.msra.mxu0 %v2587
        %2631 = vmatprep.subr.bf16.mxu0 0
        %2632 = vmatpush1.bf16.msra.mxu0 %v2588
        %2633 = vmatprep.subr.bf16.mxu0 0
        %2634 = vmatpush1.bf16.msra.mxu0 %v2589
        %2635 = vmatprep.subr.bf16.mxu0 0
        %2636 = vmatpush1.bf16.msra.mxu0 %v2590
        %2637 = vmatprep.subr.bf16.mxu0 0
        %2638 = vmatpush1.bf16.msra.mxu0 %v2591
        %2639 = vmatprep.subr.bf16.mxu0 0
        %2640 = vmatpush1.bf16.msra.mxu0 %v2592
        %2641 = vmatprep.mubr.bf16.mxu0 %v2465
        %2642 = vmatmul.mubr.bf16.gmra.mrb[0].mxu0 %v2464
        %v2643 = vpop.f32.mrb[0].mxu0
        %v2644 = vadd.f32 %v2511, %v2643
        %v2645 = vpop.f32.mrb[0].mxu0
        %v2646 = vpop.f32.mrb[0].mxu0
        %v2647 = vadd.f32 %v2511, %v2646
        %v2648 = vpop.f32.mrb[0].mxu0
        %2649 = vmatprep.mubr.bf16.mxu0 %v2467
        %2650 = vmatmul.mubr.bf16.gmra.mrb[0].mxu0 %v2466
        %v2651 = vpop.f32.mrb[0].mxu0
        %v2652 = vadd.f32 %v2511, %v2651
        %v2653 = vpop.f32.mrb[0].mxu0
        %v2654 = vpop.f32.mrb[0].mxu0
        %v2655 = vadd.f32 %v2511, %v2654
        %v2656 = vpop.f32.mrb[0].mxu0
        %2657 = vmatprep.mubr.bf16.mxu0 %v2469
        %2658 = vmatmul.mubr.bf16.gmra.mrb[0].mxu0 %v2468
        %v2659 = vpop.f32.mrb[0].mxu0
        %v2660 = vadd.f32 %v2511, %v2659
        %v2661 = vpop.f32.mrb[0].mxu0
        %v2662 = vpop.f32.mrb[0].mxu0
        %v2663 = vadd.f32 %v2511, %v2662
        %v2664 = vpop.f32.mrb[0].mxu0
        %2665 = vmatprep.mubr.bf16.mxu0 %v2471
        %2666 = vmatmul.mubr.bf16.gmra.mrb[0].mxu0 %v2470
        %v2667 = vpop.f32.mrb[0].mxu0
        %v2668 = vadd.f32 %v2511, %v2667
        %v2669 = vpop.f32.mrb[0].mxu0
        %v2670 = vpop.f32.mrb[0].mxu0
        %v2671 = vadd.f32 %v2511, %v2670
        %v2672 = vpop.f32.mrb[0].mxu0
        %2673 = vdwg.mxu0
        %v2674 = vmax.f32 %v2644, 0.0
        %v2675 = vmax.f32 %v2647, 0.0
        %v2676 = vmax.f32 %v2652, 0.0
        %v2677 = vmax.f32 %v2655, 0.0
        %v2678 = vmax.f32 %v2660, 0.0
        %v2679 = vmax.f32 %v2663, 0.0
        %v2680 = vmax.f32 %v2668, 0.0
        %v2681 = vmax.f32 %v2671, 0.0
        %s2682 = scalar_lea.vmem [#allocation25], 1
        %v2683 = vld [vmem:[%s2682] sm:$0x1]
        %v2685 = vlaneseq
        %v2686 = vshrl.u32 %v2685, 7
        %v2687 = vsub.s32 0, %v2686
        %v2688 = vrot.slane %v2683, %v2687
        %v2690 = vmul.f32 %v2674, %v2688
        %v2691 = vmul.f32 %v2675, %v2688
        %v2692 = vmul.f32 %v2676, %v2688
        %v2693 = vmul.f32 %v2677, %v2688
        %v2694 = vmul.f32 %v2678, %v2688
        %v2695 = vmul.f32 %v2679, %v2688
        %v2696 = vmul.f32 %v2680, %v2688
        %v2697 = vmul.f32 %v2681, %v2688
        %2698 = vadd.xlane.f32.xlu0 %v2690
        %v2699 = vpop.xlane.xlu0 %2698
        %2700 = vadd.xlane.f32.xlu0 %v2691
        %v2701 = vpop.xlane.xlu0 %2700
        %2702 = vadd.xlane.f32.xlu0 %v2692
        %v2703 = vpop.xlane.xlu0 %2702
        %2704 = vadd.xlane.f32.xlu0 %v2693
        %v2705 = vpop.xlane.xlu0 %2704
        %2706 = vadd.xlane.f32.xlu0 %v2694
        %v2707 = vpop.xlane.xlu0 %2706
        %2708 = vadd.xlane.f32.xlu0 %v2695
        %v2709 = vpop.xlane.xlu0 %2708
        %2710 = vadd.xlane.f32.xlu0 %v2696
        %v2711 = vpop.xlane.xlu0 %2710
        %2712 = vadd.xlane.f32.xlu0 %v2697
        %v2713 = vpop.xlane.xlu0 %2712
        %s2714 = scalar_lea.vmem [#allocation26], 1
        %v2715 = vld [vmem:[%s2714] sm:$0x1]
        %v2717 = vlaneseq
        %v2718 = vshrl.u32 %v2717, 7
        %v2719 = vsub.s32 0, %v2718
        %v2720 = vrot.slane %v2715, %v2719
        %v2722 = vadd.f32 %v2699, %v2720
        %v2723 = vadd.f32 %v2701, %v2720
        %v2724 = vadd.f32 %v2703, %v2720
        %v2725 = vadd.f32 %v2705, %v2720
        %v2726 = vadd.f32 %v2707, %v2720
        %v2727 = vadd.f32 %v2709, %v2720
        %v2728 = vadd.f32 %v2711, %v2720
        %v2729 = vadd.f32 %v2713, %v2720
        %vm2730 = vcmask 7168
        %2731 = vst.msk [vmem:[%s811] sm:$0xff] %vm2730, %v2259
        %s2732 = scalar_lea.vmem %s811, 8 [#allocation28]
        %2733 = vst.msk [vmem:[%s2732] sm:$0xff] %vm2730, %v2260
        %2734 = vst.msk [vmem:[%s818] sm:$0xff] %vm2730, %v2722
        %2735 = vst.msk [vmem:[%s818 + $0x8] sm:$0xff] %vm2730, %v2723
        %s2736 = scalar_lea.vmem %s818, 16 [#allocation29]
        %2737 = vst.msk [vmem:[%s2736] sm:$0xff] %vm2730, %v2724
        %2738 = vst.msk [vmem:[%s2736 + $0x8] sm:$0xff] %vm2730, %v2725
        %s2739 = scalar_lea.vmem %s818, 32 [#allocation29]
        %2740 = vst.msk [vmem:[%s2739] sm:$0xff] %vm2730, %v2726
        %2741 = vst.msk [vmem:[%s2739 + $0x8] sm:$0xff] %vm2730, %v2727
        %s2742 = scalar_lea.vmem %s818, 48 [#allocation29]
        %2743 = vst.msk [vmem:[%s2742] sm:$0xff] %vm2730, %v2728
        %2744 = vst.msk [vmem:[%s2742 + $0x8] sm:$0xff] %vm2730, %v2729
        %s2745 = sand.u32 %s402, 1
        %s2746 = scalar_lea.sflag [#allocation4], %s2745
        %s2747 = sand.u32 %s402, 1
        %s2748 = smul.addr %s2747, 16
        %s2749 = scalar_lea.vmem [#allocation28], %s2748
        %s2750 = sand.u32 %s428, 1
        %s2751 = scalar_lea.sflag [#allocation30], %s2750
        %s2752 = sand.u32 %s428, 1
        %s2753 = smul.addr %s2752, 64
        %s2754 = scalar_lea.vmem [#allocation29], %s2753
        // Predicated region
        $region149: #{tpu_custom_call.1} parent=83 // pred_check
          %p2755 = pneg %p412
        $region150: #{tpu_custom_call.1} parent=83 // pred_check_branch
          %2757 = sbr.rel (%p2755) target = $region152
        $region151: #{tpu_custom_call.1} parent=83 // pred_region
          %s2759 = ssub.s32 256, 256
          %2760 = vsyncadd %s2746, %s2759
          %s2761 = smul.addr %s48, 2
          %s2762 = smul.addr %s2761, 128
          %s2763 = scalar_lea.hbm %s16, %s2762
          %s2764 = sshll.u32 %s2749, 4
          %s2765 = int_to_ptr.vmem [resolvable:$true] %s2764
          %2770 = dma.vmem_to_hbm [thread:$0]  %s2765, 256, %s2763, %s2746, 128, 128, 8
        $region152: #{tpu_custom_call.1} parent=83 // pred_fallthru
          _
        // Predicated region
        $region153: #{tpu_custom_call.1} parent=83 // pred_check
          %p2771 = pneg %p438
        $region154: #{tpu_custom_call.1} parent=83 // pred_check_branch
          %2773 = sbr.rel (%p2771) target = $region156
        $region155: #{tpu_custom_call.1} parent=83 // pred_region
          %s2775 = ssub.s32 1024, 1024
          %2776 = vsyncadd %s2751, %s2775
          %s2777 = smul.addr %s48, 8
          %s2778 = smul.addr %s2777, 128
          %s2779 = scalar_lea.hbm %s17, %s2778
          %s2780 = sshll.u32 %s2754, 4
          %s2781 = int_to_ptr.vmem [resolvable:$true] %s2780
          %2786 = dma.vmem_to_hbm [thread:$0]  %s2781, 1024, %s2779, %s2751, 128, 128, 8
        $region156: #{tpu_custom_call.1} parent=83 // pred_fallthru
          _
      $region84: #{tpu_custom_call.1} parent=5 // pred_fallthru
        _
      %p2787 = scmp.le.s32.totalorder 2, %s43
      // Predicated region
      $region157: #{tpu_custom_call.1} parent=5 // pred_check
        %p2788 = pneg %p2787
      $region158: #{tpu_custom_call.1} parent=5 // pred_check_branch
        %2790 = sbr.rel (%p2788) target = $region160
      $region159: #{tpu_custom_call.1} parent=5 // pred_region
        %s2791 = ssub.s32 %s43, 2
        // Predicated region
        $region161: #{tpu_custom_call.1} parent=159 // pred_check
          %p2792 = pneg %p418
        $region162: #{tpu_custom_call.1} parent=159 // pred_check_branch
          %2794 = sbr.rel (%p2792) target = $region164
        $region163: #{tpu_custom_call.1} parent=159 // pred_region
          %s2795 = sand.u32 %s403, 1
          %s2796 = scalar_lea.sflag [#allocation4], %s2795
          %s2797 = sand.u32 %s403, 1
          %s2798 = smul.addr %s2797, 16
          %s2799 = scalar_lea.vmem [#allocation28], %s2798
          %2800 = dma.done %s2796, 256
        $region164: #{tpu_custom_call.1} parent=159 // pred_fallthru
          _
        // Predicated region
        $region165: #{tpu_custom_call.1} parent=159 // pred_check
          %p2801 = pneg %p444
        $region166: #{tpu_custom_call.1} parent=159 // pred_check_branch
          %2803 = sbr.rel (%p2801) target = $region168
        $region167: #{tpu_custom_call.1} parent=159 // pred_region
          %s2804 = sand.u32 %s429, 1
          %s2805 = scalar_lea.sflag [#allocation30], %s2804
          %s2806 = sand.u32 %s429, 1
          %s2807 = smul.addr %s2806, 64
          %s2808 = scalar_lea.vmem [#allocation29], %s2807
          %2809 = dma.done %s2805, 1024
        $region168: #{tpu_custom_call.1} parent=159 // pred_fallthru
          _
      $region160: #{tpu_custom_call.1} parent=5 // pred_fallthru
        _
    $region6: #{tpu_custom_call.1} parent=1 // loop_footer
      %s47 = sadd.s32 1, %s43
    $region7: #{tpu_custom_call.1} parent=1 // loop_footer_branch
      %42 = sbr.rel target = $region3
    $region8: #{tpu_custom_call.1} parent=1 // loop_exit
      _
    %2810 = vsyncpa [#allocation3], 1
    %s2811 = scalar_lea.sflag [#allocation3], 1
    %2812 = vsyncpa %s2811, 1
    %2813 = vsyncpa [#allocation6], 1
    %s2814 = scalar_lea.sflag [#allocation6], 1
    %2815 = vsyncpa %s2814, 1
    %2816 = vsyncpa [#allocation9], 1
    %2817 = vsyncpa [#allocation12], 1
    %2818 = vsyncpa [#allocation15], 1
    %2819 = vsyncpa [#allocation18], 1
    %2820 = vsyncpa [#allocation21], 1
    %2821 = vsyncpa [#allocation24], 1
    %2822 = vsyncpa [#allocation27], 1
    %2823 = vsyncpa [#allocation4], 1
    %s2824 = scalar_lea.sflag [#allocation4], 1
    %2825 = vsyncpa %s2824, 1
    %2826 = vsyncpa [#allocation30], 1
    %s2827 = scalar_lea.sflag [#allocation30], 1
    %2828 = vsyncpa %s2827, 1

</llo_original>
